<compile_context>
chip_gen: v7x
topology: tpu7x:2x2x1
jax: 0.10.0
libtpu: 0.0.40
codegen_flags: <defaults>
</compile_context>

<pallas_src>
import functools

import jax
import jax.numpy as jnp
from jax.experimental import pallas as pl
from jax.experimental.pallas import tpu as pltpu


_VMEM_LIMIT = 32 * 1024 * 1024   # <= scoped/physical VMEM on v5e/v6e/v7x
_HW_TILE_CAP = 512               # lane tile cap; v6e/v5e could use 2x this


def _pick_hw_tile(hw, cap=_HW_TILE_CAP):
    """Largest multiple-of-128 divisor of hw that is <= cap (else full hw)."""
    if hw % 128 != 0:
        return hw
    best, t = 128, 128
    while t <= min(hw, cap):
        if hw % t == 0:
            best = t
        t += 128
    return best


# ----------------------------------------------------------------------------
# Pallas kernels
# ----------------------------------------------------------------------------
def _conv_gemm_kernel(p_ref, w_ref, b_ref, o_ref):
    # p_ref: (1, K, HW_T) bf16 im2col patches   w_ref: (Cout, K) bf16
    # b_ref: (Cout, 1) f32                      o_ref: (1, Cout, HW_T) f32
    acc = jnp.dot(w_ref[...], p_ref[0], preferred_element_type=jnp.float32)
    o_ref[0] = acc + b_ref[...]


def _res_layer_kernel(p_ref, w3_ref, w1_ref, x_ref, o_ref, *, final_relu):
    # Fused residual layer: conv3x3 -> ReLU -> conv1x1 -> skip add (-> ReLU).
    # p_ref: (1, 9*C, HW_T) bf16   w3_ref: (Rh, 9*C) bf16   w1_ref: (C, Rh) bf16
    # x_ref: (1, C, HW_T) f32 (skip)            o_ref: (1, C, HW_T) f32
    t = jnp.dot(w3_ref[...], p_ref[0], preferred_element_type=jnp.float32)
    t = jnp.maximum(t, 0.0).astype(jnp.bfloat16)
    u = jnp.dot(w1_ref[...], t, preferred_element_type=jnp.float32)
    y = x_ref[0] + u
    if final_relu:
        y = jnp.maximum(y, 0.0)
    o_ref[0] = y


# ----------------------------------------------------------------------------
# Wrappers (XLA glue: im2col, weight repacking, phase interleave)
# ----------------------------------------------------------------------------
def _im2col(x, kh, kw, pad):
    """x: (N,C,H,W) f32 -> bf16 patches (N, kh*kw*C, Ho*Wo), (Ho, Wo)."""
    N, C, H, W = x.shape
    xp = jnp.pad(x.astype(jnp.bfloat16),
                 ((0, 0), (0, 0), (pad, pad), (pad, pad)))
    Ho = H + 2 * pad - kh + 1
    Wo = W + 2 * pad - kw + 1
    taps = []
    for ky in range(kh):
        for kx in range(kw):
            taps.append(xp[:, :, ky:ky + Ho, kx:kx + Wo])
    p = jnp.concatenate(taps, axis=1)                 # (N, T*C, Ho, Wo)
    return p.reshape(N, kh * kw * C, Ho * Wo), (Ho, Wo)


def _flatten_conv_weight(w):
    """OIHW (Cout,Cin,KH,KW) -> (Cout, KH*KW*Cin), tap-major (matches im2col)."""
    Cout, Cin, KH, KW = w.shape
    return jnp.transpose(w, (0, 2, 3, 1)).reshape(Cout, KH * KW * Cin)


def _conv_gemm(patches, w_flat, b):
    """(N,K,HW) bf16 patches x (Cout,K) bf16 weight -> (N,Cout,HW) f32."""
    N, K, HW = patches.shape
    Cout = w_flat.shape[0]
    hw_t = _pick_hw_tile(HW)
    return pl.pallas_call(
        _conv_gemm_kernel,
        out_shape=jax.ShapeDtypeStruct((N, Cout, HW), jnp.float32),
        grid_spec=pltpu.PrefetchScalarGridSpec(
            num_scalar_prefetch=0,
            grid=(N, HW // hw_t),
            in_specs=[
                pl.BlockSpec((1, K, hw_t), lambda n, s: (n, 0, s)),
                pl.BlockSpec((Cout, K), lambda n, s: (0, 0)),
                pl.BlockSpec((Cout, 1), lambda n, s: (0, 0)),
            ],
            out_specs=pl.BlockSpec((1, Cout, hw_t), lambda n, s: (n, 0, s)),
        ),
        compiler_params=pltpu.CompilerParams(
            dimension_semantics=("parallel", "parallel"),
            vmem_limit_bytes=_VMEM_LIMIT),
    )(patches, w_flat, b.reshape(Cout, 1).astype(jnp.float32))


def conv_transpose_s1(x, wt, b, padding):
    """PyTorch ConvTranspose2d, stride=1.  wt: (Cin, Cout, K, K)."""
    Cin, Cout, KH, KW = wt.shape
    w_corr = jnp.transpose(jnp.flip(wt, (2, 3)), (1, 0, 2, 3))   # OIHW
    w_flat = _flatten_conv_weight(w_corr).astype(jnp.bfloat16)
    patches, (Ho, Wo) = _im2col(x, KH, KW, KH - 1 - padding)
    out = _conv_gemm(patches, w_flat, b)
    return out.reshape(x.shape[0], Cout, Ho, Wo)


def _subpixel_weight(wt, b):
    """ConvTranspose2d(k=4, s=2, p=1) -> combined sub-pixel weight.

    Output row block p = dy*2+dx (phase), column block t = ty*3+tx picks the
    3x3-im2col tap; weight is zero where the phase does not use that tap.
    """
    Cin, Cout, _, _ = wt.shape
    kmap = {(0, 0): 3, (0, 1): 1, (1, 1): 2, (1, 2): 0}   # (phase, tap) -> k
    W = jnp.zeros((4, Cout, 3, 3, Cin), jnp.float32)
    for dy in (0, 1):
        for dx in (0, 1):
            p = dy * 2 + dx
            for ty in (0, 1, 2):
                for tx in (0, 1, 2):
                    if (dy, ty) in kmap and (dx, tx) in kmap:
                        ky, kx = kmap[(dy, ty)], kmap[(dx, tx)]
                        W = W.at[p, :, ty, tx, :].set(wt[:, :, ky, kx].T)
    return W.reshape(4 * Cout, 9 * Cin), jnp.tile(b, 4)


def _interleave_phases(o, Cout, H, W):
    """(N, 4*Cout, H*W) phase-major -> (N, Cout, 2H, 2W)."""
    N = o.shape[0]
    o = o.reshape(N, 2, 2, Cout, H, W)          # (n, dy, dx, co, i, j)
    o = jnp.transpose(o, (0, 3, 4, 1, 5, 2))    # (n, co, i, dy, j, dx)
    return o.reshape(N, Cout, 2 * H, 2 * W)


def conv_transpose_s2_k4_p1(x, wt, b, input_relu=True):
    """PyTorch ConvTranspose2d(k=4, s=2, p=1) via sub-pixel decomposition."""
    Cin, Cout, _, _ = wt.shape
    w_flat, b4 = _subpixel_weight(wt, b)
    xi = jax.nn.relu(x) if input_relu else x
    patches, (Ho, Wo) = _im2col(xi, 3, 3, 1)     # taps on the NON-dilated input
    out = _conv_gemm(patches, w_flat.astype(jnp.bfloat16), b4)
    return _interleave_phases(out, Cout, Ho, Wo)


def _res_layer_call(patches, w3f, w1f, x_flat, final_relu):
    N, K9, HW = patches.shape
    C = x_flat.shape[1]
    Rh = w3f.shape[0]
    hw_t = _pick_hw_tile(HW)
    kernel = functools.partial(_res_layer_kernel, final_relu=final_relu)
    return pl.pallas_call(
        kernel,
        out_shape=jax.ShapeDtypeStruct((N, C, HW), jnp.float32),
        grid_spec=pltpu.PrefetchScalarGridSpec(
            num_scalar_prefetch=0,
            grid=(N, HW // hw_t),
            in_specs=[
                pl.BlockSpec((1, K9, hw_t), lambda n, s: (n, 0, s)),
                pl.BlockSpec((Rh, K9), lambda n, s: (0, 0)),
                pl.BlockSpec((C, Rh), lambda n, s: (0, 0)),
                pl.BlockSpec((1, C, hw_t), lambda n, s: (n, 0, s)),
            ],
            out_specs=pl.BlockSpec((1, C, hw_t), lambda n, s: (n, 0, s)),
        ),
        compiler_params=pltpu.CompilerParams(
            dimension_semantics=("parallel", "parallel"),
            vmem_limit_bytes=_VMEM_LIMIT),
    )(patches, w3f, w1f, x_flat)


def residual_stack(h, params, n_res_layers):
    if n_res_layers == 0:
        return jax.nn.relu(h)
    w3, w1 = params["res_w3"], params["res_w1"]
    res_h, h_dim = w3.shape[0], w1.shape[0]
    w3f = _flatten_conv_weight(w3).astype(jnp.bfloat16)          # (Rh, 9*C)
    w1f = w1.reshape(h_dim, res_h).astype(jnp.bfloat16)          # (C, Rh)
    N, C, H, W = h.shape
    HW = H * W
    for i in range(n_res_layers):                 # shared weights across stack
        patches, _ = _im2col(jax.nn.relu(h), 3, 3, 1)
        h = _res_layer_call(patches, w3f, w1f, h.reshape(N, C, HW),
                            final_relu=(i == n_res_layers - 1))
        h = h.reshape(N, C, H, W)
    return h


def _up1(x, params):
    # 1x1 ConvTranspose (K = in_dim): left to XLA — a single dot.
    w = params["w_up1"][:, :, 0, 0]               # (Cin, Cout)
    return (jnp.einsum("nchw,co->nohw", x, w)
            + params["b_up1"][None, :, None, None])


# ----------------------------------------------------------------------------
# Decoder
# ----------------------------------------------------------------------------
def init_decoder_params(key, in_dim, h_dim, n_res_layers, res_h_dim):
    del n_res_layers  # residual layer weights are shared across the stack
    ks = jax.random.split(key, 10)

    def u(k, shape, fan_in):
        bound = 1.0 / float(fan_in) ** 0.5
        return jax.random.uniform(k, shape, jnp.float32, -bound, bound)

    return {
        "w_up1": u(ks[0], (in_dim, h_dim, 1, 1), in_dim),
        "b_up1": u(ks[1], (h_dim,), in_dim),
        "res_w3": u(ks[2], (res_h_dim, h_dim, 3, 3), h_dim * 9),
        "res_w1": u(ks[3], (h_dim, res_h_dim, 1, 1), res_h_dim),
        "w_up2": u(ks[4], (h_dim, h_dim, 3, 3), h_dim * 9),
        "b_up2": u(ks[5], (h_dim,), h_dim * 9),
        "w_up3": u(ks[6], (h_dim, h_dim // 2, 4, 4), h_dim * 16),
        "b_up3": u(ks[7], (h_dim // 2,), h_dim * 16),
        "w_up4": u(ks[8], (h_dim // 2, 3, 4, 4), (h_dim // 2) * 16),
        "b_up4": u(ks[9], (3,), (h_dim // 2) * 16),
    }


def decoder_forward(params, x, n_res_layers):
    h = _up1(x, params)
    x1 = residual_stack(h, params, n_res_layers)
    x2 = conv_transpose_s1(x1, params["w_up2"], params["b_up2"], padding=1)
    x3 = conv_transpose_s2_k4_p1(x2, params["w_up3"], params["b_up3"])
    x4 = conv_transpose_s2_k4_p1(x3, params["w_up4"], params["b_up4"])
    return x1, x2, x3, x4


# ----------------------------------------------------------------------------
# XLA reference mirroring the same bf16-input / f32-accumulate policy
# ----------------------------------------------------------------------------
def _ref_convT_s1(x, wt, b, padding):
    K = wt.shape[2]
    w_corr = jnp.transpose(jnp.flip(wt, (2, 3)), (1, 0, 2, 3))
    y = jax.lax.conv_general_dilated(
        x.astype(jnp.bfloat16), w_corr.astype(jnp.bfloat16),
        window_strides=(1, 1), padding=[(K - 1 - padding,) * 2] * 2,
        dimension_numbers=("NCHW", "OIHW", "NCHW"),
        preferred_element_type=jnp.float32)
    return y + b[None, :, None, None]


def _ref_convT_s2(x, wt, b):
    w_corr = jnp.transpose(jnp.flip(wt, (2, 3)), (1, 0, 2, 3))
    y = jax.lax.conv_general_dilated(
        x.astype(jnp.bfloat16), w_corr.astype(jnp.bfloat16),
        window_strides=(1, 1), padding=[(2, 2)] * 2, lhs_dilation=(2, 2),
        dimension_numbers=("NCHW", "OIHW", "NCHW"),
        preferred_element_type=jnp.float32)
    return y + b[None, :, None, None]


def decoder_forward_ref(params, x, n_res_layers):
    h = _up1(x, params)
    w3b = params["res_w3"].astype(jnp.bfloat16)
    w1b = params["res_w1"].astype(jnp.bfloat16)
    for _ in range(n_res_layers):
        xr = jax.nn.relu(h).astype(jnp.bfloat16)
        t = jax.lax.conv_general_dilated(
            xr, w3b, (1, 1), [(1, 1), (1, 1)],
            dimension_numbers=("NCHW", "OIHW", "NCHW"),
            preferred_element_type=jnp.float32)
        t = jax.nn.relu(t).astype(jnp.bfloat16)
        u = jax.lax.conv_general_dilated(
            t, w1b, (1, 1), [(0, 0), (0, 0)],
            dimension_numbers=("NCHW", "OIHW", "NCHW"),
            preferred_element_type=jnp.float32)
        h = h + u
    x1 = jax.nn.relu(h)
    x2 = _ref_convT_s1(x1, params["w_up2"], params["b_up2"], 1)
    x3 = _ref_convT_s2(jax.nn.relu(x2), params["w_up3"], params["b_up3"])
    x4 = _ref_convT_s2(jax.nn.relu(x3), params["w_up4"], params["b_up4"])
    return x1, x2, x3, x4


# ----------------------------------------------------------------------------
if __name__ == "__main__":
    N, in_dim, h_dim, res_h_dim, n_res_layers = 2, 4, 32, 8, 2
    H = W = 16

    key = jax.random.PRNGKey(0)
    kp, kx = jax.random.split(key)
    params = init_decoder_params(kp, in_dim, h_dim, n_res_layers, res_h_dim)
    x = jax.random.normal(kx, (N, in_dim, H, W), jnp.float32)

    fwd = jax.jit(functools.partial(decoder_forward, n_res_layers=n_res_layers))
    outs = jax.block_until_ready(fwd(params, x))
    x1, x2, x3, x4 = outs

    assert x1.shape == (N, h_dim, H, W)
    assert x2.shape == (N, h_dim, H, W)
    assert x3.shape == (N, h_dim // 2, 2 * H, 2 * W)
    assert x4.shape == (N, 3, 4 * H, 4 * W)

    refs = jax.block_until_ready(
        jax.jit(functools.partial(decoder_forward_ref,
                                  n_res_layers=n_res_layers))(params, x))
    for got, ref in zip(outs, refs):
        err = float(jnp.max(jnp.abs(got - ref)))
        scale = 1.0 + float(jnp.max(jnp.abs(ref)))
        assert err <= 2e-2 * scale, f"mismatch: max abs err {err} (scale {scale})"

    print("KERNEL_OK")
</pallas_src>

<mosaic_0001>
module attributes {stable_mosaic.version = 11 : i64} {
  func.func @_res_layer_kernel(%arg0: i32, %arg1: i32, %arg2: memref<1x288x256xbf16, #tpu.memory_space<vmem>>, %arg3: memref<8x288xbf16, #tpu.memory_space<vmem>>, %arg4: memref<32x8xbf16, #tpu.memory_space<vmem>>, %arg5: memref<1x32x256xf32, #tpu.memory_space<vmem>>, %arg6: memref<1x32x256xf32, #tpu.memory_space<vmem>>) attributes {dimension_semantics = [#tpu.dimension_semantics<parallel>, #tpu.dimension_semantics<parallel>], iteration_bounds = array<i64: 2, 1>, scalar_prefetch = 0 : i64, scratch_operands = 0 : i64, tpu.core_type = #tpu.core_type<tc>, window_params = [{transform_indices = @transform_0, window_bounds = array<i64: 1, 288, 256>}, {pipeline_mode = #tpu.pipeline_mode<synchronous>, transform_indices = @transform_1, window_bounds = array<i64: 8, 288>}, {pipeline_mode = #tpu.pipeline_mode<synchronous>, transform_indices = @transform_2, window_bounds = array<i64: 32, 8>}, {transform_indices = @transform_3, window_bounds = array<i64: 1, 32, 256>}, {transform_indices = @transform_4, window_bounds = array<i64: 1, 32, 256>}]} {
    %c0 = arith.constant 0 : index
    %c0_0 = arith.constant 0 : index
    %0 = vector.load %arg3[%c0, %c0_0] : memref<8x288xbf16, #tpu.memory_space<vmem>>, vector<8x288xbf16>
    %c0_1 = arith.constant 0 : index
    %c0_2 = arith.constant 0 : index
    %c0_3 = arith.constant 0 : index
    %1 = vector.load %arg2[%c0_1, %c0_2, %c0_3] : memref<1x288x256xbf16, #tpu.memory_space<vmem>>, vector<1x288x256xbf16>
    %2 = vector.shape_cast %1 : vector<1x288x256xbf16> to vector<288x256xbf16>
    %cst = arith.constant dense<0.000000e+00> : vector<8x256xf32>
    %3 = tpu.matmul %0, %2, %cst {dimension_numbers = #tpu.dot_dimension_numbers<[1], [0], [0], [1], [0, 0, 1, 1], [], []>} : vector<8x288xbf16>, vector<288x256xbf16>, vector<8x256xf32> -> vector<8x256xf32>
    %cst_4 = arith.constant 0.000000e+00 : f32
    %4 = vector.broadcast %cst_4 : f32 to vector<8x256xf32>
    %5 = arith.maximumf %3, %4 : vector<8x256xf32>
    %6 = arith.truncf %5 : vector<8x256xf32> to vector<8x256xbf16>
    %c0_5 = arith.constant 0 : index
    %c0_6 = arith.constant 0 : index
    %7 = vector.load %arg4[%c0_5, %c0_6] : memref<32x8xbf16, #tpu.memory_space<vmem>>, vector<32x8xbf16>
    %cst_7 = arith.constant dense<0.000000e+00> : vector<32x256xf32>
    %8 = tpu.matmul %7, %6, %cst_7 {dimension_numbers = #tpu.dot_dimension_numbers<[1], [0], [0], [1], [0, 0, 1, 1], [], []>} : vector<32x8xbf16>, vector<8x256xbf16>, vector<32x256xf32> -> vector<32x256xf32>
    %c0_8 = arith.constant 0 : index
    %c0_9 = arith.constant 0 : index
    %c0_10 = arith.constant 0 : index
    %9 = vector.load %arg5[%c0_8, %c0_9, %c0_10] : memref<1x32x256xf32, #tpu.memory_space<vmem>>, vector<1x32x256xf32>
    %10 = vector.shape_cast %9 : vector<1x32x256xf32> to vector<32x256xf32>
    %11 = arith.addf %10, %8 : vector<32x256xf32>
    %c0_11 = arith.constant 0 : index
    %c0_12 = arith.constant 0 : index
    %c0_13 = arith.constant 0 : index
    %12 = vector.load %arg6[%c0_11, %c0_12, %c0_13] : memref<1x32x256xf32, #tpu.memory_space<vmem>>, vector<1x32x256xf32>
    %13 = vector.shape_cast %12 : vector<1x32x256xf32> to vector<32x256xf32>
    %14 = vector.shape_cast %11 : vector<32x256xf32> to vector<1x32x256xf32>
    tpu.vector_store %arg6[%c0_11, %c0_12, %c0_13], %14 {strides = array<i32>} : memref<1x32x256xf32, #tpu.memory_space<vmem>>, vector<1x32x256xf32>,
    return
  }
  func.func @transform_0(%arg0: i32, %arg1: i32) -> (i32, i32, i32) {
    %c0_i32 = arith.constant 0 : i32
    %c0_i32_0 = arith.constant 0 : i32
    return %arg0, %c0_i32, %arg1 : i32, i32, i32
  }
  func.func @transform_1(%arg0: i32, %arg1: i32) -> (i32, i32) {
    %c0_i32 = arith.constant 0 : i32
    %c0_i32_0 = arith.constant 0 : i32
    %c0_i32_1 = arith.constant 0 : i32
    return %c0_i32, %c0_i32_0 : i32, i32
  }
  func.func @transform_2(%arg0: i32, %arg1: i32) -> (i32, i32) {
    %c0_i32 = arith.constant 0 : i32
    %c0_i32_0 = arith.constant 0 : i32
    %c0_i32_1 = arith.constant 0 : i32
    return %c0_i32, %c0_i32_0 : i32, i32
  }
  func.func @transform_3(%arg0: i32, %arg1: i32) -> (i32, i32, i32) {
    %c0_i32 = arith.constant 0 : i32
    %c0_i32_0 = arith.constant 0 : i32
    return %arg0, %c0_i32, %arg1 : i32, i32, i32
  }
  func.func @transform_4(%arg0: i32, %arg1: i32) -> (i32, i32, i32) {
    %c0_i32 = arith.constant 0 : i32
    %c0_i32_0 = arith.constant 0 : i32
    return %arg0, %c0_i32, %arg1 : i32, i32, i32
  }
}

module attributes {stable_mosaic.version = 11 : i64} {
  func.func @_res_layer_kernel(%arg0: i32, %arg1: i32, %arg2: memref<1x288x256xbf16, #tpu.memory_space<vmem>>, %arg3: memref<8x288xbf16, #tpu.memory_space<vmem>>, %arg4: memref<32x8xbf16, #tpu.memory_space<vmem>>, %arg5: memref<1x32x256xf32, #tpu.memory_space<vmem>>, %arg6: memref<1x32x256xf32, #tpu.memory_space<vmem>>) attributes {dimension_semantics = [#tpu.dimension_semantics<parallel>, #tpu.dimension_semantics<parallel>], iteration_bounds = array<i64: 2, 1>, scalar_prefetch = 0 : i64, scratch_operands = 0 : i64, tpu.core_type = #tpu.core_type<tc>, window_params = [{transform_indices = @transform_0, window_bounds = array<i64: 1, 288, 256>}, {pipeline_mode = #tpu.pipeline_mode<synchronous>, transform_indices = @transform_1, window_bounds = array<i64: 8, 288>}, {pipeline_mode = #tpu.pipeline_mode<synchronous>, transform_indices = @transform_2, window_bounds = array<i64: 32, 8>}, {transform_indices = @transform_3, window_bounds = array<i64: 1, 32, 256>}, {transform_indices = @transform_4, window_bounds = array<i64: 1, 32, 256>}]} {
    %c0 = arith.constant 0 : index
    %c0_0 = arith.constant 0 : index
    %0 = vector.load %arg3[%c0, %c0_0] : memref<8x288xbf16, #tpu.memory_space<vmem>>, vector<8x288xbf16>
    %c0_1 = arith.constant 0 : index
    %c0_2 = arith.constant 0 : index
    %c0_3 = arith.constant 0 : index
    %1 = vector.load %arg2[%c0_1, %c0_2, %c0_3] : memref<1x288x256xbf16, #tpu.memory_space<vmem>>, vector<1x288x256xbf16>
    %2 = vector.shape_cast %1 : vector<1x288x256xbf16> to vector<288x256xbf16>
    %cst = arith.constant dense<0.000000e+00> : vector<8x256xf32>
    %3 = tpu.matmul %0, %2, %cst {dimension_numbers = #tpu.dot_dimension_numbers<[1], [0], [0], [1], [0, 0, 1, 1], [], []>} : vector<8x288xbf16>, vector<288x256xbf16>, vector<8x256xf32> -> vector<8x256xf32>
    %cst_4 = arith.constant 0.000000e+00 : f32
    %4 = vector.broadcast %cst_4 : f32 to vector<8x256xf32>
    %5 = arith.maximumf %3, %4 : vector<8x256xf32>
    %6 = arith.truncf %5 : vector<8x256xf32> to vector<8x256xbf16>
    %c0_5 = arith.constant 0 : index
    %c0_6 = arith.constant 0 : index
    %7 = vector.load %arg4[%c0_5, %c0_6] : memref<32x8xbf16, #tpu.memory_space<vmem>>, vector<32x8xbf16>
    %cst_7 = arith.constant dense<0.000000e+00> : vector<32x256xf32>
    %8 = tpu.matmul %7, %6, %cst_7 {dimension_numbers = #tpu.dot_dimension_numbers<[1], [0], [0], [1], [0, 0, 1, 1], [], []>} : vector<32x8xbf16>, vector<8x256xbf16>, vector<32x256xf32> -> vector<32x256xf32>
    %c0_8 = arith.constant 0 : index
    %c0_9 = arith.constant 0 : index
    %c0_10 = arith.constant 0 : index
    %9 = vector.load %arg5[%c0_8, %c0_9, %c0_10] : memref<1x32x256xf32, #tpu.memory_space<vmem>>, vector<1x32x256xf32>
    %10 = vector.shape_cast %9 : vector<1x32x256xf32> to vector<32x256xf32>
    %11 = arith.addf %10, %8 : vector<32x256xf32>
    %cst_11 = arith.constant 0.000000e+00 : f32
    %12 = vector.broadcast %cst_11 : f32 to vector<32x256xf32>
    %13 = arith.maximumf %11, %12 : vector<32x256xf32>
    %c0_12 = arith.constant 0 : index
    %c0_13 = arith.constant 0 : index
    %c0_14 = arith.constant 0 : index
    %14 = vector.load %arg6[%c0_12, %c0_13, %c0_14] : memref<1x32x256xf32, #tpu.memory_space<vmem>>, vector<1x32x256xf32>
    %15 = vector.shape_cast %14 : vector<1x32x256xf32> to vector<32x256xf32>
    %16 = vector.shape_cast %13 : vector<32x256xf32> to vector<1x32x256xf32>
    tpu.vector_store %arg6[%c0_12, %c0_13, %c0_14], %16 {strides = array<i32>} : memref<1x32x256xf32, #tpu.memory_space<vmem>>, vector<1x32x256xf32>,
    return
  }
  func.func @transform_0(%arg0: i32, %arg1: i32) -> (i32, i32, i32) {
    %c0_i32 = arith.constant 0 : i32
    %c0_i32_0 = arith.constant 0 : i32
    return %arg0, %c0_i32, %arg1 : i32, i32, i32
  }
  func.func @transform_1(%arg0: i32, %arg1: i32) -> (i32, i32) {
    %c0_i32 = arith.constant 0 : i32
    %c0_i32_0 = arith.constant 0 : i32
    %c0_i32_1 = arith.constant 0 : i32
    return %c0_i32, %c0_i32_0 : i32, i32
  }
  func.func @transform_2(%arg0: i32, %arg1: i32) -> (i32, i32) {
    %c0_i32 = arith.constant 0 : i32
    %c0_i32_0 = arith.constant 0 : i32
    %c0_i32_1 = arith.constant 0 : i32
    return %c0_i32, %c0_i32_0 : i32, i32
  }
  func.func @transform_3(%arg0: i32, %arg1: i32) -> (i32, i32, i32) {
    %c0_i32 = arith.constant 0 : i32
    %c0_i32_0 = arith.constant 0 : i32
    return %arg0, %c0_i32, %arg1 : i32, i32, i32
  }
  func.func @transform_4(%arg0: i32, %arg1: i32) -> (i32, i32, i32) {
    %c0_i32 = arith.constant 0 : i32
    %c0_i32_0 = arith.constant 0 : i32
    return %arg0, %c0_i32, %arg1 : i32, i32, i32
  }
}

module attributes {stable_mosaic.version = 11 : i64} {
  func.func @_conv_gemm_kernel(%arg0: i32, %arg1: i32, %arg2: memref<1x288x256xbf16, #tpu.memory_space<vmem>>, %arg3: memref<32x288xbf16, #tpu.memory_space<vmem>>, %arg4: memref<32x1xf32, #tpu.memory_space<vmem>>, %arg5: memref<1x32x256xf32, #tpu.memory_space<vmem>>) attributes {dimension_semantics = [#tpu.dimension_semantics<parallel>, #tpu.dimension_semantics<parallel>], iteration_bounds = array<i64: 2, 1>, scalar_prefetch = 0 : i64, scratch_operands = 0 : i64, tpu.core_type = #tpu.core_type<tc>, window_params = [{transform_indices = @transform_0, window_bounds = array<i64: 1, 288, 256>}, {pipeline_mode = #tpu.pipeline_mode<synchronous>, transform_indices = @transform_1, window_bounds = array<i64: 32, 288>}, {pipeline_mode = #tpu.pipeline_mode<synchronous>, transform_indices = @transform_2, window_bounds = array<i64: 32, 1>}, {transform_indices = @transform_3, window_bounds = array<i64: 1, 32, 256>}]} {
    %c0 = arith.constant 0 : index
    %c0_0 = arith.constant 0 : index
    %0 = vector.load %arg3[%c0, %c0_0] : memref<32x288xbf16, #tpu.memory_space<vmem>>, vector<32x288xbf16>
    %c0_1 = arith.constant 0 : index
    %c0_2 = arith.constant 0 : index
    %c0_3 = arith.constant 0 : index
    %1 = vector.load %arg2[%c0_1, %c0_2, %c0_3] : memref<1x288x256xbf16, #tpu.memory_space<vmem>>, vector<1x288x256xbf16>
    %2 = vector.shape_cast %1 : vector<1x288x256xbf16> to vector<288x256xbf16>
    %cst = arith.constant dense<0.000000e+00> : vector<32x256xf32>
    %3 = tpu.matmul %0, %2, %cst {dimension_numbers = #tpu.dot_dimension_numbers<[1], [0], [0], [1], [0, 0, 1, 1], [], []>} : vector<32x288xbf16>, vector<288x256xbf16>, vector<32x256xf32> -> vector<32x256xf32>
    %c0_4 = arith.constant 0 : index
    %c0_5 = arith.constant 0 : index
    %4 = vector.load %arg4[%c0_4, %c0_5] : memref<32x1xf32, #tpu.memory_space<vmem>>, vector<32x1xf32>
    %5 = vector.broadcast %4 : vector<32x1xf32> to vector<32x256xf32>
    %6 = arith.addf %3, %5 : vector<32x256xf32>
    %c0_6 = arith.constant 0 : index
    %c0_7 = arith.constant 0 : index
    %c0_8 = arith.constant 0 : index
    %7 = vector.load %arg5[%c0_6, %c0_7, %c0_8] : memref<1x32x256xf32, #tpu.memory_space<vmem>>, vector<1x32x256xf32>
    %8 = vector.shape_cast %7 : vector<1x32x256xf32> to vector<32x256xf32>
    %9 = vector.shape_cast %6 : vector<32x256xf32> to vector<1x32x256xf32>
    tpu.vector_store %arg5[%c0_6, %c0_7, %c0_8], %9 {strides = array<i32>} : memref<1x32x256xf32, #tpu.memory_space<vmem>>, vector<1x32x256xf32>,
    return
  }
  func.func @transform_0(%arg0: i32, %arg1: i32) -> (i32, i32, i32) {
    %c0_i32 = arith.constant 0 : i32
    %c0_i32_0 = arith.constant 0 : i32
    return %arg0, %c0_i32, %arg1 : i32, i32, i32
  }
  func.func @transform_1(%arg0: i32, %arg1: i32) -> (i32, i32) {
    %c0_i32 = arith.constant 0 : i32
    %c0_i32_0 = arith.constant 0 : i32
    %c0_i32_1 = arith.constant 0 : i32
    return %c0_i32, %c0_i32_0 : i32, i32
  }
  func.func @transform_2(%arg0: i32, %arg1: i32) -> (i32, i32) {
    %c0_i32 = arith.constant 0 : i32
    %c0_i32_0 = arith.constant 0 : i32
    %c0_i32_1 = arith.constant 0 : i32
    return %c0_i32, %c0_i32_0 : i32, i32
  }
  func.func @transform_3(%arg0: i32, %arg1: i32) -> (i32, i32, i32) {
    %c0_i32 = arith.constant 0 : i32
    %c0_i32_0 = arith.constant 0 : i32
    return %arg0, %c0_i32, %arg1 : i32, i32, i32
  }
}

module attributes {stable_mosaic.version = 11 : i64} {
  func.func @_conv_gemm_kernel(%arg0: i32, %arg1: i32, %arg2: memref<1x288x256xbf16, #tpu.memory_space<vmem>>, %arg3: memref<64x288xbf16, #tpu.memory_space<vmem>>, %arg4: memref<64x1xf32, #tpu.memory_space<vmem>>, %arg5: memref<1x64x256xf32, #tpu.memory_space<vmem>>) attributes {dimension_semantics = [#tpu.dimension_semantics<parallel>, #tpu.dimension_semantics<parallel>], iteration_bounds = array<i64: 2, 1>, scalar_prefetch = 0 : i64, scratch_operands = 0 : i64, tpu.core_type = #tpu.core_type<tc>, window_params = [{transform_indices = @transform_0, window_bounds = array<i64: 1, 288, 256>}, {pipeline_mode = #tpu.pipeline_mode<synchronous>, transform_indices = @transform_1, window_bounds = array<i64: 64, 288>}, {pipeline_mode = #tpu.pipeline_mode<synchronous>, transform_indices = @transform_2, window_bounds = array<i64: 64, 1>}, {transform_indices = @transform_3, window_bounds = array<i64: 1, 64, 256>}]} {
    %c0 = arith.constant 0 : index
    %c0_0 = arith.constant 0 : index
    %0 = vector.load %arg3[%c0, %c0_0] : memref<64x288xbf16, #tpu.memory_space<vmem>>, vector<64x288xbf16>
    %c0_1 = arith.constant 0 : index
    %c0_2 = arith.constant 0 : index
    %c0_3 = arith.constant 0 : index
    %1 = vector.load %arg2[%c0_1, %c0_2, %c0_3] : memref<1x288x256xbf16, #tpu.memory_space<vmem>>, vector<1x288x256xbf16>
    %2 = vector.shape_cast %1 : vector<1x288x256xbf16> to vector<288x256xbf16>
    %cst = arith.constant dense<0.000000e+00> : vector<64x256xf32>
    %3 = tpu.matmul %0, %2, %cst {dimension_numbers = #tpu.dot_dimension_numbers<[1], [0], [0], [1], [0, 0, 1, 1], [], []>} : vector<64x288xbf16>, vector<288x256xbf16>, vector<64x256xf32> -> vector<64x256xf32>
    %c0_4 = arith.constant 0 : index
    %c0_5 = arith.constant 0 : index
    %4 = vector.load %arg4[%c0_4, %c0_5] : memref<64x1xf32, #tpu.memory_space<vmem>>, vector<64x1xf32>
    %5 = vector.broadcast %4 : vector<64x1xf32> to vector<64x256xf32>
    %6 = arith.addf %3, %5 : vector<64x256xf32>
    %c0_6 = arith.constant 0 : index
    %c0_7 = arith.constant 0 : index
    %c0_8 = arith.constant 0 : index
    %7 = vector.load %arg5[%c0_6, %c0_7, %c0_8] : memref<1x64x256xf32, #tpu.memory_space<vmem>>, vector<1x64x256xf32>
    %8 = vector.shape_cast %7 : vector<1x64x256xf32> to vector<64x256xf32>
    %9 = vector.shape_cast %6 : vector<64x256xf32> to vector<1x64x256xf32>
    tpu.vector_store %arg5[%c0_6, %c0_7, %c0_8], %9 {strides = array<i32>} : memref<1x64x256xf32, #tpu.memory_space<vmem>>, vector<1x64x256xf32>,
    return
  }
  func.func @transform_0(%arg0: i32, %arg1: i32) -> (i32, i32, i32) {
    %c0_i32 = arith.constant 0 : i32
    %c0_i32_0 = arith.constant 0 : i32
    return %arg0, %c0_i32, %arg1 : i32, i32, i32
  }
  func.func @transform_1(%arg0: i32, %arg1: i32) -> (i32, i32) {
    %c0_i32 = arith.constant 0 : i32
    %c0_i32_0 = arith.constant 0 : i32
    %c0_i32_1 = arith.constant 0 : i32
    return %c0_i32, %c0_i32_0 : i32, i32
  }
  func.func @transform_2(%arg0: i32, %arg1: i32) -> (i32, i32) {
    %c0_i32 = arith.constant 0 : i32
    %c0_i32_0 = arith.constant 0 : i32
    %c0_i32_1 = arith.constant 0 : i32
    return %c0_i32, %c0_i32_0 : i32, i32
  }
  func.func @transform_3(%arg0: i32, %arg1: i32) -> (i32, i32, i32) {
    %c0_i32 = arith.constant 0 : i32
    %c0_i32_0 = arith.constant 0 : i32
    return %arg0, %c0_i32, %arg1 : i32, i32, i32
  }
}

module attributes {stable_mosaic.version = 11 : i64} {
  func.func @_conv_gemm_kernel(%arg0: i32, %arg1: i32, %arg2: memref<1x144x512xbf16, #tpu.memory_space<vmem>>, %arg3: memref<12x144xbf16, #tpu.memory_space<vmem>>, %arg4: memref<12x1xf32, #tpu.memory_space<vmem>>, %arg5: memref<1x12x512xf32, #tpu.memory_space<vmem>>) attributes {dimension_semantics = [#tpu.dimension_semantics<parallel>, #tpu.dimension_semantics<parallel>], iteration_bounds = array<i64: 2, 2>, scalar_prefetch = 0 : i64, scratch_operands = 0 : i64, tpu.core_type = #tpu.core_type<tc>, window_params = [{transform_indices = @transform_0, window_bounds = array<i64: 1, 144, 512>}, {pipeline_mode = #tpu.pipeline_mode<synchronous>, transform_indices = @transform_1, window_bounds = array<i64: 12, 144>}, {pipeline_mode = #tpu.pipeline_mode<synchronous>, transform_indices = @transform_2, window_bounds = array<i64: 12, 1>}, {transform_indices = @transform_3, window_bounds = array<i64: 1, 12, 512>}]} {
    %c0 = arith.constant 0 : index
    %c0_0 = arith.constant 0 : index
    %0 = vector.load %arg3[%c0, %c0_0] : memref<12x144xbf16, #tpu.memory_space<vmem>>, vector<12x144xbf16>
    %c0_1 = arith.constant 0 : index
    %c0_2 = arith.constant 0 : index
    %c0_3 = arith.constant 0 : index
    %1 = vector.load %arg2[%c0_1, %c0_2, %c0_3] : memref<1x144x512xbf16, #tpu.memory_space<vmem>>, vector<1x144x512xbf16>
    %2 = vector.shape_cast %1 : vector<1x144x512xbf16> to vector<144x512xbf16>
    %cst = arith.constant dense<0.000000e+00> : vector<12x512xf32>
    %3 = tpu.matmul %0, %2, %cst {dimension_numbers = #tpu.dot_dimension_numbers<[1], [0], [0], [1], [0, 0, 1, 1], [], []>} : vector<12x144xbf16>, vector<144x512xbf16>, vector<12x512xf32> -> vector<12x512xf32>
    %c0_4 = arith.constant 0 : index
    %c0_5 = arith.constant 0 : index
    %4 = vector.load %arg4[%c0_4, %c0_5] : memref<12x1xf32, #tpu.memory_space<vmem>>, vector<12x1xf32>
    %5 = vector.broadcast %4 : vector<12x1xf32> to vector<12x512xf32>
    %6 = arith.addf %3, %5 : vector<12x512xf32>
    %c0_6 = arith.constant 0 : index
    %c0_7 = arith.constant 0 : index
    %c0_8 = arith.constant 0 : index
    %7 = vector.load %arg5[%c0_6, %c0_7, %c0_8] : memref<1x12x512xf32, #tpu.memory_space<vmem>>, vector<1x12x512xf32>
    %8 = vector.shape_cast %7 : vector<1x12x512xf32> to vector<12x512xf32>
    %9 = vector.shape_cast %6 : vector<12x512xf32> to vector<1x12x512xf32>
    tpu.vector_store %arg5[%c0_6, %c0_7, %c0_8], %9 {strides = array<i32>} : memref<1x12x512xf32, #tpu.memory_space<vmem>>, vector<1x12x512xf32>,
    return
  }
  func.func @transform_0(%arg0: i32, %arg1: i32) -> (i32, i32, i32) {
    %c0_i32 = arith.constant 0 : i32
    %c0_i32_0 = arith.constant 0 : i32
    return %arg0, %c0_i32, %arg1 : i32, i32, i32
  }
  func.func @transform_1(%arg0: i32, %arg1: i32) -> (i32, i32) {
    %c0_i32 = arith.constant 0 : i32
    %c0_i32_0 = arith.constant 0 : i32
    %c0_i32_1 = arith.constant 0 : i32
    return %c0_i32, %c0_i32_0 : i32, i32
  }
  func.func @transform_2(%arg0: i32, %arg1: i32) -> (i32, i32) {
    %c0_i32 = arith.constant 0 : i32
    %c0_i32_0 = arith.constant 0 : i32
    %c0_i32_1 = arith.constant 0 : i32
    return %c0_i32, %c0_i32_0 : i32, i32
  }
  func.func @transform_3(%arg0: i32, %arg1: i32) -> (i32, i32, i32) {
    %c0_i32 = arith.constant 0 : i32
    %c0_i32_0 = arith.constant 0 : i32
    return %arg0, %c0_i32, %arg1 : i32, i32, i32
  }
}

</mosaic_0001>

<llo_original>
// kernel: tile.1
$region0: #{tile.1}
  %s0 = inlined_call_operand.vmem [shape: f32[4,3], index: 0, kind: input, shape index: {}]
  %s1 = inlined_call_operand.vmem [shape: f32[12,1], index: 1, kind: output, shape index: {}]
  $region1: #{tile.1} parent=0
    #allocation0 [shape = 'u8[4096]{0}', space=vmem, size = 0x1000, scoped, tag = 'scoped mem for input reshape']
    %s3 = sshllo.u32 0, 4
    %v4 = vld [vmem:[%s0] sm:%s3]
    %5 = vst [vmem:[#allocation0] sm:%s3] %v4
    %v6 = vld [vmem:[#allocation0] sm:$0xf]
    %vm7 = vcmask 7168
    %8 = vst.msk [vmem:[%s1] ss:$3 sm:$0xf] %vm7, %v6
    %v9 = vld [vmem:[#allocation0] sm:$0xf]
    %10 = vrot.lane.b32.xlu0 %v9, 127
    %v11 = vpop.permute.xlu0 %10
    %vm12 = vcmask 7168
    %s13 = scalar_lea.vmem %s1, 1
    %14 = vst.msk [vmem:[%s13] ss:$3 sm:$0xf] %vm12, %v11
    %v15 = vld [vmem:[#allocation0] sm:$0xf]
    %16 = vrot.lane.b32.xlu0 %v15, 126
    %v17 = vpop.permute.xlu0 %16
    %vm18 = vcmask 7168
    %s19 = scalar_lea.vmem %s1, 2
    %20 = vst.msk [vmem:[%s19] ss:$3 sm:$0xf] %vm18, %v17

// kernel: tile.18
$region0: #{tile.18}
  #allocation2 [shape = 's32[1]{0}', space=sflag, size = 0x4, scoped, tag = 'scoped memory for tile.18']
  %s0 = inlined_call_operand.hbm [shape: f32[3], index: 0, kind: input, shape index: {}]
  %s1 = inlined_call_operand.vmem [shape: f32[4,3], index: 1, kind: output, shape index: {}]
  $region1: #{tile.18} parent=0
    #allocation0 [shape = 'u8[512]{0}', space=vmem, size = 0x400, scoped, tag = 'operand span for operand 0']
    #allocation1 [shape = 's32[1]{0}', space=sflag, size = 0x4, scoped, tag = 'scoped memory for tile.18']
    %2 = vsyncpa [#allocation1], 0
    // Predicated region
    $region2: #{tile.18} parent=1 // pred_check
      _
    $region3: #{tile.18} parent=1 // pred_check_branch
      %4 = sbr.rel (0) target = $region5
    $region4: #{tile.18} parent=1 // pred_region
      %s6 = ssub.s32 16, 16
      %7 = vsyncadd [#allocation1], %s6
      %s9 = sshll.u32 [#allocation0], 4
      %s10 = int_to_ptr.vmem [resolvable:$true] %s9
      %12 = dma.hbm_to_vmem [thread:$0]  %s0, 16, %s10, [#allocation1]
    $region5: #{tile.18} parent=1 // pred_fallthru
      _
    // Predicated region
    $region6: #{tile.18} parent=1 // pred_check
      _
    $region7: #{tile.18} parent=1 // pred_check_branch
      %14 = sbr.rel (0) target = $region9
    $region8: #{tile.18} parent=1 // pred_region
      %15 = dma.done [#allocation1], 16
    $region9: #{tile.18} parent=1 // pred_fallthru
      _
    %v16 = vld [vmem:[#allocation0] ss:$0 sm:$0xff]
    %17 = vst [vmem:[%s1] sm:$0xf] %v16
    %18 = vsyncpa [#allocation1], 1

// kernel: tile.13
$region0: #{tile.13}
  #allocation2 [shape = 's32[1]{0}', space=sflag, size = 0x4, scoped, tag = 'scoped memory for tile.13']
  %s0 = inlined_call_operand.hbm [shape: f32[16], index: 0, kind: input, shape index: {}]
  %s1 = inlined_call_operand.vmem [shape: f32[4,16], index: 1, kind: output, shape index: {}]
  $region1: #{tile.13} parent=0
    #allocation0 [shape = 'u8[512]{0}', space=vmem, size = 0x400, scoped, tag = 'operand span for operand 0']
    #allocation1 [shape = 's32[1]{0}', space=sflag, size = 0x4, scoped, tag = 'scoped memory for tile.13']
    %2 = vsyncpa [#allocation1], 0
    // Predicated region
    $region2: #{tile.13} parent=1 // pred_check
      _
    $region3: #{tile.13} parent=1 // pred_check_branch
      %4 = sbr.rel (0) target = $region5
    $region4: #{tile.13} parent=1 // pred_region
      %s6 = ssub.s32 16, 16
      %7 = vsyncadd [#allocation1], %s6
      %s9 = sshll.u32 [#allocation0], 4
      %s10 = int_to_ptr.vmem [resolvable:$true] %s9
      %12 = dma.hbm_to_vmem [thread:$0]  %s0, 16, %s10, [#allocation1]
    $region5: #{tile.13} parent=1 // pred_fallthru
      _
    // Predicated region
    $region6: #{tile.13} parent=1 // pred_check
      _
    $region7: #{tile.13} parent=1 // pred_check_branch
      %14 = sbr.rel (0) target = $region9
    $region8: #{tile.13} parent=1 // pred_region
      %15 = dma.done [#allocation1], 16
    $region9: #{tile.13} parent=1 // pred_fallthru
      _
    %v16 = vld [vmem:[#allocation0] ss:$0 sm:$0xff]
    %17 = vst [vmem:[%s1] sm:$0xf] %v16
    %18 = vsyncpa [#allocation1], 1

// kernel: tile.0
$region0: #{tile.0}
  %s0 = inlined_call_operand.vmem [shape: f32[4,16], index: 0, kind: input, shape index: {}]
  %s1 = inlined_call_operand.vmem [shape: f32[64,1], index: 1, kind: output, shape index: {}]
  $region1: #{tile.0} parent=0
    #allocation0 [shape = 'u8[4096]{0}', space=vmem, size = 0x1000, scoped, tag = 'scoped mem for input reshape']
    %s3 = sshllo.u32 0, 4
    %v4 = vld [vmem:[%s0] sm:%s3]
    %5 = vst [vmem:[#allocation0] sm:%s3] %v4
    %v6 = vld [vmem:[#allocation0] sm:$0xf]
    %vm7 = vcmask 7168
    %8 = vst.msk [vmem:[%s1] ss:$16 sm:$0x3] %vm7, %v6
    %9 = vst.msk [vmem:[%s1] ss:$16 sm:$0xc] %vm7, %v6
    %v10 = vld [vmem:[#allocation0] sm:$0xf]
    %11 = vrot.lane.b32.xlu0 %v10, 127
    %v12 = vpop.permute.xlu0 %11
    %vm13 = vcmask 7168
    %s14 = scalar_lea.vmem %s1, 1
    %15 = vst.msk [vmem:[%s14] ss:$16 sm:$0x3] %vm13, %v12
    %s16 = scalar_lea.vmem %s1, 1
    %17 = vst.msk [vmem:[%s16] ss:$16 sm:$0xc] %vm13, %v12
    %v18 = vld [vmem:[#allocation0] sm:$0xf]
    %19 = vrot.lane.b32.xlu0 %v18, 126
    %v20 = vpop.permute.xlu0 %19
    %vm21 = vcmask 7168
    %s22 = scalar_lea.vmem %s1, 2
    %23 = vst.msk [vmem:[%s22] ss:$16 sm:$0x3] %vm21, %v20
    %s24 = scalar_lea.vmem %s1, 2
    %25 = vst.msk [vmem:[%s24] ss:$16 sm:$0xc] %vm21, %v20
    %v26 = vld [vmem:[#allocation0] sm:$0xf]
    %27 = vrot.lane.b32.xlu0 %v26, 125
    %v28 = vpop.permute.xlu0 %27
    %vm29 = vcmask 7168
    %s30 = scalar_lea.vmem %s1, 3
    %31 = vst.msk [vmem:[%s30] ss:$16 sm:$0x3] %vm29, %v28
    %s32 = scalar_lea.vmem %s1, 3
    %33 = vst.msk [vmem:[%s32] ss:$16 sm:$0xc] %vm29, %v28
    %v34 = vld [vmem:[#allocation0] sm:$0xf]
    %35 = vrot.lane.b32.xlu0 %v34, 124
    %v36 = vpop.permute.xlu0 %35
    %vm37 = vcmask 7168
    %s38 = scalar_lea.vmem %s1, 4
    %39 = vst.msk [vmem:[%s38] ss:$16 sm:$0x3] %vm37, %v36
    %s40 = scalar_lea.vmem %s1, 4
    %41 = vst.msk [vmem:[%s40] ss:$16 sm:$0xc] %vm37, %v36
    %v42 = vld [vmem:[#allocation0] sm:$0xf]
    %43 = vrot.lane.b32.xlu0 %v42, 123
    %v44 = vpop.permute.xlu0 %43
    %vm45 = vcmask 7168
    %s46 = scalar_lea.vmem %s1, 5
    %47 = vst.msk [vmem:[%s46] ss:$16 sm:$0x3] %vm45, %v44
    %s48 = scalar_lea.vmem %s1, 5
    %49 = vst.msk [vmem:[%s48] ss:$16 sm:$0xc] %vm45, %v44
    %v50 = vld [vmem:[#allocation0] sm:$0xf]
    %51 = vrot.lane.b32.xlu0 %v50, 122
    %v52 = vpop.permute.xlu0 %51
    %vm53 = vcmask 7168
    %s54 = scalar_lea.vmem %s1, 6
    %55 = vst.msk [vmem:[%s54] ss:$16 sm:$0x3] %vm53, %v52
    %s56 = scalar_lea.vmem %s1, 6
    %57 = vst.msk [vmem:[%s56] ss:$16 sm:$0xc] %vm53, %v52
    %v58 = vld [vmem:[#allocation0] sm:$0xf]
    %59 = vrot.lane.b32.xlu0 %v58, 121
    %v60 = vpop.permute.xlu0 %59
    %vm61 = vcmask 7168
    %s62 = scalar_lea.vmem %s1, 7
    %63 = vst.msk [vmem:[%s62] ss:$16 sm:$0x3] %vm61, %v60
    %s64 = scalar_lea.vmem %s1, 7
    %65 = vst.msk [vmem:[%s64] ss:$16 sm:$0xc] %vm61, %v60
    %v66 = vld [vmem:[#allocation0] sm:$0xf]
    %67 = vrot.lane.b32.xlu0 %v66, 120
    %v68 = vpop.permute.xlu0 %67
    %vm69 = vcmask 7168
    %s70 = scalar_lea.vmem %s1, 8
    %71 = vst.msk [vmem:[%s70] ss:$16 sm:$0x3] %vm69, %v68
    %s72 = scalar_lea.vmem %s1, 8
    %73 = vst.msk [vmem:[%s72] ss:$16 sm:$0xc] %vm69, %v68
    %v74 = vld [vmem:[#allocation0] sm:$0xf]
    %75 = vrot.lane.b32.xlu0 %v74, 119
    %v76 = vpop.permute.xlu0 %75
    %vm77 = vcmask 7168
    %s78 = scalar_lea.vmem %s1, 9
    %79 = vst.msk [vmem:[%s78] ss:$16 sm:$0x3] %vm77, %v76
    %s80 = scalar_lea.vmem %s1, 9
    %81 = vst.msk [vmem:[%s80] ss:$16 sm:$0xc] %vm77, %v76
    %v82 = vld [vmem:[#allocation0] sm:$0xf]
    %83 = vrot.lane.b32.xlu0 %v82, 118
    %v84 = vpop.permute.xlu0 %83
    %vm85 = vcmask 7168
    %s86 = scalar_lea.vmem %s1, 10
    %87 = vst.msk [vmem:[%s86] ss:$16 sm:$0x3] %vm85, %v84
    %s88 = scalar_lea.vmem %s1, 10
    %89 = vst.msk [vmem:[%s88] ss:$16 sm:$0xc] %vm85, %v84
    %v90 = vld [vmem:[#allocation0] sm:$0xf]
    %91 = vrot.lane.b32.xlu0 %v90, 117
    %v92 = vpop.permute.xlu0 %91
    %vm93 = vcmask 7168
    %s94 = scalar_lea.vmem %s1, 11
    %95 = vst.msk [vmem:[%s94] ss:$16 sm:$0x3] %vm93, %v92
    %s96 = scalar_lea.vmem %s1, 11
    %97 = vst.msk [vmem:[%s96] ss:$16 sm:$0xc] %vm93, %v92
    %v98 = vld [vmem:[#allocation0] sm:$0xf]
    %99 = vrot.lane.b32.xlu0 %v98, 116
    %v100 = vpop.permute.xlu0 %99
    %vm101 = vcmask 7168
    %s102 = scalar_lea.vmem %s1, 12
    %103 = vst.msk [vmem:[%s102] ss:$16 sm:$0x3] %vm101, %v100
    %s104 = scalar_lea.vmem %s1, 12
    %105 = vst.msk [vmem:[%s104] ss:$16 sm:$0xc] %vm101, %v100
    %v106 = vld [vmem:[#allocation0] sm:$0xf]
    %107 = vrot.lane.b32.xlu0 %v106, 115
    %v108 = vpop.permute.xlu0 %107
    %vm109 = vcmask 7168
    %s110 = scalar_lea.vmem %s1, 13
    %111 = vst.msk [vmem:[%s110] ss:$16 sm:$0x3] %vm109, %v108
    %s112 = scalar_lea.vmem %s1, 13
    %113 = vst.msk [vmem:[%s112] ss:$16 sm:$0xc] %vm109, %v108
    %v114 = vld [vmem:[#allocation0] sm:$0xf]
    %115 = vrot.lane.b32.xlu0 %v114, 114
    %v116 = vpop.permute.xlu0 %115
    %vm117 = vcmask 7168
    %s118 = scalar_lea.vmem %s1, 14
    %119 = vst.msk [vmem:[%s118] ss:$16 sm:$0x3] %vm117, %v116
    %s120 = scalar_lea.vmem %s1, 14
    %121 = vst.msk [vmem:[%s120] ss:$16 sm:$0xc] %vm117, %v116
    %v122 = vld [vmem:[#allocation0] sm:$0xf]
    %123 = vrot.lane.b32.xlu0 %v122, 113
    %v124 = vpop.permute.xlu0 %123
    %vm125 = vcmask 7168
    %s126 = scalar_lea.vmem %s1, 15
    %127 = vst.msk [vmem:[%s126] ss:$16 sm:$0x3] %vm125, %v124
    %s128 = scalar_lea.vmem %s1, 15
    %129 = vst.msk [vmem:[%s128] ss:$16 sm:$0xc] %vm125, %v124

// kernel: decoder_forward.5
$region0: #{decoder_forward.5}
  #allocation0 [shape = 'u32[]', space=smem, size = 0x4, offset = 0x4, fixed_abs, tag = 'smem constant byte address 0x4 - core index']
  #allocation1 [shape = 'u32[144,128]{1,0:T(1,128)}', space=vmem, size = 0x12000, scoped, tag = 'internal scratch']
  %s0 = inlined_call_operand.vmem [shape: bf16[2,288,256], index: 0, kind: input, shape index: {}]
  %s1 = inlined_call_operand.vmem [shape: bf16[8,288], index: 1, kind: input, shape index: {}]
  %s2 = inlined_call_operand.vmem [shape: bf16[32,8], index: 2, kind: input, shape index: {}]
  %s3 = inlined_call_operand.vmem [shape: f32[2,32,256], index: 3, kind: input, shape index: {}]
  %s4 = inlined_call_operand.vmem [shape: f32[2,32,256], index: 4, kind: output, shape index: {}]
  %s5 = sld [smem:[#allocation0]]
  $region49: #{decoder_forward.5} parent=0
    _
  %s7 = ssub.s32 1, %s5
  %s8 = scalar_select 0, %s7, %s5
  loop: start=0, step=1, limit=4
  $region2: #{decoder_forward.5} parent=0 // loop_pre_header
    _
  $region3: #{decoder_forward.5} parent=0 // loop_header
    %s10 = sphi 0, %s14
    %p11 = scmp.ge.s32.totalorder %s10, 4
    %s17 = sphi 0, %s29
    %s18 = sphi 0, %s25
    %s19 = sphi 0, %s17
    %s20 = sphi 0, %s18
    %s21 = sphi 0, %s19
    %s22 = sphi 0, %s20
    %s34 = sphi 0, %s36
    %s37 = sphi 0, %s34
    %s38 = sphi 0, %s37
    %s54 = sphi 0, %s38
    %s58 = sphi 0, %s58
    %s60 = sphi 0, %s58
    %s61 = sphi 0, %s60
    %s75 = sphi 0, %s61
    %s79 = sphi 0, %s79
    %s81 = sphi 0, %s79
    %s82 = sphi 0, %s81
    %s96 = sphi 0, %s82
    %s104 = sphi 0, %s106
    %s107 = sphi 0, %s104
    %s108 = sphi 0, %s107
    %s124 = sphi 0, %s108
    %s132 = sphi 0, %s134
    %s135 = sphi 0, %s132
    %s136 = sphi 0, %s135
    %s152 = sphi 0, %s136
  $region4: #{decoder_forward.5} parent=0 // loop_header_branch
    %13 = sbr.rel (%p11) target = $region8
  $region5: #{decoder_forward.5} parent=0 // loop_body
    %s15 = ssub.s32 %s10, 1
    %s16 = ssub.s32 %s10, 2
    %s23 = sadd.s32 1, %s18
    %p24 = scmp.ge.s32.totalorder %s23, 1
    %s25 = scalar_select %p24, 0, %s23
    %s26 = sadd.s32 1, %s17
    %s27 = scalar_select %p24, %s26, %s17
    %p28 = scmp.ge.s32.totalorder %s27, 2
    %s29 = scalar_select %p28, 0, %s27
    %s30 = ssub.s32 %s17, %s29
    %s31 = ssub.s32 %s18, %s25
    %s32 = sor.u32 %s30, %s31
    %p33 = scmp.eq.s32.totalorder %s32, 0
    %s35 = sadd.s32 %s34, 1
    %s36 = scalar_select %p33, %s34, %s35
    %p39 = pneg %p33
    %p40 = scmp.eq.s32.totalorder %s10, 1
    %p41 = por %p39, %p40
    %p42 = scmp.ne.s32.totalorder %s34, %s37
    %p43 = scmp.eq.s32.totalorder %s10, 0
    %p44 = por %p42, %p43
    %p45 = scmp.ne.s32.totalorder %s34, %s37
    %p46 = scmp.eq.s32.totalorder %s15, 1
    %p47 = por %p45, %p46
    %p48 = scmp.ne.s32.totalorder %s37, %s38
    %p49 = scmp.eq.s32.totalorder %s15, 0
    %p50 = por %p48, %p49
    %p51 = scmp.ne.s32.totalorder %s37, %s38
    %p52 = scmp.eq.s32.totalorder %s16, 1
    %p53 = por %p51, %p52
    %p55 = scmp.ne.s32.totalorder %s38, %s54
    %p56 = scmp.eq.s32.totalorder %s16, 0
    %p57 = por %p55, %p56
    %s59 = sadd.s32 %s58, 1
    %p62 = scmp.eq.s32.totalorder %s10, 1
    %p63 = scmp.ne.s32.totalorder %s58, %s60
    %p64 = scmp.eq.s32.totalorder %s10, 0
    %p65 = por %p63, %p64
    %p66 = scmp.ne.s32.totalorder %s58, %s60
    %p67 = scmp.eq.s32.totalorder %s15, 1
    %p68 = por %p66, %p67
    %p69 = scmp.ne.s32.totalorder %s60, %s61
    %p70 = scmp.eq.s32.totalorder %s15, 0
    %p71 = por %p69, %p70
    %p72 = scmp.ne.s32.totalorder %s60, %s61
    %p73 = scmp.eq.s32.totalorder %s16, 1
    %p74 = por %p72, %p73
    %p76 = scmp.ne.s32.totalorder %s61, %s75
    %p77 = scmp.eq.s32.totalorder %s16, 0
    %p78 = por %p76, %p77
    %s80 = sadd.s32 %s79, 1
    %p83 = scmp.eq.s32.totalorder %s10, 1
    %p84 = scmp.ne.s32.totalorder %s79, %s81
    %p85 = scmp.eq.s32.totalorder %s10, 0
    %p86 = por %p84, %p85
    %p87 = scmp.ne.s32.totalorder %s79, %s81
    %p88 = scmp.eq.s32.totalorder %s15, 1
    %p89 = por %p87, %p88
    %p90 = scmp.ne.s32.totalorder %s81, %s82
    %p91 = scmp.eq.s32.totalorder %s15, 0
    %p92 = por %p90, %p91
    %p93 = scmp.ne.s32.totalorder %s81, %s82
    %p94 = scmp.eq.s32.totalorder %s16, 1
    %p95 = por %p93, %p94
    %p97 = scmp.ne.s32.totalorder %s82, %s96
    %p98 = scmp.eq.s32.totalorder %s16, 0
    %p99 = por %p97, %p98
    %s100 = ssub.s32 %s17, %s29
    %s101 = ssub.s32 %s18, %s25
    %s102 = sor.u32 %s100, %s101
    %p103 = scmp.eq.s32.totalorder %s102, 0
    %s105 = sadd.s32 %s104, 1
    %s106 = scalar_select %p103, %s104, %s105
    %p109 = pneg %p103
    %p110 = scmp.eq.s32.totalorder %s10, 1
    %p111 = por %p109, %p110
    %p112 = scmp.ne.s32.totalorder %s104, %s107
    %p113 = scmp.eq.s32.totalorder %s10, 0
    %p114 = por %p112, %p113
    %p115 = scmp.ne.s32.totalorder %s104, %s107
    %p116 = scmp.eq.s32.totalorder %s15, 1
    %p117 = por %p115, %p116
    %p118 = scmp.ne.s32.totalorder %s107, %s108
    %p119 = scmp.eq.s32.totalorder %s15, 0
    %p120 = por %p118, %p119
    %p121 = scmp.ne.s32.totalorder %s107, %s108
    %p122 = scmp.eq.s32.totalorder %s16, 1
    %p123 = por %p121, %p122
    %p125 = scmp.ne.s32.totalorder %s108, %s124
    %p126 = scmp.eq.s32.totalorder %s16, 0
    %p127 = por %p125, %p126
    %s128 = ssub.s32 %s17, %s29
    %s129 = ssub.s32 %s18, %s25
    %s130 = sor.u32 %s128, %s129
    %p131 = scmp.eq.s32.totalorder %s130, 0
    %s133 = sadd.s32 %s132, 1
    %s134 = scalar_select %p131, %s132, %s133
    %p137 = pneg %p131
    %p138 = scmp.eq.s32.totalorder %s10, 1
    %p139 = por %p137, %p138
    %p140 = scmp.ne.s32.totalorder %s132, %s135
    %p141 = scmp.eq.s32.totalorder %s10, 0
    %p142 = por %p140, %p141
    %p143 = scmp.ne.s32.totalorder %s132, %s135
    %p144 = scmp.eq.s32.totalorder %s15, 1
    %p145 = por %p143, %p144
    %p146 = scmp.ne.s32.totalorder %s135, %s136
    %p147 = scmp.eq.s32.totalorder %s15, 0
    %p148 = por %p146, %p147
    %p149 = scmp.ne.s32.totalorder %s135, %s136
    %p150 = scmp.eq.s32.totalorder %s16, 1
    %p151 = por %p149, %p150
    %p153 = scmp.ne.s32.totalorder %s136, %s152
    %p154 = scmp.eq.s32.totalorder %s16, 0
    %p155 = por %p153, %p154
    %p156 = scmp.le.s32.totalorder 1, %s10
    %p157 = scmp.lt.s32.totalorder %s10, 3
    %p158 = pnand %p156, %p157
    %p159 = pneg %p158
    // Predicated region
    $region9: #{decoder_forward.5} parent=5 // pred_check
      _
    $region10: #{decoder_forward.5} parent=5 // pred_check_branch
      %161 = sbr.rel (%p158) target = $region12
    $region11: #{decoder_forward.5} parent=5 // pred_region
      %s162 = ssub.s32 %s10, 1
      // Predicated region
      $region13: #{decoder_forward.5} parent=11 // pred_check
        %p163 = pneg %p71
      $region14: #{decoder_forward.5} parent=11 // pred_check_branch
        %165 = sbr.rel (%p163) target = $region16
      $region15: #{decoder_forward.5} parent=11 // pred_region
        _
      $region16: #{decoder_forward.5} parent=11 // pred_fallthru
        _
      // Predicated region
      $region17: #{decoder_forward.5} parent=11 // pred_check
        %p166 = pneg %p92
      $region18: #{decoder_forward.5} parent=11 // pred_check_branch
        %168 = sbr.rel (%p166) target = $region20
      $region19: #{decoder_forward.5} parent=11 // pred_region
        _
      $region20: #{decoder_forward.5} parent=11 // pred_fallthru
        _
    $region12: #{decoder_forward.5} parent=5 // pred_fallthru
      _
    %p169 = scmp.lt.s32.totalorder %s10, 2
    // Predicated region
    $region21: #{decoder_forward.5} parent=5 // pred_check
      %p170 = pneg %p169
    $region22: #{decoder_forward.5} parent=5 // pred_check_branch
      %172 = sbr.rel (%p170) target = $region24
    $region23: #{decoder_forward.5} parent=5 // pred_region
      // Predicated region
      $region25: #{decoder_forward.5} parent=23 // pred_check
        %p173 = pneg %p44
      $region26: #{decoder_forward.5} parent=23 // pred_check_branch
        %175 = sbr.rel (%p173) target = $region28
      $region27: #{decoder_forward.5} parent=23 // pred_region
        %s176 = smul.u32 2, %s18
        %p177 = scmp.lt.s32.totalorder %s17, 1
        %s178 = scalar_select %p177, %s17, 1
        %p179 = scmp.lt.s32.totalorder %s176, 1
        %s180 = scalar_select %p179, %s176, 1
        %s181 = smul.addr %s178, 72
        %s182 = sadd.s32 %s180, %s181
        %s183 = smul.addr %s182, 4
        %s184 = scalar_lea.vmem %s0, %s183
        %s185 = smul.u32 2, %s18
      $region28: #{decoder_forward.5} parent=23 // pred_fallthru
        _
      // Predicated region
      $region29: #{decoder_forward.5} parent=23 // pred_check
        %p186 = pneg %p114
      $region30: #{decoder_forward.5} parent=23 // pred_check_branch
        %188 = sbr.rel (%p186) target = $region32
      $region31: #{decoder_forward.5} parent=23 // pred_region
        %s189 = smul.u32 2, %s18
        %p190 = scmp.lt.s32.totalorder %s17, 1
        %s191 = scalar_select %p190, %s17, 1
        %p192 = scmp.lt.s32.totalorder %s189, 1
        %s193 = scalar_select %p192, %s189, 1
        %s194 = smul.addr %s191, 8
        %s195 = sadd.s32 %s193, %s194
        %s196 = smul.addr %s195, 8
        %s197 = scalar_lea.vmem %s3, %s196
        %s198 = smul.u32 2, %s18
      $region32: #{decoder_forward.5} parent=23 // pred_fallthru
        _
    $region24: #{decoder_forward.5} parent=5 // pred_fallthru
      _
    %p199 = scmp.le.s32.totalorder 1, %s10
    %p200 = scmp.lt.s32.totalorder %s10, 3
    %p201 = pnand %p199, %p200
    %p202 = pneg %p201
    // Predicated region
    $region33: #{decoder_forward.5} parent=5 // pred_check
      _
    $region34: #{decoder_forward.5} parent=5 // pred_check_branch
      %204 = sbr.rel (%p201) target = $region36
    $region35: #{decoder_forward.5} parent=5 // pred_region
      %s205 = ssub.s32 %s10, 1
      %s206 = smul.u32 2, %s20
      %p207 = scmp.lt.s32.totalorder %s19, 1
      %s208 = scalar_select %p207, %s19, 1
      %p209 = scmp.lt.s32.totalorder %s206, 1
      %s210 = scalar_select %p209, %s206, 1
      %s211 = smul.addr %s208, 72
      %s212 = sadd.s32 %s210, %s211
      %s213 = smul.addr %s212, 4
      %s214 = scalar_lea.vmem %s0, %s213
      %p215 = pneg %p50
      %p216 = pneg %p47
      %p217 = pneg %p71
      %p218 = pneg %p68
      %p219 = pneg %p92
      %p220 = pneg %p89
      %s221 = smul.u32 2, %s20
      %p222 = scmp.lt.s32.totalorder %s19, 1
      %s223 = scalar_select %p222, %s19, 1
      %p224 = scmp.lt.s32.totalorder %s221, 1
      %s225 = scalar_select %p224, %s221, 1
      %s226 = smul.addr %s223, 8
      %s227 = sadd.s32 %s225, %s226
      %s228 = smul.addr %s227, 8
      %s229 = scalar_lea.vmem %s3, %s228
      %p230 = pneg %p120
      %p231 = pneg %p117
      %p232 = pneg %p148
      %p233 = pneg %p145
      %s234 = smul.u32 2, %s20
      %p235 = scmp.lt.s32.totalorder %s19, 1
      %s236 = scalar_select %p235, %s19, 1
      %p237 = scmp.lt.s32.totalorder %s234, 1
      %s238 = scalar_select %p237, %s234, 1
      %s239 = smul.addr %s236, 8
      %s240 = sadd.s32 %s238, %s239
      %s241 = smul.addr %s240, 8
      %s242 = scalar_lea.vmem %s4, %s241
      %s243 = smul.u32 2, %s20
      %p244 = scmp.lt.s32.totalorder %s19, 1
      %s245 = scalar_select %p244, %s19, 1
      %p246 = scmp.lt.s32.totalorder %s243, 1
      %s247 = scalar_select %p246, %s243, 1
      %s248 = smul.addr %s245, 72
      %s249 = sadd.s32 %s247, %s248
      %s250 = smul.addr %s249, 4
      %s251 = scalar_lea.vmem %s0, %s250
      %s252 = smul.u32 2, %s20
      %s253 = smul.u32 2, %s20
      %p254 = scmp.lt.s32.totalorder %s19, 1
      %s255 = scalar_select %p254, %s19, 1
      %p256 = scmp.lt.s32.totalorder %s253, 1
      %s257 = scalar_select %p256, %s253, 1
      %s258 = smul.addr %s255, 8
      %s259 = sadd.s32 %s257, %s258
      %s260 = smul.addr %s259, 8
      %s261 = scalar_lea.vmem %s3, %s260
      %s262 = smul.u32 2, %s20
      %s263 = smul.u32 2, %s20
      %p264 = scmp.lt.s32.totalorder %s19, 1
      %s265 = scalar_select %p264, %s19, 1
      %p266 = scmp.lt.s32.totalorder %s263, 1
      %s267 = scalar_select %p266, %s263, 1
      %s268 = smul.addr %s265, 8
      %s269 = sadd.s32 %s267, %s268
      %s270 = smul.addr %s269, 8
      %s271 = scalar_lea.vmem %s4, %s270
      %s272 = smul.u32 2, %s20
      %v274 = vld [vmem:[%s1] sm:$0xff]
      %v275 = vld [vmem:[%s1 + $0x8] sm:$0xf]
      %v276 = vld [vmem:[%s251] sm:$0xff]
      %v277 = vld [vmem:[%s251 + $0x8] sm:$0xff]
      %v278 = vld [vmem:[%s251 + $0x10] sm:$0xff]
      %v279 = vld [vmem:[%s251 + $0x18] sm:$0xff]
      %v280 = vld [vmem:[%s251 + $0x20] sm:$0xff]
      %v281 = vld [vmem:[%s251 + $0x28] sm:$0xff]
      %v282 = vld [vmem:[%s251 + $0x30] sm:$0xff]
      %v283 = vld [vmem:[%s251 + $0x38] sm:$0xff]
      %v284 = vld [vmem:[%s251 + $0x40] sm:$0xff]
      %v285 = vld [vmem:[%s251 + $0x48] sm:$0xff]
      %v286 = vld [vmem:[%s251 + $0x50] sm:$0xff]
      %v287 = vld [vmem:[%s251 + $0x58] sm:$0xff]
      %v288 = vld [vmem:[%s251 + $0x60] sm:$0xff]
      %v289 = vld [vmem:[%s251 + $0x68] sm:$0xff]
      %v290 = vld [vmem:[%s251 + $0x70] sm:$0xff]
      %v291 = vld [vmem:[%s251 + $0x78] sm:$0xff]
      %v292 = vld [vmem:[%s251 + $0x80] sm:$0xff]
      %v293 = vld [vmem:[%s251 + $0x88] sm:$0xff]
      %v294 = vld [vmem:[%s251 + $0x90] sm:$0xff]
      %v295 = vld [vmem:[%s251 + $0x98] sm:$0xff]
      %v296 = vld [vmem:[%s251 + $0xa0] sm:$0xff]
      %v297 = vld [vmem:[%s251 + $0xa8] sm:$0xff]
      %v298 = vld [vmem:[%s251 + $0xb0] sm:$0xff]
      %v299 = vld [vmem:[%s251 + $0xb8] sm:$0xff]
      %v300 = vld [vmem:[%s251 + $0xc0] sm:$0xff]
      %v301 = vld [vmem:[%s251 + $0xc8] sm:$0xff]
      %v302 = vld [vmem:[%s251 + $0xd0] sm:$0xff]
      %v303 = vld [vmem:[%s251 + $0xd8] sm:$0xff]
      %v304 = vld [vmem:[%s251 + $0xe0] sm:$0xff]
      %v305 = vld [vmem:[%s251 + $0xe8] sm:$0xff]
      %v306 = vld [vmem:[%s251 + $0xf0] sm:$0xff]
      %v307 = vld [vmem:[%s251 + $0xf8] sm:$0xff]
      %v308 = vld [vmem:[%s251 + $0x100] sm:$0xff]
      %v309 = vld [vmem:[%s251 + $0x108] sm:$0xff]
      %v310 = vld [vmem:[%s251 + $0x110] sm:$0xff]
      %v311 = vld [vmem:[%s251 + $0x118] sm:$0xff]
      %v314 = vunpack.c.l.b16 %v274
      %v315 = vunpack.c.h.b16 %v274
      %v316 = vunpack.c.l.b16 %v275
      %v317 = vpack.c.b16 %v314, %v314
      %v318 = vpack.c.b16 %v315, %v315
      %v319 = vpack.c.b16 %v316, %v316
      %v358 = vunpack.c.l.b16 %v276
      %v359 = vunpack.c.h.b16 %v276
      %v360 = vunpack.c.l.b16 %v277
      %v361 = vunpack.c.h.b16 %v277
      %v362 = vunpack.c.l.b16 %v278
      %v363 = vunpack.c.h.b16 %v278
      %v364 = vunpack.c.l.b16 %v279
      %v365 = vunpack.c.h.b16 %v279
      %v366 = vunpack.c.l.b16 %v280
      %v367 = vunpack.c.h.b16 %v280
      %v368 = vunpack.c.l.b16 %v281
      %v369 = vunpack.c.h.b16 %v281
      %v370 = vunpack.c.l.b16 %v282
      %v371 = vunpack.c.h.b16 %v282
      %v372 = vunpack.c.l.b16 %v283
      %v373 = vunpack.c.h.b16 %v283
      %v374 = vunpack.c.l.b16 %v284
      %v375 = vunpack.c.h.b16 %v284
      %v376 = vunpack.c.l.b16 %v285
      %v377 = vunpack.c.h.b16 %v285
      %v378 = vunpack.c.l.b16 %v286
      %v379 = vunpack.c.h.b16 %v286
      %v380 = vunpack.c.l.b16 %v287
      %v381 = vunpack.c.h.b16 %v287
      %v382 = vunpack.c.l.b16 %v288
      %v383 = vunpack.c.h.b16 %v288
      %v384 = vunpack.c.l.b16 %v289
      %v385 = vunpack.c.h.b16 %v289
      %v386 = vunpack.c.l.b16 %v290
      %v387 = vunpack.c.h.b16 %v290
      %v388 = vunpack.c.l.b16 %v291
      %v389 = vunpack.c.h.b16 %v291
      %v390 = vunpack.c.l.b16 %v292
      %v391 = vunpack.c.h.b16 %v292
      %v392 = vunpack.c.l.b16 %v293
      %v393 = vunpack.c.h.b16 %v293
      %v394 = vunpack.c.l.b16 %v294
      %v395 = vunpack.c.h.b16 %v294
      %v396 = vunpack.c.l.b16 %v295
      %v397 = vunpack.c.h.b16 %v295
      %v398 = vunpack.c.l.b16 %v296
      %v399 = vunpack.c.h.b16 %v296
      %v400 = vunpack.c.l.b16 %v297
      %v401 = vunpack.c.h.b16 %v297
      %v402 = vunpack.c.l.b16 %v298
      %v403 = vunpack.c.h.b16 %v298
      %v404 = vunpack.c.l.b16 %v299
      %v405 = vunpack.c.h.b16 %v299
      %v406 = vunpack.c.l.b16 %v300
      %v407 = vunpack.c.h.b16 %v300
      %v408 = vunpack.c.l.b16 %v301
      %v409 = vunpack.c.h.b16 %v301
      %v410 = vunpack.c.l.b16 %v302
      %v411 = vunpack.c.h.b16 %v302
      %v412 = vunpack.c.l.b16 %v303
      %v413 = vunpack.c.h.b16 %v303
      %v414 = vunpack.c.l.b16 %v304
      %v415 = vunpack.c.h.b16 %v304
      %v416 = vunpack.c.l.b16 %v305
      %v417 = vunpack.c.h.b16 %v305
      %v418 = vunpack.c.l.b16 %v306
      %v419 = vunpack.c.h.b16 %v306
      %v420 = vunpack.c.l.b16 %v307
      %v421 = vunpack.c.h.b16 %v307
      %v422 = vunpack.c.l.b16 %v308
      %v423 = vunpack.c.h.b16 %v308
      %v424 = vunpack.c.l.b16 %v309
      %v425 = vunpack.c.h.b16 %v309
      %v426 = vunpack.c.l.b16 %v310
      %v427 = vunpack.c.h.b16 %v310
      %v428 = vunpack.c.l.b16 %v311
      %v429 = vunpack.c.h.b16 %v311
      %v430 = vpack.c.b16 %v360, %v358
      %v431 = vpack.c.b16 %v361, %v359
      %v432 = vpack.c.b16 %v364, %v362
      %v433 = vpack.c.b16 %v365, %v363
      %v434 = vpack.c.b16 %v368, %v366
      %v435 = vpack.c.b16 %v369, %v367
      %v436 = vpack.c.b16 %v372, %v370
      %v437 = vpack.c.b16 %v373, %v371
      %v438 = vpack.c.b16 %v376, %v374
      %v439 = vpack.c.b16 %v377, %v375
      %v440 = vpack.c.b16 %v380, %v378
      %v441 = vpack.c.b16 %v381, %v379
      %v442 = vpack.c.b16 %v384, %v382
      %v443 = vpack.c.b16 %v385, %v383
      %v444 = vpack.c.b16 %v388, %v386
      %v445 = vpack.c.b16 %v389, %v387
      %v446 = vpack.c.b16 %v392, %v390
      %v447 = vpack.c.b16 %v393, %v391
      %v448 = vpack.c.b16 %v396, %v394
      %v449 = vpack.c.b16 %v397, %v395
      %v450 = vpack.c.b16 %v400, %v398
      %v451 = vpack.c.b16 %v401, %v399
      %v452 = vpack.c.b16 %v404, %v402
      %v453 = vpack.c.b16 %v405, %v403
      %v454 = vpack.c.b16 %v408, %v406
      %v455 = vpack.c.b16 %v409, %v407
      %v456 = vpack.c.b16 %v412, %v410
      %v457 = vpack.c.b16 %v413, %v411
      %v458 = vpack.c.b16 %v416, %v414
      %v459 = vpack.c.b16 %v417, %v415
      %v460 = vpack.c.b16 %v420, %v418
      %v461 = vpack.c.b16 %v421, %v419
      %v462 = vpack.c.b16 %v424, %v422
      %v463 = vpack.c.b16 %v425, %v423
      %v464 = vpack.c.b16 %v428, %v426
      %v465 = vpack.c.b16 %v429, %v427
      %vm502 = vcmask 261120
      %v504 = vsel %vm502, %v319, 0
      %506 = vmatprep.subr.bf16.mxu0 %v431
      %507 = vmatpush1.bf16.msra.mxu0 %v430
      %508 = vmatprep.subr.bf16.mxu0 %v433
      %509 = vmatpush1.bf16.msra.mxu0 %v432
      %510 = vmatprep.subr.bf16.mxu0 %v435
      %511 = vmatpush1.bf16.msra.mxu0 %v434
      %512 = vmatprep.subr.bf16.mxu0 %v437
      %513 = vmatpush1.bf16.msra.mxu0 %v436
      %514 = vmatprep.subr.bf16.mxu0 %v439
      %515 = vmatpush1.bf16.msra.mxu0 %v438
      %516 = vmatprep.subr.bf16.mxu0 %v441
      %517 = vmatpush1.bf16.msra.mxu0 %v440
      %518 = vmatprep.subr.bf16.mxu0 %v443
      %519 = vmatpush1.bf16.msra.mxu0 %v442
      %520 = vmatprep.subr.bf16.mxu0 %v445
      %521 = vmatpush1.bf16.msra.mxu0 %v444
      %522 = vmatprep.subr.bf16.mxu0 %v447
      %523 = vmatpush1.bf16.msra.mxu0 %v446
      %524 = vmatprep.subr.bf16.mxu0 %v449
      %525 = vmatpush1.bf16.msra.mxu0 %v448
      %526 = vmatprep.subr.bf16.mxu0 %v451
      %527 = vmatpush1.bf16.msra.mxu0 %v450
      %528 = vmatprep.subr.bf16.mxu0 %v453
      %529 = vmatpush1.bf16.msra.mxu0 %v452
      %530 = vmatprep.subr.bf16.mxu0 %v455
      %531 = vmatpush1.bf16.msra.mxu0 %v454
      %532 = vmatprep.subr.bf16.mxu0 %v457
      %533 = vmatpush1.bf16.msra.mxu0 %v456
      %534 = vmatprep.subr.bf16.mxu0 %v459
      %535 = vmatpush1.bf16.msra.mxu0 %v458
      %536 = vmatprep.subr.bf16.mxu0 %v461
      %537 = vmatpush1.bf16.msra.mxu0 %v460
      %538 = vmatprep.mubr.bf16.mxu0 %v318
      %539 = vmatmul.mubr.bf16.gmra.mrb[0].mxu0 %v317
      %v540 = vpop.f32.mrb[0].mxu0
      %v541 = vadd.f32 0.0, %v540
      %v542 = vpop.f32.mrb[0].mxu0
      %v543 = vadd.f32 0.0, %v542
      %v544 = vpop.f32.mrb[0].mxu0
      %v545 = vpop.f32.mrb[0].mxu0
      %546 = vdwg.mxu0
      %547 = vmatprep.subr.bf16.mxu0 %v463
      %548 = vmatpush1.bf16.msra.mxu0 %v462
      %549 = vmatprep.subr.bf16.mxu0 %v465
      %550 = vmatpush1.bf16.msra.mxu0 %v464
      %551 = vmatprep.subr.bf16.mxu0 0
      %552 = vmatpush1.bf16.msra.mxu0 0
      %553 = vmatprep.subr.bf16.mxu0 0
      %554 = vmatpush1.bf16.msra.mxu0 0
      %555 = vmatprep.subr.bf16.mxu0 0
      %556 = vmatpush1.bf16.msra.mxu0 0
      %557 = vmatprep.subr.bf16.mxu0 0
      %558 = vmatpush1.bf16.msra.mxu0 0
      %559 = vmatprep.subr.bf16.mxu0 0
      %560 = vmatpush1.bf16.msra.mxu0 0
      %561 = vmatprep.subr.bf16.mxu0 0
      %562 = vmatpush1.bf16.msra.mxu0 0
      %563 = vmatprep.subr.bf16.mxu0 0
      %564 = vmatpush1.bf16.msra.mxu0 0
      %565 = vmatprep.subr.bf16.mxu0 0
      %566 = vmatpush1.bf16.msra.mxu0 0
      %567 = vmatprep.subr.bf16.mxu0 0
      %568 = vmatpush1.bf16.msra.mxu0 0
      %569 = vmatprep.subr.bf16.mxu0 0
      %570 = vmatpush1.bf16.msra.mxu0 0
      %571 = vmatprep.subr.bf16.mxu0 0
      %572 = vmatpush1.bf16.msra.mxu0 0
      %573 = vmatprep.subr.bf16.mxu0 0
      %574 = vmatpush1.bf16.msra.mxu0 0
      %575 = vmatprep.subr.bf16.mxu0 0
      %576 = vmatpush1.bf16.msra.mxu0 0
      %577 = vmatprep.subr.bf16.mxu0 0
      %578 = vmatpush1.bf16.msra.mxu0 0
      %579 = vmatprep.mubr.bf16.mxu0 0
      %580 = vmatmul.mubr.bf16.gmra.mrb[0].mxu0 %v504
      %v581 = vpop.f32.mrb[0].mxu0
      %v582 = vadd.f32 %v541, %v581
      %v583 = vpop.f32.mrb[0].mxu0
      %v584 = vadd.f32 %v543, %v583
      %v585 = vpop.f32.mrb[0].mxu0
      %v586 = vpop.f32.mrb[0].mxu0
      %587 = vdwg.mxu0
      %v588 = vmax.f32 %v582, 0.0
      %v589 = vmax.f32 %v584, 0.0
      %v590 = vpack.c.bf16 %v588, %v588
      %v591 = vpack.c.bf16 %v589, %v589
      %v592 = vld [vmem:[%s2] sm:$0xf]
      %v593 = vld [vmem:[%s2 + $0x4] sm:$0xf]
      %v594 = vld [vmem:[%s2 + $0x8] sm:$0xf]
      %v595 = vld [vmem:[%s2 + $0xc] sm:$0xf]
      %v600 = vunpack.c.l.b16 %v592
      %v601 = vunpack.c.l.b16 %v593
      %v602 = vunpack.c.l.b16 %v594
      %v603 = vunpack.c.l.b16 %v595
      %v604 = vpack.c.b16 %v601, %v600
      %v605 = vpack.c.b16 %v603, %v602
      %vm606 = vcmask 64512
      %v608 = vsel %vm606, %v604, 0
      %v611 = vsel %vm606, %v605, 0
      %vm613 = vcmask 1043456
      %v615 = vsel %vm613, %v590, 0
      %v618 = vsel %vm613, %v591, 0
      %620 = vmatprep.subr.bf16.mxu0 %v618
      %621 = vmatpush1.bf16.msra.mxu0 %v615
      %622 = vmatprep.subr.bf16.mxu0 0
      %623 = vmatpush1.bf16.msra.mxu0 0
      %624 = vmatprep.subr.bf16.mxu0 0
      %625 = vmatpush1.bf16.msra.mxu0 0
      %626 = vmatprep.subr.bf16.mxu0 0
      %627 = vmatpush1.bf16.msra.mxu0 0
      %628 = vmatprep.subr.bf16.mxu0 0
      %629 = vmatpush1.bf16.msra.mxu0 0
      %630 = vmatprep.subr.bf16.mxu0 0
      %631 = vmatpush1.bf16.msra.mxu0 0
      %632 = vmatprep.subr.bf16.mxu0 0
      %633 = vmatpush1.bf16.msra.mxu0 0
      %634 = vmatprep.subr.bf16.mxu0 0
      %635 = vmatpush1.bf16.msra.mxu0 0
      %636 = vmatprep.subr.bf16.mxu0 0
      %637 = vmatpush1.bf16.msra.mxu0 0
      %638 = vmatprep.subr.bf16.mxu0 0
      %639 = vmatpush1.bf16.msra.mxu0 0
      %640 = vmatprep.subr.bf16.mxu0 0
      %641 = vmatpush1.bf16.msra.mxu0 0
      %642 = vmatprep.subr.bf16.mxu0 0
      %643 = vmatpush1.bf16.msra.mxu0 0
      %644 = vmatprep.subr.bf16.mxu0 0
      %645 = vmatpush1.bf16.msra.mxu0 0
      %646 = vmatprep.subr.bf16.mxu0 0
      %647 = vmatpush1.bf16.msra.mxu0 0
      %648 = vmatprep.subr.bf16.mxu0 0
      %649 = vmatpush1.bf16.msra.mxu0 0
      %650 = vmatprep.subr.bf16.mxu0 0
      %651 = vmatpush1.bf16.msra.mxu0 0
      %652 = vmatprep.mubr.bf16.mxu0 0
      %653 = vmatmul.mubr.bf16.gmra.mrb[0].mxu0 %v608
      %v654 = vpop.f32.mrb[0].mxu0
      %v655 = vadd.f32 0.0, %v654
      %v656 = vpop.f32.mrb[0].mxu0
      %v657 = vadd.f32 0.0, %v656
      %v658 = vpop.f32.mrb[0].mxu0
      %v659 = vadd.f32 0.0, %v658
      %v660 = vpop.f32.mrb[0].mxu0
      %v661 = vadd.f32 0.0, %v660
      %662 = vmatprep.mubr.bf16.mxu0 0
      %663 = vmatmul.mubr.bf16.gmra.mrb[0].mxu0 %v611
      %v664 = vpop.f32.mrb[0].mxu0
      %v665 = vadd.f32 0.0, %v664
      %v666 = vpop.f32.mrb[0].mxu0
      %v667 = vadd.f32 0.0, %v666
      %v668 = vpop.f32.mrb[0].mxu0
      %v669 = vadd.f32 0.0, %v668
      %v670 = vpop.f32.mrb[0].mxu0
      %v671 = vadd.f32 0.0, %v670
      %672 = vdwg.mxu0
      %v673 = vld [vmem:[%s261] sm:$0xff]
      %v674 = vld [vmem:[%s261 + $0x8] sm:$0xff]
      %v675 = vld [vmem:[%s261 + $0x10] sm:$0xff]
      %v676 = vld [vmem:[%s261 + $0x18] sm:$0xff]
      %v677 = vld [vmem:[%s261 + $0x20] sm:$0xff]
      %v678 = vld [vmem:[%s261 + $0x28] sm:$0xff]
      %v679 = vld [vmem:[%s261 + $0x30] sm:$0xff]
      %v680 = vld [vmem:[%s261 + $0x38] sm:$0xff]
      %v681 = vadd.f32 %v673, %v655
      %v682 = vadd.f32 %v674, %v657
      %v683 = vadd.f32 %v675, %v659
      %v684 = vadd.f32 %v676, %v661
      %v685 = vadd.f32 %v677, %v665
      %v686 = vadd.f32 %v678, %v667
      %v687 = vadd.f32 %v679, %v669
      %v688 = vadd.f32 %v680, %v671
      %689 = vst [vmem:[%s271] sm:$0xff] %v681
      %690 = vst [vmem:[%s271 + $0x8] sm:$0xff] %v682
      %691 = vst [vmem:[%s271 + $0x10] sm:$0xff] %v683
      %692 = vst [vmem:[%s271 + $0x18] sm:$0xff] %v684
      %693 = vst [vmem:[%s271 + $0x20] sm:$0xff] %v685
      %694 = vst [vmem:[%s271 + $0x28] sm:$0xff] %v686
      %695 = vst [vmem:[%s271 + $0x30] sm:$0xff] %v687
      %696 = vst [vmem:[%s271 + $0x38] sm:$0xff] %v688
      %s697 = smul.u32 2, %s20
      %p698 = scmp.lt.s32.totalorder %s19, 1
      %s699 = scalar_select %p698, %s19, 1
      %p700 = scmp.lt.s32.totalorder %s697, 1
      %s701 = scalar_select %p700, %s697, 1
      %s702 = smul.addr %s699, 8
      %s703 = sadd.s32 %s701, %s702
      %s704 = smul.addr %s703, 8
      %s705 = scalar_lea.vmem %s4, %s704
      // Predicated region
      $region37: #{decoder_forward.5} parent=35 // pred_check
        %p706 = pneg %p145
      $region38: #{decoder_forward.5} parent=35 // pred_check_branch
        %708 = sbr.rel (%p706) target = $region40
      $region39: #{decoder_forward.5} parent=35 // pred_region
        %s709 = smul.u32 2, %s20
      $region40: #{decoder_forward.5} parent=35 // pred_fallthru
        _
    $region36: #{decoder_forward.5} parent=5 // pred_fallthru
      _
    %p710 = scmp.le.s32.totalorder 2, %s10
    // Predicated region
    $region41: #{decoder_forward.5} parent=5 // pred_check
      %p711 = pneg %p710
    $region42: #{decoder_forward.5} parent=5 // pred_check_branch
      %713 = sbr.rel (%p711) target = $region44
    $region43: #{decoder_forward.5} parent=5 // pred_region
      %s714 = ssub.s32 %s10, 2
      // Predicated region
      $region45: #{decoder_forward.5} parent=43 // pred_check
        %p715 = pneg %p151
      $region46: #{decoder_forward.5} parent=43 // pred_check_branch
        %717 = sbr.rel (%p715) target = $region48
      $region47: #{decoder_forward.5} parent=43 // pred_region
        %s718 = smul.u32 2, %s22
        %p719 = scmp.lt.s32.totalorder %s21, 1
        %s720 = scalar_select %p719, %s21, 1
        %p721 = scmp.lt.s32.totalorder %s718, 1
        %s722 = scalar_select %p721, %s718, 1
        %s723 = smul.addr %s720, 8
        %s724 = sadd.s32 %s722, %s723
        %s725 = smul.addr %s724, 8
        %s726 = scalar_lea.vmem %s4, %s725
      $region48: #{decoder_forward.5} parent=43 // pred_fallthru
        _
    $region44: #{decoder_forward.5} parent=5 // pred_fallthru
      _
  $region6: #{decoder_forward.5} parent=0 // loop_footer
    %s14 = sadd.s32 1, %s10
  $region7: #{decoder_forward.5} parent=0 // loop_footer_branch
    %9 = sbr.rel target = $region3
  $region8: #{decoder_forward.5} parent=0 // loop_exit
    _

// kernel: decoder_forward.6
$region0: #{decoder_forward.6}
  #allocation0 [shape = 'u32[]', space=smem, size = 0x4, offset = 0x4, fixed_abs, tag = 'smem constant byte address 0x4 - core index']
  #allocation1 [shape = 'u32[144,128]{1,0:T(1,128)}', space=vmem, size = 0x12000, scoped, tag = 'internal scratch']
  %s0 = inlined_call_operand.vmem [shape: bf16[2,288,256], index: 0, kind: input, shape index: {}]
  %s1 = inlined_call_operand.vmem [shape: bf16[8,288], index: 1, kind: input, shape index: {}]
  %s2 = inlined_call_operand.vmem [shape: bf16[32,8], index: 2, kind: input, shape index: {}]
  %s3 = inlined_call_operand.vmem [shape: f32[2,32,256], index: 3, kind: input, shape index: {}]
  %s4 = inlined_call_operand.vmem [shape: f32[2,32,256], index: 4, kind: output, shape index: {}]
  %s5 = sld [smem:[#allocation0]]
  $region49: #{decoder_forward.6} parent=0
    _
  %s7 = ssub.s32 1, %s5
  %s8 = scalar_select 0, %s7, %s5
  loop: start=0, step=1, limit=4
  $region2: #{decoder_forward.6} parent=0 // loop_pre_header
    _
  $region3: #{decoder_forward.6} parent=0 // loop_header
    %s10 = sphi 0, %s14
    %p11 = scmp.ge.s32.totalorder %s10, 4
    %s17 = sphi 0, %s29
    %s18 = sphi 0, %s25
    %s19 = sphi 0, %s17
    %s20 = sphi 0, %s18
    %s21 = sphi 0, %s19
    %s22 = sphi 0, %s20
    %s34 = sphi 0, %s36
    %s37 = sphi 0, %s34
    %s38 = sphi 0, %s37
    %s54 = sphi 0, %s38
    %s58 = sphi 0, %s58
    %s60 = sphi 0, %s58
    %s61 = sphi 0, %s60
    %s75 = sphi 0, %s61
    %s79 = sphi 0, %s79
    %s81 = sphi 0, %s79
    %s82 = sphi 0, %s81
    %s96 = sphi 0, %s82
    %s104 = sphi 0, %s106
    %s107 = sphi 0, %s104
    %s108 = sphi 0, %s107
    %s124 = sphi 0, %s108
    %s132 = sphi 0, %s134
    %s135 = sphi 0, %s132
    %s136 = sphi 0, %s135
    %s152 = sphi 0, %s136
  $region4: #{decoder_forward.6} parent=0 // loop_header_branch
    %13 = sbr.rel (%p11) target = $region8
  $region5: #{decoder_forward.6} parent=0 // loop_body
    %s15 = ssub.s32 %s10, 1
    %s16 = ssub.s32 %s10, 2
    %s23 = sadd.s32 1, %s18
    %p24 = scmp.ge.s32.totalorder %s23, 1
    %s25 = scalar_select %p24, 0, %s23
    %s26 = sadd.s32 1, %s17
    %s27 = scalar_select %p24, %s26, %s17
    %p28 = scmp.ge.s32.totalorder %s27, 2
    %s29 = scalar_select %p28, 0, %s27
    %s30 = ssub.s32 %s17, %s29
    %s31 = ssub.s32 %s18, %s25
    %s32 = sor.u32 %s30, %s31
    %p33 = scmp.eq.s32.totalorder %s32, 0
    %s35 = sadd.s32 %s34, 1
    %s36 = scalar_select %p33, %s34, %s35
    %p39 = pneg %p33
    %p40 = scmp.eq.s32.totalorder %s10, 1
    %p41 = por %p39, %p40
    %p42 = scmp.ne.s32.totalorder %s34, %s37
    %p43 = scmp.eq.s32.totalorder %s10, 0
    %p44 = por %p42, %p43
    %p45 = scmp.ne.s32.totalorder %s34, %s37
    %p46 = scmp.eq.s32.totalorder %s15, 1
    %p47 = por %p45, %p46
    %p48 = scmp.ne.s32.totalorder %s37, %s38
    %p49 = scmp.eq.s32.totalorder %s15, 0
    %p50 = por %p48, %p49
    %p51 = scmp.ne.s32.totalorder %s37, %s38
    %p52 = scmp.eq.s32.totalorder %s16, 1
    %p53 = por %p51, %p52
    %p55 = scmp.ne.s32.totalorder %s38, %s54
    %p56 = scmp.eq.s32.totalorder %s16, 0
    %p57 = por %p55, %p56
    %s59 = sadd.s32 %s58, 1
    %p62 = scmp.eq.s32.totalorder %s10, 1
    %p63 = scmp.ne.s32.totalorder %s58, %s60
    %p64 = scmp.eq.s32.totalorder %s10, 0
    %p65 = por %p63, %p64
    %p66 = scmp.ne.s32.totalorder %s58, %s60
    %p67 = scmp.eq.s32.totalorder %s15, 1
    %p68 = por %p66, %p67
    %p69 = scmp.ne.s32.totalorder %s60, %s61
    %p70 = scmp.eq.s32.totalorder %s15, 0
    %p71 = por %p69, %p70
    %p72 = scmp.ne.s32.totalorder %s60, %s61
    %p73 = scmp.eq.s32.totalorder %s16, 1
    %p74 = por %p72, %p73
    %p76 = scmp.ne.s32.totalorder %s61, %s75
    %p77 = scmp.eq.s32.totalorder %s16, 0
    %p78 = por %p76, %p77
    %s80 = sadd.s32 %s79, 1
    %p83 = scmp.eq.s32.totalorder %s10, 1
    %p84 = scmp.ne.s32.totalorder %s79, %s81
    %p85 = scmp.eq.s32.totalorder %s10, 0
    %p86 = por %p84, %p85
    %p87 = scmp.ne.s32.totalorder %s79, %s81
    %p88 = scmp.eq.s32.totalorder %s15, 1
    %p89 = por %p87, %p88
    %p90 = scmp.ne.s32.totalorder %s81, %s82
    %p91 = scmp.eq.s32.totalorder %s15, 0
    %p92 = por %p90, %p91
    %p93 = scmp.ne.s32.totalorder %s81, %s82
    %p94 = scmp.eq.s32.totalorder %s16, 1
    %p95 = por %p93, %p94
    %p97 = scmp.ne.s32.totalorder %s82, %s96
    %p98 = scmp.eq.s32.totalorder %s16, 0
    %p99 = por %p97, %p98
    %s100 = ssub.s32 %s17, %s29
    %s101 = ssub.s32 %s18, %s25
    %s102 = sor.u32 %s100, %s101
    %p103 = scmp.eq.s32.totalorder %s102, 0
    %s105 = sadd.s32 %s104, 1
    %s106 = scalar_select %p103, %s104, %s105
    %p109 = pneg %p103
    %p110 = scmp.eq.s32.totalorder %s10, 1
    %p111 = por %p109, %p110
    %p112 = scmp.ne.s32.totalorder %s104, %s107
    %p113 = scmp.eq.s32.totalorder %s10, 0
    %p114 = por %p112, %p113
    %p115 = scmp.ne.s32.totalorder %s104, %s107
    %p116 = scmp.eq.s32.totalorder %s15, 1
    %p117 = por %p115, %p116
    %p118 = scmp.ne.s32.totalorder %s107, %s108
    %p119 = scmp.eq.s32.totalorder %s15, 0
    %p120 = por %p118, %p119
    %p121 = scmp.ne.s32.totalorder %s107, %s108
    %p122 = scmp.eq.s32.totalorder %s16, 1
    %p123 = por %p121, %p122
    %p125 = scmp.ne.s32.totalorder %s108, %s124
    %p126 = scmp.eq.s32.totalorder %s16, 0
    %p127 = por %p125, %p126
    %s128 = ssub.s32 %s17, %s29
    %s129 = ssub.s32 %s18, %s25
    %s130 = sor.u32 %s128, %s129
    %p131 = scmp.eq.s32.totalorder %s130, 0
    %s133 = sadd.s32 %s132, 1
    %s134 = scalar_select %p131, %s132, %s133
    %p137 = pneg %p131
    %p138 = scmp.eq.s32.totalorder %s10, 1
    %p139 = por %p137, %p138
    %p140 = scmp.ne.s32.totalorder %s132, %s135
    %p141 = scmp.eq.s32.totalorder %s10, 0
    %p142 = por %p140, %p141
    %p143 = scmp.ne.s32.totalorder %s132, %s135
    %p144 = scmp.eq.s32.totalorder %s15, 1
    %p145 = por %p143, %p144
    %p146 = scmp.ne.s32.totalorder %s135, %s136
    %p147 = scmp.eq.s32.totalorder %s15, 0
    %p148 = por %p146, %p147
    %p149 = scmp.ne.s32.totalorder %s135, %s136
    %p150 = scmp.eq.s32.totalorder %s16, 1
    %p151 = por %p149, %p150
    %p153 = scmp.ne.s32.totalorder %s136, %s152
    %p154 = scmp.eq.s32.totalorder %s16, 0
    %p155 = por %p153, %p154
    %p156 = scmp.le.s32.totalorder 1, %s10
    %p157 = scmp.lt.s32.totalorder %s10, 3
    %p158 = pnand %p156, %p157
    %p159 = pneg %p158
    // Predicated region
    $region9: #{decoder_forward.6} parent=5 // pred_check
      _
    $region10: #{decoder_forward.6} parent=5 // pred_check_branch
      %161 = sbr.rel (%p158) target = $region12
    $region11: #{decoder_forward.6} parent=5 // pred_region
      %s162 = ssub.s32 %s10, 1
      // Predicated region
      $region13: #{decoder_forward.6} parent=11 // pred_check
        %p163 = pneg %p71
      $region14: #{decoder_forward.6} parent=11 // pred_check_branch
        %165 = sbr.rel (%p163) target = $region16
      $region15: #{decoder_forward.6} parent=11 // pred_region
        _
      $region16: #{decoder_forward.6} parent=11 // pred_fallthru
        _
      // Predicated region
      $region17: #{decoder_forward.6} parent=11 // pred_check
        %p166 = pneg %p92
      $region18: #{decoder_forward.6} parent=11 // pred_check_branch
        %168 = sbr.rel (%p166) target = $region20
      $region19: #{decoder_forward.6} parent=11 // pred_region
        _
      $region20: #{decoder_forward.6} parent=11 // pred_fallthru
        _
    $region12: #{decoder_forward.6} parent=5 // pred_fallthru
      _
    %p169 = scmp.lt.s32.totalorder %s10, 2
    // Predicated region
    $region21: #{decoder_forward.6} parent=5 // pred_check
      %p170 = pneg %p169
    $region22: #{decoder_forward.6} parent=5 // pred_check_branch
      %172 = sbr.rel (%p170) target = $region24
    $region23: #{decoder_forward.6} parent=5 // pred_region
      // Predicated region
      $region25: #{decoder_forward.6} parent=23 // pred_check
        %p173 = pneg %p44
      $region26: #{decoder_forward.6} parent=23 // pred_check_branch
        %175 = sbr.rel (%p173) target = $region28
      $region27: #{decoder_forward.6} parent=23 // pred_region
        %s176 = smul.u32 2, %s18
        %p177 = scmp.lt.s32.totalorder %s17, 1
        %s178 = scalar_select %p177, %s17, 1
        %p179 = scmp.lt.s32.totalorder %s176, 1
        %s180 = scalar_select %p179, %s176, 1
        %s181 = smul.addr %s178, 72
        %s182 = sadd.s32 %s180, %s181
        %s183 = smul.addr %s182, 4
        %s184 = scalar_lea.vmem %s0, %s183
        %s185 = smul.u32 2, %s18
      $region28: #{decoder_forward.6} parent=23 // pred_fallthru
        _
      // Predicated region
      $region29: #{decoder_forward.6} parent=23 // pred_check
        %p186 = pneg %p114
      $region30: #{decoder_forward.6} parent=23 // pred_check_branch
        %188 = sbr.rel (%p186) target = $region32
      $region31: #{decoder_forward.6} parent=23 // pred_region
        %s189 = smul.u32 2, %s18
        %p190 = scmp.lt.s32.totalorder %s17, 1
        %s191 = scalar_select %p190, %s17, 1
        %p192 = scmp.lt.s32.totalorder %s189, 1
        %s193 = scalar_select %p192, %s189, 1
        %s194 = smul.addr %s191, 8
        %s195 = sadd.s32 %s193, %s194
        %s196 = smul.addr %s195, 8
        %s197 = scalar_lea.vmem %s3, %s196
        %s198 = smul.u32 2, %s18
      $region32: #{decoder_forward.6} parent=23 // pred_fallthru
        _
    $region24: #{decoder_forward.6} parent=5 // pred_fallthru
      _
    %p199 = scmp.le.s32.totalorder 1, %s10
    %p200 = scmp.lt.s32.totalorder %s10, 3
    %p201 = pnand %p199, %p200
    %p202 = pneg %p201
    // Predicated region
    $region33: #{decoder_forward.6} parent=5 // pred_check
      _
    $region34: #{decoder_forward.6} parent=5 // pred_check_branch
      %204 = sbr.rel (%p201) target = $region36
    $region35: #{decoder_forward.6} parent=5 // pred_region
      %s205 = ssub.s32 %s10, 1
      %s206 = smul.u32 2, %s20
      %p207 = scmp.lt.s32.totalorder %s19, 1
      %s208 = scalar_select %p207, %s19, 1
      %p209 = scmp.lt.s32.totalorder %s206, 1
      %s210 = scalar_select %p209, %s206, 1
      %s211 = smul.addr %s208, 72
      %s212 = sadd.s32 %s210, %s211
      %s213 = smul.addr %s212, 4
      %s214 = scalar_lea.vmem %s0, %s213
      %p215 = pneg %p50
      %p216 = pneg %p47
      %p217 = pneg %p71
      %p218 = pneg %p68
      %p219 = pneg %p92
      %p220 = pneg %p89
      %s221 = smul.u32 2, %s20
      %p222 = scmp.lt.s32.totalorder %s19, 1
      %s223 = scalar_select %p222, %s19, 1
      %p224 = scmp.lt.s32.totalorder %s221, 1
      %s225 = scalar_select %p224, %s221, 1
      %s226 = smul.addr %s223, 8
      %s227 = sadd.s32 %s225, %s226
      %s228 = smul.addr %s227, 8
      %s229 = scalar_lea.vmem %s3, %s228
      %p230 = pneg %p120
      %p231 = pneg %p117
      %p232 = pneg %p148
      %p233 = pneg %p145
      %s234 = smul.u32 2, %s20
      %p235 = scmp.lt.s32.totalorder %s19, 1
      %s236 = scalar_select %p235, %s19, 1
      %p237 = scmp.lt.s32.totalorder %s234, 1
      %s238 = scalar_select %p237, %s234, 1
      %s239 = smul.addr %s236, 8
      %s240 = sadd.s32 %s238, %s239
      %s241 = smul.addr %s240, 8
      %s242 = scalar_lea.vmem %s4, %s241
      %s243 = smul.u32 2, %s20
      %p244 = scmp.lt.s32.totalorder %s19, 1
      %s245 = scalar_select %p244, %s19, 1
      %p246 = scmp.lt.s32.totalorder %s243, 1
      %s247 = scalar_select %p246, %s243, 1
      %s248 = smul.addr %s245, 72
      %s249 = sadd.s32 %s247, %s248
      %s250 = smul.addr %s249, 4
      %s251 = scalar_lea.vmem %s0, %s250
      %s252 = smul.u32 2, %s20
      %s253 = smul.u32 2, %s20
      %p254 = scmp.lt.s32.totalorder %s19, 1
      %s255 = scalar_select %p254, %s19, 1
      %p256 = scmp.lt.s32.totalorder %s253, 1
      %s257 = scalar_select %p256, %s253, 1
      %s258 = smul.addr %s255, 8
      %s259 = sadd.s32 %s257, %s258
      %s260 = smul.addr %s259, 8
      %s261 = scalar_lea.vmem %s3, %s260
      %s262 = smul.u32 2, %s20
      %s263 = smul.u32 2, %s20
      %p264 = scmp.lt.s32.totalorder %s19, 1
      %s265 = scalar_select %p264, %s19, 1
      %p266 = scmp.lt.s32.totalorder %s263, 1
      %s267 = scalar_select %p266, %s263, 1
      %s268 = smul.addr %s265, 8
      %s269 = sadd.s32 %s267, %s268
      %s270 = smul.addr %s269, 8
      %s271 = scalar_lea.vmem %s4, %s270
      %s272 = smul.u32 2, %s20
      %v274 = vld [vmem:[%s1] sm:$0xff]
      %v275 = vld [vmem:[%s1 + $0x8] sm:$0xf]
      %v276 = vld [vmem:[%s251] sm:$0xff]
      %v277 = vld [vmem:[%s251 + $0x8] sm:$0xff]
      %v278 = vld [vmem:[%s251 + $0x10] sm:$0xff]
      %v279 = vld [vmem:[%s251 + $0x18] sm:$0xff]
      %v280 = vld [vmem:[%s251 + $0x20] sm:$0xff]
      %v281 = vld [vmem:[%s251 + $0x28] sm:$0xff]
      %v282 = vld [vmem:[%s251 + $0x30] sm:$0xff]
      %v283 = vld [vmem:[%s251 + $0x38] sm:$0xff]
      %v284 = vld [vmem:[%s251 + $0x40] sm:$0xff]
      %v285 = vld [vmem:[%s251 + $0x48] sm:$0xff]
      %v286 = vld [vmem:[%s251 + $0x50] sm:$0xff]
      %v287 = vld [vmem:[%s251 + $0x58] sm:$0xff]
      %v288 = vld [vmem:[%s251 + $0x60] sm:$0xff]
      %v289 = vld [vmem:[%s251 + $0x68] sm:$0xff]
      %v290 = vld [vmem:[%s251 + $0x70] sm:$0xff]
      %v291 = vld [vmem:[%s251 + $0x78] sm:$0xff]
      %v292 = vld [vmem:[%s251 + $0x80] sm:$0xff]
      %v293 = vld [vmem:[%s251 + $0x88] sm:$0xff]
      %v294 = vld [vmem:[%s251 + $0x90] sm:$0xff]
      %v295 = vld [vmem:[%s251 + $0x98] sm:$0xff]
      %v296 = vld [vmem:[%s251 + $0xa0] sm:$0xff]
      %v297 = vld [vmem:[%s251 + $0xa8] sm:$0xff]
      %v298 = vld [vmem:[%s251 + $0xb0] sm:$0xff]
      %v299 = vld [vmem:[%s251 + $0xb8] sm:$0xff]
      %v300 = vld [vmem:[%s251 + $0xc0] sm:$0xff]
      %v301 = vld [vmem:[%s251 + $0xc8] sm:$0xff]
      %v302 = vld [vmem:[%s251 + $0xd0] sm:$0xff]
      %v303 = vld [vmem:[%s251 + $0xd8] sm:$0xff]
      %v304 = vld [vmem:[%s251 + $0xe0] sm:$0xff]
      %v305 = vld [vmem:[%s251 + $0xe8] sm:$0xff]
      %v306 = vld [vmem:[%s251 + $0xf0] sm:$0xff]
      %v307 = vld [vmem:[%s251 + $0xf8] sm:$0xff]
      %v308 = vld [vmem:[%s251 + $0x100] sm:$0xff]
      %v309 = vld [vmem:[%s251 + $0x108] sm:$0xff]
      %v310 = vld [vmem:[%s251 + $0x110] sm:$0xff]
      %v311 = vld [vmem:[%s251 + $0x118] sm:$0xff]
      %v314 = vunpack.c.l.b16 %v274
      %v315 = vunpack.c.h.b16 %v274
      %v316 = vunpack.c.l.b16 %v275
      %v317 = vpack.c.b16 %v314, %v314
      %v318 = vpack.c.b16 %v315, %v315
      %v319 = vpack.c.b16 %v316, %v316
      %v358 = vunpack.c.l.b16 %v276
      %v359 = vunpack.c.h.b16 %v276
      %v360 = vunpack.c.l.b16 %v277
      %v361 = vunpack.c.h.b16 %v277
      %v362 = vunpack.c.l.b16 %v278
      %v363 = vunpack.c.h.b16 %v278
      %v364 = vunpack.c.l.b16 %v279
      %v365 = vunpack.c.h.b16 %v279
      %v366 = vunpack.c.l.b16 %v280
      %v367 = vunpack.c.h.b16 %v280
      %v368 = vunpack.c.l.b16 %v281
      %v369 = vunpack.c.h.b16 %v281
      %v370 = vunpack.c.l.b16 %v282
      %v371 = vunpack.c.h.b16 %v282
      %v372 = vunpack.c.l.b16 %v283
      %v373 = vunpack.c.h.b16 %v283
      %v374 = vunpack.c.l.b16 %v284
      %v375 = vunpack.c.h.b16 %v284
      %v376 = vunpack.c.l.b16 %v285
      %v377 = vunpack.c.h.b16 %v285
      %v378 = vunpack.c.l.b16 %v286
      %v379 = vunpack.c.h.b16 %v286
      %v380 = vunpack.c.l.b16 %v287
      %v381 = vunpack.c.h.b16 %v287
      %v382 = vunpack.c.l.b16 %v288
      %v383 = vunpack.c.h.b16 %v288
      %v384 = vunpack.c.l.b16 %v289
      %v385 = vunpack.c.h.b16 %v289
      %v386 = vunpack.c.l.b16 %v290
      %v387 = vunpack.c.h.b16 %v290
      %v388 = vunpack.c.l.b16 %v291
      %v389 = vunpack.c.h.b16 %v291
      %v390 = vunpack.c.l.b16 %v292
      %v391 = vunpack.c.h.b16 %v292
      %v392 = vunpack.c.l.b16 %v293
      %v393 = vunpack.c.h.b16 %v293
      %v394 = vunpack.c.l.b16 %v294
      %v395 = vunpack.c.h.b16 %v294
      %v396 = vunpack.c.l.b16 %v295
      %v397 = vunpack.c.h.b16 %v295
      %v398 = vunpack.c.l.b16 %v296
      %v399 = vunpack.c.h.b16 %v296
      %v400 = vunpack.c.l.b16 %v297
      %v401 = vunpack.c.h.b16 %v297
      %v402 = vunpack.c.l.b16 %v298
      %v403 = vunpack.c.h.b16 %v298
      %v404 = vunpack.c.l.b16 %v299
      %v405 = vunpack.c.h.b16 %v299
      %v406 = vunpack.c.l.b16 %v300
      %v407 = vunpack.c.h.b16 %v300
      %v408 = vunpack.c.l.b16 %v301
      %v409 = vunpack.c.h.b16 %v301
      %v410 = vunpack.c.l.b16 %v302
      %v411 = vunpack.c.h.b16 %v302
      %v412 = vunpack.c.l.b16 %v303
      %v413 = vunpack.c.h.b16 %v303
      %v414 = vunpack.c.l.b16 %v304
      %v415 = vunpack.c.h.b16 %v304
      %v416 = vunpack.c.l.b16 %v305
      %v417 = vunpack.c.h.b16 %v305
      %v418 = vunpack.c.l.b16 %v306
      %v419 = vunpack.c.h.b16 %v306
      %v420 = vunpack.c.l.b16 %v307
      %v421 = vunpack.c.h.b16 %v307
      %v422 = vunpack.c.l.b16 %v308
      %v423 = vunpack.c.h.b16 %v308
      %v424 = vunpack.c.l.b16 %v309
      %v425 = vunpack.c.h.b16 %v309
      %v426 = vunpack.c.l.b16 %v310
      %v427 = vunpack.c.h.b16 %v310
      %v428 = vunpack.c.l.b16 %v311
      %v429 = vunpack.c.h.b16 %v311
      %v430 = vpack.c.b16 %v360, %v358
      %v431 = vpack.c.b16 %v361, %v359
      %v432 = vpack.c.b16 %v364, %v362
      %v433 = vpack.c.b16 %v365, %v363
      %v434 = vpack.c.b16 %v368, %v366
      %v435 = vpack.c.b16 %v369, %v367
      %v436 = vpack.c.b16 %v372, %v370
      %v437 = vpack.c.b16 %v373, %v371
      %v438 = vpack.c.b16 %v376, %v374
      %v439 = vpack.c.b16 %v377, %v375
      %v440 = vpack.c.b16 %v380, %v378
      %v441 = vpack.c.b16 %v381, %v379
      %v442 = vpack.c.b16 %v384, %v382
      %v443 = vpack.c.b16 %v385, %v383
      %v444 = vpack.c.b16 %v388, %v386
      %v445 = vpack.c.b16 %v389, %v387
      %v446 = vpack.c.b16 %v392, %v390
      %v447 = vpack.c.b16 %v393, %v391
      %v448 = vpack.c.b16 %v396, %v394
      %v449 = vpack.c.b16 %v397, %v395
      %v450 = vpack.c.b16 %v400, %v398
      %v451 = vpack.c.b16 %v401, %v399
      %v452 = vpack.c.b16 %v404, %v402
      %v453 = vpack.c.b16 %v405, %v403
      %v454 = vpack.c.b16 %v408, %v406
      %v455 = vpack.c.b16 %v409, %v407
      %v456 = vpack.c.b16 %v412, %v410
      %v457 = vpack.c.b16 %v413, %v411
      %v458 = vpack.c.b16 %v416, %v414
      %v459 = vpack.c.b16 %v417, %v415
      %v460 = vpack.c.b16 %v420, %v418
      %v461 = vpack.c.b16 %v421, %v419
      %v462 = vpack.c.b16 %v424, %v422
      %v463 = vpack.c.b16 %v425, %v423
      %v464 = vpack.c.b16 %v428, %v426
      %v465 = vpack.c.b16 %v429, %v427
      %vm502 = vcmask 261120
      %v504 = vsel %vm502, %v319, 0
      %506 = vmatprep.subr.bf16.mxu0 %v431
      %507 = vmatpush1.bf16.msra.mxu0 %v430
      %508 = vmatprep.subr.bf16.mxu0 %v433
      %509 = vmatpush1.bf16.msra.mxu0 %v432
      %510 = vmatprep.subr.bf16.mxu0 %v435
      %511 = vmatpush1.bf16.msra.mxu0 %v434
      %512 = vmatprep.subr.bf16.mxu0 %v437
      %513 = vmatpush1.bf16.msra.mxu0 %v436
      %514 = vmatprep.subr.bf16.mxu0 %v439
      %515 = vmatpush1.bf16.msra.mxu0 %v438
      %516 = vmatprep.subr.bf16.mxu0 %v441
      %517 = vmatpush1.bf16.msra.mxu0 %v440
      %518 = vmatprep.subr.bf16.mxu0 %v443
      %519 = vmatpush1.bf16.msra.mxu0 %v442
      %520 = vmatprep.subr.bf16.mxu0 %v445
      %521 = vmatpush1.bf16.msra.mxu0 %v444
      %522 = vmatprep.subr.bf16.mxu0 %v447
      %523 = vmatpush1.bf16.msra.mxu0 %v446
      %524 = vmatprep.subr.bf16.mxu0 %v449
      %525 = vmatpush1.bf16.msra.mxu0 %v448
      %526 = vmatprep.subr.bf16.mxu0 %v451
      %527 = vmatpush1.bf16.msra.mxu0 %v450
      %528 = vmatprep.subr.bf16.mxu0 %v453
      %529 = vmatpush1.bf16.msra.mxu0 %v452
      %530 = vmatprep.subr.bf16.mxu0 %v455
      %531 = vmatpush1.bf16.msra.mxu0 %v454
      %532 = vmatprep.subr.bf16.mxu0 %v457
      %533 = vmatpush1.bf16.msra.mxu0 %v456
      %534 = vmatprep.subr.bf16.mxu0 %v459
      %535 = vmatpush1.bf16.msra.mxu0 %v458
      %536 = vmatprep.subr.bf16.mxu0 %v461
      %537 = vmatpush1.bf16.msra.mxu0 %v460
      %538 = vmatprep.mubr.bf16.mxu0 %v318
      %539 = vmatmul.mubr.bf16.gmra.mrb[0].mxu0 %v317
      %v540 = vpop.f32.mrb[0].mxu0
      %v541 = vadd.f32 0.0, %v540
      %v542 = vpop.f32.mrb[0].mxu0
      %v543 = vadd.f32 0.0, %v542
      %v544 = vpop.f32.mrb[0].mxu0
      %v545 = vpop.f32.mrb[0].mxu0
      %546 = vdwg.mxu0
      %547 = vmatprep.subr.bf16.mxu0 %v463
      %548 = vmatpush1.bf16.msra.mxu0 %v462
      %549 = vmatprep.subr.bf16.mxu0 %v465
      %550 = vmatpush1.bf16.msra.mxu0 %v464
      %551 = vmatprep.subr.bf16.mxu0 0
      %552 = vmatpush1.bf16.msra.mxu0 0
      %553 = vmatprep.subr.bf16.mxu0 0
      %554 = vmatpush1.bf16.msra.mxu0 0
      %555 = vmatprep.subr.bf16.mxu0 0
      %556 = vmatpush1.bf16.msra.mxu0 0
      %557 = vmatprep.subr.bf16.mxu0 0
      %558 = vmatpush1.bf16.msra.mxu0 0
      %559 = vmatprep.subr.bf16.mxu0 0
      %560 = vmatpush1.bf16.msra.mxu0 0
      %561 = vmatprep.subr.bf16.mxu0 0
      %562 = vmatpush1.bf16.msra.mxu0 0
      %563 = vmatprep.subr.bf16.mxu0 0
      %564 = vmatpush1.bf16.msra.mxu0 0
      %565 = vmatprep.subr.bf16.mxu0 0
      %566 = vmatpush1.bf16.msra.mxu0 0
      %567 = vmatprep.subr.bf16.mxu0 0
      %568 = vmatpush1.bf16.msra.mxu0 0
      %569 = vmatprep.subr.bf16.mxu0 0
      %570 = vmatpush1.bf16.msra.mxu0 0
      %571 = vmatprep.subr.bf16.mxu0 0
      %572 = vmatpush1.bf16.msra.mxu0 0
      %573 = vmatprep.subr.bf16.mxu0 0
      %574 = vmatpush1.bf16.msra.mxu0 0
      %575 = vmatprep.subr.bf16.mxu0 0
      %576 = vmatpush1.bf16.msra.mxu0 0
      %577 = vmatprep.subr.bf16.mxu0 0
      %578 = vmatpush1.bf16.msra.mxu0 0
      %579 = vmatprep.mubr.bf16.mxu0 0
      %580 = vmatmul.mubr.bf16.gmra.mrb[0].mxu0 %v504
      %v581 = vpop.f32.mrb[0].mxu0
      %v582 = vadd.f32 %v541, %v581
      %v583 = vpop.f32.mrb[0].mxu0
      %v584 = vadd.f32 %v543, %v583
      %v585 = vpop.f32.mrb[0].mxu0
      %v586 = vpop.f32.mrb[0].mxu0
      %587 = vdwg.mxu0
      %v588 = vmax.f32 %v582, 0.0
      %v589 = vmax.f32 %v584, 0.0
      %v590 = vpack.c.bf16 %v588, %v588
      %v591 = vpack.c.bf16 %v589, %v589
      %v592 = vld [vmem:[%s2] sm:$0xf]
      %v593 = vld [vmem:[%s2 + $0x4] sm:$0xf]
      %v594 = vld [vmem:[%s2 + $0x8] sm:$0xf]
      %v595 = vld [vmem:[%s2 + $0xc] sm:$0xf]
      %v600 = vunpack.c.l.b16 %v592
      %v601 = vunpack.c.l.b16 %v593
      %v602 = vunpack.c.l.b16 %v594
      %v603 = vunpack.c.l.b16 %v595
      %v604 = vpack.c.b16 %v601, %v600
      %v605 = vpack.c.b16 %v603, %v602
      %vm606 = vcmask 64512
      %v608 = vsel %vm606, %v604, 0
      %v611 = vsel %vm606, %v605, 0
      %vm613 = vcmask 1043456
      %v615 = vsel %vm613, %v590, 0
      %v618 = vsel %vm613, %v591, 0
      %620 = vmatprep.subr.bf16.mxu0 %v618
      %621 = vmatpush1.bf16.msra.mxu0 %v615
      %622 = vmatprep.subr.bf16.mxu0 0
      %623 = vmatpush1.bf16.msra.mxu0 0
      %624 = vmatprep.subr.bf16.mxu0 0
      %625 = vmatpush1.bf16.msra.mxu0 0
      %626 = vmatprep.subr.bf16.mxu0 0
      %627 = vmatpush1.bf16.msra.mxu0 0
      %628 = vmatprep.subr.bf16.mxu0 0
      %629 = vmatpush1.bf16.msra.mxu0 0
      %630 = vmatprep.subr.bf16.mxu0 0
      %631 = vmatpush1.bf16.msra.mxu0 0
      %632 = vmatprep.subr.bf16.mxu0 0
      %633 = vmatpush1.bf16.msra.mxu0 0
      %634 = vmatprep.subr.bf16.mxu0 0
      %635 = vmatpush1.bf16.msra.mxu0 0
      %636 = vmatprep.subr.bf16.mxu0 0
      %637 = vmatpush1.bf16.msra.mxu0 0
      %638 = vmatprep.subr.bf16.mxu0 0
      %639 = vmatpush1.bf16.msra.mxu0 0
      %640 = vmatprep.subr.bf16.mxu0 0
      %641 = vmatpush1.bf16.msra.mxu0 0
      %642 = vmatprep.subr.bf16.mxu0 0
      %643 = vmatpush1.bf16.msra.mxu0 0
      %644 = vmatprep.subr.bf16.mxu0 0
      %645 = vmatpush1.bf16.msra.mxu0 0
      %646 = vmatprep.subr.bf16.mxu0 0
      %647 = vmatpush1.bf16.msra.mxu0 0
      %648 = vmatprep.subr.bf16.mxu0 0
      %649 = vmatpush1.bf16.msra.mxu0 0
      %650 = vmatprep.subr.bf16.mxu0 0
      %651 = vmatpush1.bf16.msra.mxu0 0
      %652 = vmatprep.mubr.bf16.mxu0 0
      %653 = vmatmul.mubr.bf16.gmra.mrb[0].mxu0 %v608
      %v654 = vpop.f32.mrb[0].mxu0
      %v655 = vadd.f32 0.0, %v654
      %v656 = vpop.f32.mrb[0].mxu0
      %v657 = vadd.f32 0.0, %v656
      %v658 = vpop.f32.mrb[0].mxu0
      %v659 = vadd.f32 0.0, %v658
      %v660 = vpop.f32.mrb[0].mxu0
      %v661 = vadd.f32 0.0, %v660
      %662 = vmatprep.mubr.bf16.mxu0 0
      %663 = vmatmul.mubr.bf16.gmra.mrb[0].mxu0 %v611
      %v664 = vpop.f32.mrb[0].mxu0
      %v665 = vadd.f32 0.0, %v664
      %v666 = vpop.f32.mrb[0].mxu0
      %v667 = vadd.f32 0.0, %v666
      %v668 = vpop.f32.mrb[0].mxu0
      %v669 = vadd.f32 0.0, %v668
      %v670 = vpop.f32.mrb[0].mxu0
      %v671 = vadd.f32 0.0, %v670
      %672 = vdwg.mxu0
      %v673 = vld [vmem:[%s261] sm:$0xff]
      %v674 = vld [vmem:[%s261 + $0x8] sm:$0xff]
      %v675 = vld [vmem:[%s261 + $0x10] sm:$0xff]
      %v676 = vld [vmem:[%s261 + $0x18] sm:$0xff]
      %v677 = vld [vmem:[%s261 + $0x20] sm:$0xff]
      %v678 = vld [vmem:[%s261 + $0x28] sm:$0xff]
      %v679 = vld [vmem:[%s261 + $0x30] sm:$0xff]
      %v680 = vld [vmem:[%s261 + $0x38] sm:$0xff]
      %v681 = vadd.f32 %v673, %v655
      %v682 = vadd.f32 %v674, %v657
      %v683 = vadd.f32 %v675, %v659
      %v684 = vadd.f32 %v676, %v661
      %v685 = vadd.f32 %v677, %v665
      %v686 = vadd.f32 %v678, %v667
      %v687 = vadd.f32 %v679, %v669
      %v688 = vadd.f32 %v680, %v671
      %v689 = vmax.f32 %v681, 0.0
      %v690 = vmax.f32 %v682, 0.0
      %v691 = vmax.f32 %v683, 0.0
      %v692 = vmax.f32 %v684, 0.0
      %v693 = vmax.f32 %v685, 0.0
      %v694 = vmax.f32 %v686, 0.0
      %v695 = vmax.f32 %v687, 0.0
      %v696 = vmax.f32 %v688, 0.0
      %697 = vst [vmem:[%s271] sm:$0xff] %v689
      %698 = vst [vmem:[%s271 + $0x8] sm:$0xff] %v690
      %699 = vst [vmem:[%s271 + $0x10] sm:$0xff] %v691
      %700 = vst [vmem:[%s271 + $0x18] sm:$0xff] %v692
      %701 = vst [vmem:[%s271 + $0x20] sm:$0xff] %v693
      %702 = vst [vmem:[%s271 + $0x28] sm:$0xff] %v694
      %703 = vst [vmem:[%s271 + $0x30] sm:$0xff] %v695
      %704 = vst [vmem:[%s271 + $0x38] sm:$0xff] %v696
      %s705 = smul.u32 2, %s20
      %p706 = scmp.lt.s32.totalorder %s19, 1
      %s707 = scalar_select %p706, %s19, 1
      %p708 = scmp.lt.s32.totalorder %s705, 1
      %s709 = scalar_select %p708, %s705, 1
      %s710 = smul.addr %s707, 8
      %s711 = sadd.s32 %s709, %s710
      %s712 = smul.addr %s711, 8
      %s713 = scalar_lea.vmem %s4, %s712
      // Predicated region
      $region37: #{decoder_forward.6} parent=35 // pred_check
        %p714 = pneg %p145
      $region38: #{decoder_forward.6} parent=35 // pred_check_branch
        %716 = sbr.rel (%p714) target = $region40
      $region39: #{decoder_forward.6} parent=35 // pred_region
        %s717 = smul.u32 2, %s20
      $region40: #{decoder_forward.6} parent=35 // pred_fallthru
        _
    $region36: #{decoder_forward.6} parent=5 // pred_fallthru
      _
    %p718 = scmp.le.s32.totalorder 2, %s10
    // Predicated region
    $region41: #{decoder_forward.6} parent=5 // pred_check
      %p719 = pneg %p718
    $region42: #{decoder_forward.6} parent=5 // pred_check_branch
      %721 = sbr.rel (%p719) target = $region44
    $region43: #{decoder_forward.6} parent=5 // pred_region
      %s722 = ssub.s32 %s10, 2
      // Predicated region
      $region45: #{decoder_forward.6} parent=43 // pred_check
        %p723 = pneg %p151
      $region46: #{decoder_forward.6} parent=43 // pred_check_branch
        %725 = sbr.rel (%p723) target = $region48
      $region47: #{decoder_forward.6} parent=43 // pred_region
        %s726 = smul.u32 2, %s22
        %p727 = scmp.lt.s32.totalorder %s21, 1
        %s728 = scalar_select %p727, %s21, 1
        %p729 = scmp.lt.s32.totalorder %s726, 1
        %s730 = scalar_select %p729, %s726, 1
        %s731 = smul.addr %s728, 8
        %s732 = sadd.s32 %s730, %s731
        %s733 = smul.addr %s732, 8
        %s734 = scalar_lea.vmem %s4, %s733
      $region48: #{decoder_forward.6} parent=43 // pred_fallthru
        _
    $region44: #{decoder_forward.6} parent=5 // pred_fallthru
      _
  $region6: #{decoder_forward.6} parent=0 // loop_footer
    %s14 = sadd.s32 1, %s10
  $region7: #{decoder_forward.6} parent=0 // loop_footer_branch
    %9 = sbr.rel target = $region3
  $region8: #{decoder_forward.6} parent=0 // loop_exit
    _

// kernel: decoder_forward.7
$region0: #{decoder_forward.7}
  #allocation0 [shape = 'u32[]', space=smem, size = 0x4, offset = 0x4, fixed_abs, tag = 'smem constant byte address 0x4 - core index']
  #allocation1 [shape = 'u32[144,128]{1,0:T(1,128)}', space=vmem, size = 0x12000, scoped, tag = 'internal scratch']
  %s0 = inlined_call_operand.vmem [shape: bf16[2,288,256], index: 0, kind: input, shape index: {}]
  %s1 = inlined_call_operand.vmem [shape: bf16[32,288], index: 1, kind: input, shape index: {}]
  %s2 = inlined_call_operand.vmem [shape: f32[32,1], index: 2, kind: input, shape index: {}]
  %s3 = inlined_call_operand.vmem [shape: f32[2,32,256], index: 3, kind: output, shape index: {}]
  %s4 = sld [smem:[#allocation0]]
  $region45: #{decoder_forward.7} parent=0
    _
  %s6 = ssub.s32 1, %s4
  %s7 = scalar_select 0, %s6, %s4
  loop: start=0, step=1, limit=4
  $region2: #{decoder_forward.7} parent=0 // loop_pre_header
    _
  $region3: #{decoder_forward.7} parent=0 // loop_header
    %s9 = sphi 0, %s13
    %p10 = scmp.ge.s32.totalorder %s9, 4
    %s16 = sphi 0, %s28
    %s17 = sphi 0, %s24
    %s18 = sphi 0, %s16
    %s19 = sphi 0, %s17
    %s20 = sphi 0, %s18
    %s21 = sphi 0, %s19
    %s33 = sphi 0, %s35
    %s36 = sphi 0, %s33
    %s37 = sphi 0, %s36
    %s53 = sphi 0, %s37
    %s57 = sphi 0, %s57
    %s59 = sphi 0, %s57
    %s60 = sphi 0, %s59
    %s74 = sphi 0, %s60
    %s78 = sphi 0, %s78
    %s80 = sphi 0, %s78
    %s81 = sphi 0, %s80
    %s95 = sphi 0, %s81
    %s103 = sphi 0, %s105
    %s106 = sphi 0, %s103
    %s107 = sphi 0, %s106
    %s123 = sphi 0, %s107
  $region4: #{decoder_forward.7} parent=0 // loop_header_branch
    %12 = sbr.rel (%p10) target = $region8
  $region5: #{decoder_forward.7} parent=0 // loop_body
    %s14 = ssub.s32 %s9, 1
    %s15 = ssub.s32 %s9, 2
    %s22 = sadd.s32 1, %s17
    %p23 = scmp.ge.s32.totalorder %s22, 1
    %s24 = scalar_select %p23, 0, %s22
    %s25 = sadd.s32 1, %s16
    %s26 = scalar_select %p23, %s25, %s16
    %p27 = scmp.ge.s32.totalorder %s26, 2
    %s28 = scalar_select %p27, 0, %s26
    %s29 = ssub.s32 %s16, %s28
    %s30 = ssub.s32 %s17, %s24
    %s31 = sor.u32 %s29, %s30
    %p32 = scmp.eq.s32.totalorder %s31, 0
    %s34 = sadd.s32 %s33, 1
    %s35 = scalar_select %p32, %s33, %s34
    %p38 = pneg %p32
    %p39 = scmp.eq.s32.totalorder %s9, 1
    %p40 = por %p38, %p39
    %p41 = scmp.ne.s32.totalorder %s33, %s36
    %p42 = scmp.eq.s32.totalorder %s9, 0
    %p43 = por %p41, %p42
    %p44 = scmp.ne.s32.totalorder %s33, %s36
    %p45 = scmp.eq.s32.totalorder %s14, 1
    %p46 = por %p44, %p45
    %p47 = scmp.ne.s32.totalorder %s36, %s37
    %p48 = scmp.eq.s32.totalorder %s14, 0
    %p49 = por %p47, %p48
    %p50 = scmp.ne.s32.totalorder %s36, %s37
    %p51 = scmp.eq.s32.totalorder %s15, 1
    %p52 = por %p50, %p51
    %p54 = scmp.ne.s32.totalorder %s37, %s53
    %p55 = scmp.eq.s32.totalorder %s15, 0
    %p56 = por %p54, %p55
    %s58 = sadd.s32 %s57, 1
    %p61 = scmp.eq.s32.totalorder %s9, 1
    %p62 = scmp.ne.s32.totalorder %s57, %s59
    %p63 = scmp.eq.s32.totalorder %s9, 0
    %p64 = por %p62, %p63
    %p65 = scmp.ne.s32.totalorder %s57, %s59
    %p66 = scmp.eq.s32.totalorder %s14, 1
    %p67 = por %p65, %p66
    %p68 = scmp.ne.s32.totalorder %s59, %s60
    %p69 = scmp.eq.s32.totalorder %s14, 0
    %p70 = por %p68, %p69
    %p71 = scmp.ne.s32.totalorder %s59, %s60
    %p72 = scmp.eq.s32.totalorder %s15, 1
    %p73 = por %p71, %p72
    %p75 = scmp.ne.s32.totalorder %s60, %s74
    %p76 = scmp.eq.s32.totalorder %s15, 0
    %p77 = por %p75, %p76
    %s79 = sadd.s32 %s78, 1
    %p82 = scmp.eq.s32.totalorder %s9, 1
    %p83 = scmp.ne.s32.totalorder %s78, %s80
    %p84 = scmp.eq.s32.totalorder %s9, 0
    %p85 = por %p83, %p84
    %p86 = scmp.ne.s32.totalorder %s78, %s80
    %p87 = scmp.eq.s32.totalorder %s14, 1
    %p88 = por %p86, %p87
    %p89 = scmp.ne.s32.totalorder %s80, %s81
    %p90 = scmp.eq.s32.totalorder %s14, 0
    %p91 = por %p89, %p90
    %p92 = scmp.ne.s32.totalorder %s80, %s81
    %p93 = scmp.eq.s32.totalorder %s15, 1
    %p94 = por %p92, %p93
    %p96 = scmp.ne.s32.totalorder %s81, %s95
    %p97 = scmp.eq.s32.totalorder %s15, 0
    %p98 = por %p96, %p97
    %s99 = ssub.s32 %s16, %s28
    %s100 = ssub.s32 %s17, %s24
    %s101 = sor.u32 %s99, %s100
    %p102 = scmp.eq.s32.totalorder %s101, 0
    %s104 = sadd.s32 %s103, 1
    %s105 = scalar_select %p102, %s103, %s104
    %p108 = pneg %p102
    %p109 = scmp.eq.s32.totalorder %s9, 1
    %p110 = por %p108, %p109
    %p111 = scmp.ne.s32.totalorder %s103, %s106
    %p112 = scmp.eq.s32.totalorder %s9, 0
    %p113 = por %p111, %p112
    %p114 = scmp.ne.s32.totalorder %s103, %s106
    %p115 = scmp.eq.s32.totalorder %s14, 1
    %p116 = por %p114, %p115
    %p117 = scmp.ne.s32.totalorder %s106, %s107
    %p118 = scmp.eq.s32.totalorder %s14, 0
    %p119 = por %p117, %p118
    %p120 = scmp.ne.s32.totalorder %s106, %s107
    %p121 = scmp.eq.s32.totalorder %s15, 1
    %p122 = por %p120, %p121
    %p124 = scmp.ne.s32.totalorder %s107, %s123
    %p125 = scmp.eq.s32.totalorder %s15, 0
    %p126 = por %p124, %p125
    %p127 = scmp.le.s32.totalorder 1, %s9
    %p128 = scmp.lt.s32.totalorder %s9, 3
    %p129 = pnand %p127, %p128
    %p130 = pneg %p129
    // Predicated region
    $region9: #{decoder_forward.7} parent=5 // pred_check
      _
    $region10: #{decoder_forward.7} parent=5 // pred_check_branch
      %132 = sbr.rel (%p129) target = $region12
    $region11: #{decoder_forward.7} parent=5 // pred_region
      %s133 = ssub.s32 %s9, 1
      // Predicated region
      $region13: #{decoder_forward.7} parent=11 // pred_check
        %p134 = pneg %p70
      $region14: #{decoder_forward.7} parent=11 // pred_check_branch
        %136 = sbr.rel (%p134) target = $region16
      $region15: #{decoder_forward.7} parent=11 // pred_region
        _
      $region16: #{decoder_forward.7} parent=11 // pred_fallthru
        _
      // Predicated region
      $region17: #{decoder_forward.7} parent=11 // pred_check
        %p137 = pneg %p91
      $region18: #{decoder_forward.7} parent=11 // pred_check_branch
        %139 = sbr.rel (%p137) target = $region20
      $region19: #{decoder_forward.7} parent=11 // pred_region
        _
      $region20: #{decoder_forward.7} parent=11 // pred_fallthru
        _
    $region12: #{decoder_forward.7} parent=5 // pred_fallthru
      _
    %p140 = scmp.lt.s32.totalorder %s9, 2
    // Predicated region
    $region21: #{decoder_forward.7} parent=5 // pred_check
      %p141 = pneg %p140
    $region22: #{decoder_forward.7} parent=5 // pred_check_branch
      %143 = sbr.rel (%p141) target = $region24
    $region23: #{decoder_forward.7} parent=5 // pred_region
      // Predicated region
      $region25: #{decoder_forward.7} parent=23 // pred_check
        %p144 = pneg %p43
      $region26: #{decoder_forward.7} parent=23 // pred_check_branch
        %146 = sbr.rel (%p144) target = $region28
      $region27: #{decoder_forward.7} parent=23 // pred_region
        %s147 = smul.u32 2, %s17
        %p148 = scmp.lt.s32.totalorder %s16, 1
        %s149 = scalar_select %p148, %s16, 1
        %p150 = scmp.lt.s32.totalorder %s147, 1
        %s151 = scalar_select %p150, %s147, 1
        %s152 = smul.addr %s149, 72
        %s153 = sadd.s32 %s151, %s152
        %s154 = smul.addr %s153, 4
        %s155 = scalar_lea.vmem %s0, %s154
        %s156 = smul.u32 2, %s17
      $region28: #{decoder_forward.7} parent=23 // pred_fallthru
        _
    $region24: #{decoder_forward.7} parent=5 // pred_fallthru
      _
    %p157 = scmp.le.s32.totalorder 1, %s9
    %p158 = scmp.lt.s32.totalorder %s9, 3
    %p159 = pnand %p157, %p158
    %p160 = pneg %p159
    // Predicated region
    $region29: #{decoder_forward.7} parent=5 // pred_check
      _
    $region30: #{decoder_forward.7} parent=5 // pred_check_branch
      %162 = sbr.rel (%p159) target = $region32
    $region31: #{decoder_forward.7} parent=5 // pred_region
      %s163 = ssub.s32 %s9, 1
      %s164 = smul.u32 2, %s19
      %p165 = scmp.lt.s32.totalorder %s18, 1
      %s166 = scalar_select %p165, %s18, 1
      %p167 = scmp.lt.s32.totalorder %s164, 1
      %s168 = scalar_select %p167, %s164, 1
      %s169 = smul.addr %s166, 72
      %s170 = sadd.s32 %s168, %s169
      %s171 = smul.addr %s170, 4
      %s172 = scalar_lea.vmem %s0, %s171
      %p173 = pneg %p49
      %p174 = pneg %p46
      %p175 = pneg %p70
      %p176 = pneg %p67
      %p177 = pneg %p91
      %p178 = pneg %p88
      %p179 = pneg %p119
      %p180 = pneg %p116
      %s181 = smul.u32 2, %s19
      %p182 = scmp.lt.s32.totalorder %s18, 1
      %s183 = scalar_select %p182, %s18, 1
      %p184 = scmp.lt.s32.totalorder %s181, 1
      %s185 = scalar_select %p184, %s181, 1
      %s186 = smul.addr %s183, 8
      %s187 = sadd.s32 %s185, %s186
      %s188 = smul.addr %s187, 8
      %s189 = scalar_lea.vmem %s3, %s188
      %s190 = smul.u32 2, %s19
      %p191 = scmp.lt.s32.totalorder %s18, 1
      %s192 = scalar_select %p191, %s18, 1
      %p193 = scmp.lt.s32.totalorder %s190, 1
      %s194 = scalar_select %p193, %s190, 1
      %s195 = smul.addr %s192, 72
      %s196 = sadd.s32 %s194, %s195
      %s197 = smul.addr %s196, 4
      %s198 = scalar_lea.vmem %s0, %s197
      %s199 = smul.u32 2, %s19
      %s200 = smul.u32 2, %s19
      %p201 = scmp.lt.s32.totalorder %s18, 1
      %s202 = scalar_select %p201, %s18, 1
      %p203 = scmp.lt.s32.totalorder %s200, 1
      %s204 = scalar_select %p203, %s200, 1
      %s205 = smul.addr %s202, 8
      %s206 = sadd.s32 %s204, %s205
      %s207 = smul.addr %s206, 8
      %s208 = scalar_lea.vmem %s3, %s207
      %s209 = smul.u32 2, %s19
      %v211 = vld [vmem:[%s1] sm:$0xff]
      %v212 = vld [vmem:[%s1 + $0x8] sm:$0xf]
      %v213 = vld [vmem:[%s1 + $0xc] sm:$0xff]
      %v214 = vld [vmem:[%s1 + $0x14] sm:$0xf]
      %v215 = vld [vmem:[%s1 + $0x18] sm:$0xff]
      %v216 = vld [vmem:[%s1 + $0x20] sm:$0xf]
      %v217 = vld [vmem:[%s1 + $0x24] sm:$0xff]
      %v218 = vld [vmem:[%s1 + $0x2c] sm:$0xf]
      %v219 = vld [vmem:[%s198] sm:$0xff]
      %v220 = vld [vmem:[%s198 + $0x8] sm:$0xff]
      %v221 = vld [vmem:[%s198 + $0x10] sm:$0xff]
      %v222 = vld [vmem:[%s198 + $0x18] sm:$0xff]
      %v223 = vld [vmem:[%s198 + $0x20] sm:$0xff]
      %v224 = vld [vmem:[%s198 + $0x28] sm:$0xff]
      %v225 = vld [vmem:[%s198 + $0x30] sm:$0xff]
      %v226 = vld [vmem:[%s198 + $0x38] sm:$0xff]
      %v227 = vld [vmem:[%s198 + $0x40] sm:$0xff]
      %v228 = vld [vmem:[%s198 + $0x48] sm:$0xff]
      %v229 = vld [vmem:[%s198 + $0x50] sm:$0xff]
      %v230 = vld [vmem:[%s198 + $0x58] sm:$0xff]
      %v231 = vld [vmem:[%s198 + $0x60] sm:$0xff]
      %v232 = vld [vmem:[%s198 + $0x68] sm:$0xff]
      %v233 = vld [vmem:[%s198 + $0x70] sm:$0xff]
      %v234 = vld [vmem:[%s198 + $0x78] sm:$0xff]
      %v235 = vld [vmem:[%s198 + $0x80] sm:$0xff]
      %v236 = vld [vmem:[%s198 + $0x88] sm:$0xff]
      %v237 = vld [vmem:[%s198 + $0x90] sm:$0xff]
      %v238 = vld [vmem:[%s198 + $0x98] sm:$0xff]
      %v239 = vld [vmem:[%s198 + $0xa0] sm:$0xff]
      %v240 = vld [vmem:[%s198 + $0xa8] sm:$0xff]
      %v241 = vld [vmem:[%s198 + $0xb0] sm:$0xff]
      %v242 = vld [vmem:[%s198 + $0xb8] sm:$0xff]
      %v243 = vld [vmem:[%s198 + $0xc0] sm:$0xff]
      %v244 = vld [vmem:[%s198 + $0xc8] sm:$0xff]
      %v245 = vld [vmem:[%s198 + $0xd0] sm:$0xff]
      %v246 = vld [vmem:[%s198 + $0xd8] sm:$0xff]
      %v247 = vld [vmem:[%s198 + $0xe0] sm:$0xff]
      %v248 = vld [vmem:[%s198 + $0xe8] sm:$0xff]
      %v249 = vld [vmem:[%s198 + $0xf0] sm:$0xff]
      %v250 = vld [vmem:[%s198 + $0xf8] sm:$0xff]
      %v251 = vld [vmem:[%s198 + $0x100] sm:$0xff]
      %v252 = vld [vmem:[%s198 + $0x108] sm:$0xff]
      %v253 = vld [vmem:[%s198 + $0x110] sm:$0xff]
      %v254 = vld [vmem:[%s198 + $0x118] sm:$0xff]
      %v255 = vld [vmem:[%s2] sm:$0xff]
      %v256 = vld [vmem:[%s2 + $0x8] sm:$0xff]
      %v257 = vld [vmem:[%s2 + $0x10] sm:$0xff]
      %v258 = vld [vmem:[%s2 + $0x18] sm:$0xff]
      %260 = vset.pattern.permute.xlu0 0
      %261 = vperm.xlu0 %260, %v255
      %v262 = vpop.permute.xlu0 %261
      %265 = vset.pattern.permute.xlu0 0
      %266 = vperm.xlu0 %265, %v256
      %v267 = vpop.permute.xlu0 %266
      %270 = vset.pattern.permute.xlu0 0
      %271 = vperm.xlu0 %270, %v257
      %v272 = vpop.permute.xlu0 %271
      %275 = vset.pattern.permute.xlu0 0
      %276 = vperm.xlu0 %275, %v258
      %v277 = vpop.permute.xlu0 %276
      %v287 = vunpack.c.l.b16 %v211
      %v288 = vunpack.c.h.b16 %v211
      %v289 = vunpack.c.l.b16 %v212
      %v290 = vunpack.c.l.b16 %v213
      %v291 = vunpack.c.h.b16 %v213
      %v292 = vunpack.c.l.b16 %v214
      %v293 = vunpack.c.l.b16 %v215
      %v294 = vunpack.c.h.b16 %v215
      %v295 = vunpack.c.l.b16 %v216
      %v296 = vunpack.c.l.b16 %v217
      %v297 = vunpack.c.h.b16 %v217
      %v298 = vunpack.c.l.b16 %v218
      %v299 = vpack.c.b16 %v290, %v287
      %v300 = vpack.c.b16 %v291, %v288
      %v301 = vpack.c.b16 %v292, %v289
      %v302 = vpack.c.b16 %v296, %v293
      %v303 = vpack.c.b16 %v297, %v294
      %v304 = vpack.c.b16 %v298, %v295
      %v345 = vunpack.c.l.b16 %v219
      %v346 = vunpack.c.h.b16 %v219
      %v347 = vunpack.c.l.b16 %v220
      %v348 = vunpack.c.h.b16 %v220
      %v349 = vunpack.c.l.b16 %v221
      %v350 = vunpack.c.h.b16 %v221
      %v351 = vunpack.c.l.b16 %v222
      %v352 = vunpack.c.h.b16 %v222
      %v353 = vunpack.c.l.b16 %v223
      %v354 = vunpack.c.h.b16 %v223
      %v355 = vunpack.c.l.b16 %v224
      %v356 = vunpack.c.h.b16 %v224
      %v357 = vunpack.c.l.b16 %v225
      %v358 = vunpack.c.h.b16 %v225
      %v359 = vunpack.c.l.b16 %v226
      %v360 = vunpack.c.h.b16 %v226
      %v361 = vunpack.c.l.b16 %v227
      %v362 = vunpack.c.h.b16 %v227
      %v363 = vunpack.c.l.b16 %v228
      %v364 = vunpack.c.h.b16 %v228
      %v365 = vunpack.c.l.b16 %v229
      %v366 = vunpack.c.h.b16 %v229
      %v367 = vunpack.c.l.b16 %v230
      %v368 = vunpack.c.h.b16 %v230
      %v369 = vunpack.c.l.b16 %v231
      %v370 = vunpack.c.h.b16 %v231
      %v371 = vunpack.c.l.b16 %v232
      %v372 = vunpack.c.h.b16 %v232
      %v373 = vunpack.c.l.b16 %v233
      %v374 = vunpack.c.h.b16 %v233
      %v375 = vunpack.c.l.b16 %v234
      %v376 = vunpack.c.h.b16 %v234
      %v377 = vunpack.c.l.b16 %v235
      %v378 = vunpack.c.h.b16 %v235
      %v379 = vunpack.c.l.b16 %v236
      %v380 = vunpack.c.h.b16 %v236
      %v381 = vunpack.c.l.b16 %v237
      %v382 = vunpack.c.h.b16 %v237
      %v383 = vunpack.c.l.b16 %v238
      %v384 = vunpack.c.h.b16 %v238
      %v385 = vunpack.c.l.b16 %v239
      %v386 = vunpack.c.h.b16 %v239
      %v387 = vunpack.c.l.b16 %v240
      %v388 = vunpack.c.h.b16 %v240
      %v389 = vunpack.c.l.b16 %v241
      %v390 = vunpack.c.h.b16 %v241
      %v391 = vunpack.c.l.b16 %v242
      %v392 = vunpack.c.h.b16 %v242
      %v393 = vunpack.c.l.b16 %v243
      %v394 = vunpack.c.h.b16 %v243
      %v395 = vunpack.c.l.b16 %v244
      %v396 = vunpack.c.h.b16 %v244
      %v397 = vunpack.c.l.b16 %v245
      %v398 = vunpack.c.h.b16 %v245
      %v399 = vunpack.c.l.b16 %v246
      %v400 = vunpack.c.h.b16 %v246
      %v401 = vunpack.c.l.b16 %v247
      %v402 = vunpack.c.h.b16 %v247
      %v403 = vunpack.c.l.b16 %v248
      %v404 = vunpack.c.h.b16 %v248
      %v405 = vunpack.c.l.b16 %v249
      %v406 = vunpack.c.h.b16 %v249
      %v407 = vunpack.c.l.b16 %v250
      %v408 = vunpack.c.h.b16 %v250
      %v409 = vunpack.c.l.b16 %v251
      %v410 = vunpack.c.h.b16 %v251
      %v411 = vunpack.c.l.b16 %v252
      %v412 = vunpack.c.h.b16 %v252
      %v413 = vunpack.c.l.b16 %v253
      %v414 = vunpack.c.h.b16 %v253
      %v415 = vunpack.c.l.b16 %v254
      %v416 = vunpack.c.h.b16 %v254
      %v417 = vpack.c.b16 %v347, %v345
      %v418 = vpack.c.b16 %v348, %v346
      %v419 = vpack.c.b16 %v351, %v349
      %v420 = vpack.c.b16 %v352, %v350
      %v421 = vpack.c.b16 %v355, %v353
      %v422 = vpack.c.b16 %v356, %v354
      %v423 = vpack.c.b16 %v359, %v357
      %v424 = vpack.c.b16 %v360, %v358
      %v425 = vpack.c.b16 %v363, %v361
      %v426 = vpack.c.b16 %v364, %v362
      %v427 = vpack.c.b16 %v367, %v365
      %v428 = vpack.c.b16 %v368, %v366
      %v429 = vpack.c.b16 %v371, %v369
      %v430 = vpack.c.b16 %v372, %v370
      %v431 = vpack.c.b16 %v375, %v373
      %v432 = vpack.c.b16 %v376, %v374
      %v433 = vpack.c.b16 %v379, %v377
      %v434 = vpack.c.b16 %v380, %v378
      %v435 = vpack.c.b16 %v383, %v381
      %v436 = vpack.c.b16 %v384, %v382
      %v437 = vpack.c.b16 %v387, %v385
      %v438 = vpack.c.b16 %v388, %v386
      %v439 = vpack.c.b16 %v391, %v389
      %v440 = vpack.c.b16 %v392, %v390
      %v441 = vpack.c.b16 %v395, %v393
      %v442 = vpack.c.b16 %v396, %v394
      %v443 = vpack.c.b16 %v399, %v397
      %v444 = vpack.c.b16 %v400, %v398
      %v445 = vpack.c.b16 %v403, %v401
      %v446 = vpack.c.b16 %v404, %v402
      %v447 = vpack.c.b16 %v407, %v405
      %v448 = vpack.c.b16 %v408, %v406
      %v449 = vpack.c.b16 %v411, %v409
      %v450 = vpack.c.b16 %v412, %v410
      %v451 = vpack.c.b16 %v415, %v413
      %v452 = vpack.c.b16 %v416, %v414
      %vm489 = vcmask 261120
      %v491 = vsel %vm489, %v301, 0
      %v494 = vsel %vm489, %v304, 0
      %496 = vmatprep.subr.bf16.mxu0 %v418
      %497 = vmatpush1.bf16.msra.mxu0 %v417
      %498 = vmatprep.subr.bf16.mxu0 %v420
      %499 = vmatpush1.bf16.msra.mxu0 %v419
      %500 = vmatprep.subr.bf16.mxu0 %v422
      %501 = vmatpush1.bf16.msra.mxu0 %v421
      %502 = vmatprep.subr.bf16.mxu0 %v424
      %503 = vmatpush1.bf16.msra.mxu0 %v423
      %504 = vmatprep.subr.bf16.mxu0 %v426
      %505 = vmatpush1.bf16.msra.mxu0 %v425
      %506 = vmatprep.subr.bf16.mxu0 %v428
      %507 = vmatpush1.bf16.msra.mxu0 %v427
      %508 = vmatprep.subr.bf16.mxu0 %v430
      %509 = vmatpush1.bf16.msra.mxu0 %v429
      %510 = vmatprep.subr.bf16.mxu0 %v432
      %511 = vmatpush1.bf16.msra.mxu0 %v431
      %512 = vmatprep.subr.bf16.mxu0 %v434
      %513 = vmatpush1.bf16.msra.mxu0 %v433
      %514 = vmatprep.subr.bf16.mxu0 %v436
      %515 = vmatpush1.bf16.msra.mxu0 %v435
      %516 = vmatprep.subr.bf16.mxu0 %v438
      %517 = vmatpush1.bf16.msra.mxu0 %v437
      %518 = vmatprep.subr.bf16.mxu0 %v440
      %519 = vmatpush1.bf16.msra.mxu0 %v439
      %520 = vmatprep.subr.bf16.mxu0 %v442
      %521 = vmatpush1.bf16.msra.mxu0 %v441
      %522 = vmatprep.subr.bf16.mxu0 %v444
      %523 = vmatpush1.bf16.msra.mxu0 %v443
      %524 = vmatprep.subr.bf16.mxu0 %v446
      %525 = vmatpush1.bf16.msra.mxu0 %v445
      %526 = vmatprep.subr.bf16.mxu0 %v448
      %527 = vmatpush1.bf16.msra.mxu0 %v447
      %528 = vmatprep.mubr.bf16.mxu0 %v300
      %529 = vmatmul.mubr.bf16.gmra.mrb[0].mxu0 %v299
      %v530 = vpop.f32.mrb[0].mxu0
      %v531 = vadd.f32 %v262, %v530
      %v532 = vpop.f32.mrb[0].mxu0
      %v533 = vadd.f32 %v262, %v532
      %v534 = vpop.f32.mrb[0].mxu0
      %v535 = vadd.f32 %v267, %v534
      %v536 = vpop.f32.mrb[0].mxu0
      %v537 = vadd.f32 %v267, %v536
      %538 = vmatprep.mubr.bf16.mxu0 %v303
      %539 = vmatmul.mubr.bf16.gmra.mrb[0].mxu0 %v302
      %v540 = vpop.f32.mrb[0].mxu0
      %v541 = vadd.f32 %v272, %v540
      %v542 = vpop.f32.mrb[0].mxu0
      %v543 = vadd.f32 %v272, %v542
      %v544 = vpop.f32.mrb[0].mxu0
      %v545 = vadd.f32 %v277, %v544
      %v546 = vpop.f32.mrb[0].mxu0
      %v547 = vadd.f32 %v277, %v546
      %548 = vdwg.mxu0
      %549 = vmatprep.subr.bf16.mxu0 %v450
      %550 = vmatpush1.bf16.msra.mxu0 %v449
      %551 = vmatprep.subr.bf16.mxu0 %v452
      %552 = vmatpush1.bf16.msra.mxu0 %v451
      %553 = vmatprep.subr.bf16.mxu0 0
      %554 = vmatpush1.bf16.msra.mxu0 0
      %555 = vmatprep.subr.bf16.mxu0 0
      %556 = vmatpush1.bf16.msra.mxu0 0
      %557 = vmatprep.subr.bf16.mxu0 0
      %558 = vmatpush1.bf16.msra.mxu0 0
      %559 = vmatprep.subr.bf16.mxu0 0
      %560 = vmatpush1.bf16.msra.mxu0 0
      %561 = vmatprep.subr.bf16.mxu0 0
      %562 = vmatpush1.bf16.msra.mxu0 0
      %563 = vmatprep.subr.bf16.mxu0 0
      %564 = vmatpush1.bf16.msra.mxu0 0
      %565 = vmatprep.subr.bf16.mxu0 0
      %566 = vmatpush1.bf16.msra.mxu0 0
      %567 = vmatprep.subr.bf16.mxu0 0
      %568 = vmatpush1.bf16.msra.mxu0 0
      %569 = vmatprep.subr.bf16.mxu0 0
      %570 = vmatpush1.bf16.msra.mxu0 0
      %571 = vmatprep.subr.bf16.mxu0 0
      %572 = vmatpush1.bf16.msra.mxu0 0
      %573 = vmatprep.subr.bf16.mxu0 0
      %574 = vmatpush1.bf16.msra.mxu0 0
      %575 = vmatprep.subr.bf16.mxu0 0
      %576 = vmatpush1.bf16.msra.mxu0 0
      %577 = vmatprep.subr.bf16.mxu0 0
      %578 = vmatpush1.bf16.msra.mxu0 0
      %579 = vmatprep.subr.bf16.mxu0 0
      %580 = vmatpush1.bf16.msra.mxu0 0
      %581 = vmatprep.mubr.bf16.mxu0 0
      %582 = vmatmul.mubr.bf16.gmra.mrb[0].mxu0 %v491
      %v583 = vpop.f32.mrb[0].mxu0
      %v584 = vadd.f32 %v531, %v583
      %v585 = vpop.f32.mrb[0].mxu0
      %v586 = vadd.f32 %v533, %v585
      %v587 = vpop.f32.mrb[0].mxu0
      %v588 = vadd.f32 %v535, %v587
      %v589 = vpop.f32.mrb[0].mxu0
      %v590 = vadd.f32 %v537, %v589
      %591 = vmatprep.mubr.bf16.mxu0 0
      %592 = vmatmul.mubr.bf16.gmra.mrb[0].mxu0 %v494
      %v593 = vpop.f32.mrb[0].mxu0
      %v594 = vadd.f32 %v541, %v593
      %v595 = vpop.f32.mrb[0].mxu0
      %v596 = vadd.f32 %v543, %v595
      %v597 = vpop.f32.mrb[0].mxu0
      %v598 = vadd.f32 %v545, %v597
      %v599 = vpop.f32.mrb[0].mxu0
      %v600 = vadd.f32 %v547, %v599
      %601 = vdwg.mxu0
      %602 = vst [vmem:[%s208] sm:$0xff] %v584
      %603 = vst [vmem:[%s208 + $0x8] sm:$0xff] %v586
      %604 = vst [vmem:[%s208 + $0x10] sm:$0xff] %v588
      %605 = vst [vmem:[%s208 + $0x18] sm:$0xff] %v590
      %606 = vst [vmem:[%s208 + $0x20] sm:$0xff] %v594
      %607 = vst [vmem:[%s208 + $0x28] sm:$0xff] %v596
      %608 = vst [vmem:[%s208 + $0x30] sm:$0xff] %v598
      %609 = vst [vmem:[%s208 + $0x38] sm:$0xff] %v600
      %s610 = smul.u32 2, %s19
      %p611 = scmp.lt.s32.totalorder %s18, 1
      %s612 = scalar_select %p611, %s18, 1
      %p613 = scmp.lt.s32.totalorder %s610, 1
      %s614 = scalar_select %p613, %s610, 1
      %s615 = smul.addr %s612, 8
      %s616 = sadd.s32 %s614, %s615
      %s617 = smul.addr %s616, 8
      %s618 = scalar_lea.vmem %s3, %s617
      // Predicated region
      $region33: #{decoder_forward.7} parent=31 // pred_check
        %p619 = pneg %p116
      $region34: #{decoder_forward.7} parent=31 // pred_check_branch
        %621 = sbr.rel (%p619) target = $region36
      $region35: #{decoder_forward.7} parent=31 // pred_region
        %s622 = smul.u32 2, %s19
      $region36: #{decoder_forward.7} parent=31 // pred_fallthru
        _
    $region32: #{decoder_forward.7} parent=5 // pred_fallthru
      _
    %p623 = scmp.le.s32.totalorder 2, %s9
    // Predicated region
    $region37: #{decoder_forward.7} parent=5 // pred_check
      %p624 = pneg %p623
    $region38: #{decoder_forward.7} parent=5 // pred_check_branch
      %626 = sbr.rel (%p624) target = $region40
    $region39: #{decoder_forward.7} parent=5 // pred_region
      %s627 = ssub.s32 %s9, 2
      // Predicated region
      $region41: #{decoder_forward.7} parent=39 // pred_check
        %p628 = pneg %p122
      $region42: #{decoder_forward.7} parent=39 // pred_check_branch
        %630 = sbr.rel (%p628) target = $region44
      $region43: #{decoder_forward.7} parent=39 // pred_region
        %s631 = smul.u32 2, %s21
        %p632 = scmp.lt.s32.totalorder %s20, 1
        %s633 = scalar_select %p632, %s20, 1
        %p634 = scmp.lt.s32.totalorder %s631, 1
        %s635 = scalar_select %p634, %s631, 1
        %s636 = smul.addr %s633, 8
        %s637 = sadd.s32 %s635, %s636
        %s638 = smul.addr %s637, 8
        %s639 = scalar_lea.vmem %s3, %s638
      $region44: #{decoder_forward.7} parent=39 // pred_fallthru
        _
    $region40: #{decoder_forward.7} parent=5 // pred_fallthru
      _
  $region6: #{decoder_forward.7} parent=0 // loop_footer
    %s13 = sadd.s32 1, %s9
  $region7: #{decoder_forward.7} parent=0 // loop_footer_branch
    %8 = sbr.rel target = $region3
  $region8: #{decoder_forward.7} parent=0 // loop_exit
    _

// kernel: decoder_forward.8
$region0: #{decoder_forward.8}
  #allocation0 [shape = 'u32[]', space=smem, size = 0x4, offset = 0x4, fixed_abs, tag = 'smem constant byte address 0x4 - core index']
  #allocation1 [shape = 'u32[144,128]{1,0:T(1,128)}', space=vmem, size = 0x12000, scoped, tag = 'internal scratch']
  %s0 = inlined_call_operand.vmem [shape: bf16[2,288,256], index: 0, kind: input, shape index: {}]
  %s1 = inlined_call_operand.vmem [shape: bf16[64,288], index: 1, kind: input, shape index: {}]
  %s2 = inlined_call_operand.vmem [shape: f32[64,1], index: 2, kind: input, shape index: {}]
  %s3 = inlined_call_operand.vmem [shape: f32[2,64,256], index: 3, kind: output, shape index: {}]
  %s4 = sld [smem:[#allocation0]]
  $region45: #{decoder_forward.8} parent=0
    _
  %s6 = ssub.s32 1, %s4
  %s7 = scalar_select 0, %s6, %s4
  loop: start=0, step=1, limit=4
  $region2: #{decoder_forward.8} parent=0 // loop_pre_header
    _
  $region3: #{decoder_forward.8} parent=0 // loop_header
    %s9 = sphi 0, %s13
    %p10 = scmp.ge.s32.totalorder %s9, 4
    %s16 = sphi 0, %s28
    %s17 = sphi 0, %s24
    %s18 = sphi 0, %s16
    %s19 = sphi 0, %s17
    %s20 = sphi 0, %s18
    %s21 = sphi 0, %s19
    %s33 = sphi 0, %s35
    %s36 = sphi 0, %s33
    %s37 = sphi 0, %s36
    %s53 = sphi 0, %s37
    %s57 = sphi 0, %s57
    %s59 = sphi 0, %s57
    %s60 = sphi 0, %s59
    %s74 = sphi 0, %s60
    %s78 = sphi 0, %s78
    %s80 = sphi 0, %s78
    %s81 = sphi 0, %s80
    %s95 = sphi 0, %s81
    %s103 = sphi 0, %s105
    %s106 = sphi 0, %s103
    %s107 = sphi 0, %s106
    %s123 = sphi 0, %s107
  $region4: #{decoder_forward.8} parent=0 // loop_header_branch
    %12 = sbr.rel (%p10) target = $region8
  $region5: #{decoder_forward.8} parent=0 // loop_body
    %s14 = ssub.s32 %s9, 1
    %s15 = ssub.s32 %s9, 2
    %s22 = sadd.s32 1, %s17
    %p23 = scmp.ge.s32.totalorder %s22, 1
    %s24 = scalar_select %p23, 0, %s22
    %s25 = sadd.s32 1, %s16
    %s26 = scalar_select %p23, %s25, %s16
    %p27 = scmp.ge.s32.totalorder %s26, 2
    %s28 = scalar_select %p27, 0, %s26
    %s29 = ssub.s32 %s16, %s28
    %s30 = ssub.s32 %s17, %s24
    %s31 = sor.u32 %s29, %s30
    %p32 = scmp.eq.s32.totalorder %s31, 0
    %s34 = sadd.s32 %s33, 1
    %s35 = scalar_select %p32, %s33, %s34
    %p38 = pneg %p32
    %p39 = scmp.eq.s32.totalorder %s9, 1
    %p40 = por %p38, %p39
    %p41 = scmp.ne.s32.totalorder %s33, %s36
    %p42 = scmp.eq.s32.totalorder %s9, 0
    %p43 = por %p41, %p42
    %p44 = scmp.ne.s32.totalorder %s33, %s36
    %p45 = scmp.eq.s32.totalorder %s14, 1
    %p46 = por %p44, %p45
    %p47 = scmp.ne.s32.totalorder %s36, %s37
    %p48 = scmp.eq.s32.totalorder %s14, 0
    %p49 = por %p47, %p48
    %p50 = scmp.ne.s32.totalorder %s36, %s37
    %p51 = scmp.eq.s32.totalorder %s15, 1
    %p52 = por %p50, %p51
    %p54 = scmp.ne.s32.totalorder %s37, %s53
    %p55 = scmp.eq.s32.totalorder %s15, 0
    %p56 = por %p54, %p55
    %s58 = sadd.s32 %s57, 1
    %p61 = scmp.eq.s32.totalorder %s9, 1
    %p62 = scmp.ne.s32.totalorder %s57, %s59
    %p63 = scmp.eq.s32.totalorder %s9, 0
    %p64 = por %p62, %p63
    %p65 = scmp.ne.s32.totalorder %s57, %s59
    %p66 = scmp.eq.s32.totalorder %s14, 1
    %p67 = por %p65, %p66
    %p68 = scmp.ne.s32.totalorder %s59, %s60
    %p69 = scmp.eq.s32.totalorder %s14, 0
    %p70 = por %p68, %p69
    %p71 = scmp.ne.s32.totalorder %s59, %s60
    %p72 = scmp.eq.s32.totalorder %s15, 1
    %p73 = por %p71, %p72
    %p75 = scmp.ne.s32.totalorder %s60, %s74
    %p76 = scmp.eq.s32.totalorder %s15, 0
    %p77 = por %p75, %p76
    %s79 = sadd.s32 %s78, 1
    %p82 = scmp.eq.s32.totalorder %s9, 1
    %p83 = scmp.ne.s32.totalorder %s78, %s80
    %p84 = scmp.eq.s32.totalorder %s9, 0
    %p85 = por %p83, %p84
    %p86 = scmp.ne.s32.totalorder %s78, %s80
    %p87 = scmp.eq.s32.totalorder %s14, 1
    %p88 = por %p86, %p87
    %p89 = scmp.ne.s32.totalorder %s80, %s81
    %p90 = scmp.eq.s32.totalorder %s14, 0
    %p91 = por %p89, %p90
    %p92 = scmp.ne.s32.totalorder %s80, %s81
    %p93 = scmp.eq.s32.totalorder %s15, 1
    %p94 = por %p92, %p93
    %p96 = scmp.ne.s32.totalorder %s81, %s95
    %p97 = scmp.eq.s32.totalorder %s15, 0
    %p98 = por %p96, %p97
    %s99 = ssub.s32 %s16, %s28
    %s100 = ssub.s32 %s17, %s24
    %s101 = sor.u32 %s99, %s100
    %p102 = scmp.eq.s32.totalorder %s101, 0
    %s104 = sadd.s32 %s103, 1
    %s105 = scalar_select %p102, %s103, %s104
    %p108 = pneg %p102
    %p109 = scmp.eq.s32.totalorder %s9, 1
    %p110 = por %p108, %p109
    %p111 = scmp.ne.s32.totalorder %s103, %s106
    %p112 = scmp.eq.s32.totalorder %s9, 0
    %p113 = por %p111, %p112
    %p114 = scmp.ne.s32.totalorder %s103, %s106
    %p115 = scmp.eq.s32.totalorder %s14, 1
    %p116 = por %p114, %p115
    %p117 = scmp.ne.s32.totalorder %s106, %s107
    %p118 = scmp.eq.s32.totalorder %s14, 0
    %p119 = por %p117, %p118
    %p120 = scmp.ne.s32.totalorder %s106, %s107
    %p121 = scmp.eq.s32.totalorder %s15, 1
    %p122 = por %p120, %p121
    %p124 = scmp.ne.s32.totalorder %s107, %s123
    %p125 = scmp.eq.s32.totalorder %s15, 0
    %p126 = por %p124, %p125
    %p127 = scmp.le.s32.totalorder 1, %s9
    %p128 = scmp.lt.s32.totalorder %s9, 3
    %p129 = pnand %p127, %p128
    %p130 = pneg %p129
    // Predicated region
    $region9: #{decoder_forward.8} parent=5 // pred_check
      _
    $region10: #{decoder_forward.8} parent=5 // pred_check_branch
      %132 = sbr.rel (%p129) target = $region12
    $region11: #{decoder_forward.8} parent=5 // pred_region
      %s133 = ssub.s32 %s9, 1
      // Predicated region
      $region13: #{decoder_forward.8} parent=11 // pred_check
        %p134 = pneg %p70
      $region14: #{decoder_forward.8} parent=11 // pred_check_branch
        %136 = sbr.rel (%p134) target = $region16
      $region15: #{decoder_forward.8} parent=11 // pred_region
        _
      $region16: #{decoder_forward.8} parent=11 // pred_fallthru
        _
      // Predicated region
      $region17: #{decoder_forward.8} parent=11 // pred_check
        %p137 = pneg %p91
      $region18: #{decoder_forward.8} parent=11 // pred_check_branch
        %139 = sbr.rel (%p137) target = $region20
      $region19: #{decoder_forward.8} parent=11 // pred_region
        _
      $region20: #{decoder_forward.8} parent=11 // pred_fallthru
        _
    $region12: #{decoder_forward.8} parent=5 // pred_fallthru
      _
    %p140 = scmp.lt.s32.totalorder %s9, 2
    // Predicated region
    $region21: #{decoder_forward.8} parent=5 // pred_check
      %p141 = pneg %p140
    $region22: #{decoder_forward.8} parent=5 // pred_check_branch
      %143 = sbr.rel (%p141) target = $region24
    $region23: #{decoder_forward.8} parent=5 // pred_region
      // Predicated region
      $region25: #{decoder_forward.8} parent=23 // pred_check
        %p144 = pneg %p43
      $region26: #{decoder_forward.8} parent=23 // pred_check_branch
        %146 = sbr.rel (%p144) target = $region28
      $region27: #{decoder_forward.8} parent=23 // pred_region
        %s147 = smul.u32 2, %s17
        %p148 = scmp.lt.s32.totalorder %s16, 1
        %s149 = scalar_select %p148, %s16, 1
        %p150 = scmp.lt.s32.totalorder %s147, 1
        %s151 = scalar_select %p150, %s147, 1
        %s152 = smul.addr %s149, 72
        %s153 = sadd.s32 %s151, %s152
        %s154 = smul.addr %s153, 4
        %s155 = scalar_lea.vmem %s0, %s154
        %s156 = smul.u32 2, %s17
      $region28: #{decoder_forward.8} parent=23 // pred_fallthru
        _
    $region24: #{decoder_forward.8} parent=5 // pred_fallthru
      _
    %p157 = scmp.le.s32.totalorder 1, %s9
    %p158 = scmp.lt.s32.totalorder %s9, 3
    %p159 = pnand %p157, %p158
    %p160 = pneg %p159
    // Predicated region
    $region29: #{decoder_forward.8} parent=5 // pred_check
      _
    $region30: #{decoder_forward.8} parent=5 // pred_check_branch
      %162 = sbr.rel (%p159) target = $region32
    $region31: #{decoder_forward.8} parent=5 // pred_region
      %s163 = ssub.s32 %s9, 1
      %s164 = smul.u32 2, %s19
      %p165 = scmp.lt.s32.totalorder %s18, 1
      %s166 = scalar_select %p165, %s18, 1
      %p167 = scmp.lt.s32.totalorder %s164, 1
      %s168 = scalar_select %p167, %s164, 1
      %s169 = smul.addr %s166, 72
      %s170 = sadd.s32 %s168, %s169
      %s171 = smul.addr %s170, 4
      %s172 = scalar_lea.vmem %s0, %s171
      %p173 = pneg %p49
      %p174 = pneg %p46
      %p175 = pneg %p70
      %p176 = pneg %p67
      %p177 = pneg %p91
      %p178 = pneg %p88
      %p179 = pneg %p119
      %p180 = pneg %p116
      %s181 = smul.u32 2, %s19
      %p182 = scmp.lt.s32.totalorder %s18, 1
      %s183 = scalar_select %p182, %s18, 1
      %p184 = scmp.lt.s32.totalorder %s181, 1
      %s185 = scalar_select %p184, %s181, 1
      %s186 = smul.addr %s183, 16
      %s187 = sadd.s32 %s185, %s186
      %s188 = smul.addr %s187, 8
      %s189 = scalar_lea.vmem %s3, %s188
      %s190 = smul.u32 2, %s19
      %p191 = scmp.lt.s32.totalorder %s18, 1
      %s192 = scalar_select %p191, %s18, 1
      %p193 = scmp.lt.s32.totalorder %s190, 1
      %s194 = scalar_select %p193, %s190, 1
      %s195 = smul.addr %s192, 72
      %s196 = sadd.s32 %s194, %s195
      %s197 = smul.addr %s196, 4
      %s198 = scalar_lea.vmem %s0, %s197
      %s199 = smul.u32 2, %s19
      %s200 = smul.u32 2, %s19
      %p201 = scmp.lt.s32.totalorder %s18, 1
      %s202 = scalar_select %p201, %s18, 1
      %p203 = scmp.lt.s32.totalorder %s200, 1
      %s204 = scalar_select %p203, %s200, 1
      %s205 = smul.addr %s202, 16
      %s206 = sadd.s32 %s204, %s205
      %s207 = smul.addr %s206, 8
      %s208 = scalar_lea.vmem %s3, %s207
      %s209 = smul.u32 2, %s19
      %v211 = vld [vmem:[%s1] sm:$0xff]
      %v212 = vld [vmem:[%s1 + $0x8] sm:$0xf]
      %v213 = vld [vmem:[%s1 + $0xc] sm:$0xff]
      %v214 = vld [vmem:[%s1 + $0x14] sm:$0xf]
      %v215 = vld [vmem:[%s1 + $0x18] sm:$0xff]
      %v216 = vld [vmem:[%s1 + $0x20] sm:$0xf]
      %v217 = vld [vmem:[%s1 + $0x24] sm:$0xff]
      %v218 = vld [vmem:[%s1 + $0x2c] sm:$0xf]
      %v219 = vld [vmem:[%s1 + $0x30] sm:$0xff]
      %v220 = vld [vmem:[%s1 + $0x38] sm:$0xf]
      %v221 = vld [vmem:[%s1 + $0x3c] sm:$0xff]
      %v222 = vld [vmem:[%s1 + $0x44] sm:$0xf]
      %v223 = vld [vmem:[%s1 + $0x48] sm:$0xff]
      %v224 = vld [vmem:[%s1 + $0x50] sm:$0xf]
      %v225 = vld [vmem:[%s1 + $0x54] sm:$0xff]
      %v226 = vld [vmem:[%s1 + $0x5c] sm:$0xf]
      %v227 = vld [vmem:[%s198] sm:$0xff]
      %v228 = vld [vmem:[%s198 + $0x8] sm:$0xff]
      %v229 = vld [vmem:[%s198 + $0x10] sm:$0xff]
      %v230 = vld [vmem:[%s198 + $0x18] sm:$0xff]
      %v231 = vld [vmem:[%s198 + $0x20] sm:$0xff]
      %v232 = vld [vmem:[%s198 + $0x28] sm:$0xff]
      %v233 = vld [vmem:[%s198 + $0x30] sm:$0xff]
      %v234 = vld [vmem:[%s198 + $0x38] sm:$0xff]
      %v235 = vld [vmem:[%s198 + $0x40] sm:$0xff]
      %v236 = vld [vmem:[%s198 + $0x48] sm:$0xff]
      %v237 = vld [vmem:[%s198 + $0x50] sm:$0xff]
      %v238 = vld [vmem:[%s198 + $0x58] sm:$0xff]
      %v239 = vld [vmem:[%s198 + $0x60] sm:$0xff]
      %v240 = vld [vmem:[%s198 + $0x68] sm:$0xff]
      %v241 = vld [vmem:[%s198 + $0x70] sm:$0xff]
      %v242 = vld [vmem:[%s198 + $0x78] sm:$0xff]
      %v243 = vld [vmem:[%s198 + $0x80] sm:$0xff]
      %v244 = vld [vmem:[%s198 + $0x88] sm:$0xff]
      %v245 = vld [vmem:[%s198 + $0x90] sm:$0xff]
      %v246 = vld [vmem:[%s198 + $0x98] sm:$0xff]
      %v247 = vld [vmem:[%s198 + $0xa0] sm:$0xff]
      %v248 = vld [vmem:[%s198 + $0xa8] sm:$0xff]
      %v249 = vld [vmem:[%s198 + $0xb0] sm:$0xff]
      %v250 = vld [vmem:[%s198 + $0xb8] sm:$0xff]
      %v251 = vld [vmem:[%s198 + $0xc0] sm:$0xff]
      %v252 = vld [vmem:[%s198 + $0xc8] sm:$0xff]
      %v253 = vld [vmem:[%s198 + $0xd0] sm:$0xff]
      %v254 = vld [vmem:[%s198 + $0xd8] sm:$0xff]
      %v255 = vld [vmem:[%s198 + $0xe0] sm:$0xff]
      %v256 = vld [vmem:[%s198 + $0xe8] sm:$0xff]
      %v257 = vld [vmem:[%s198 + $0xf0] sm:$0xff]
      %v258 = vld [vmem:[%s198 + $0xf8] sm:$0xff]
      %v259 = vld [vmem:[%s198 + $0x100] sm:$0xff]
      %v260 = vld [vmem:[%s198 + $0x108] sm:$0xff]
      %v261 = vld [vmem:[%s198 + $0x110] sm:$0xff]
      %v262 = vld [vmem:[%s198 + $0x118] sm:$0xff]
      %v263 = vld [vmem:[%s2] sm:$0xff]
      %v264 = vld [vmem:[%s2 + $0x8] sm:$0xff]
      %v265 = vld [vmem:[%s2 + $0x10] sm:$0xff]
      %v266 = vld [vmem:[%s2 + $0x18] sm:$0xff]
      %v267 = vld [vmem:[%s2 + $0x20] sm:$0xff]
      %v268 = vld [vmem:[%s2 + $0x28] sm:$0xff]
      %v269 = vld [vmem:[%s2 + $0x30] sm:$0xff]
      %v270 = vld [vmem:[%s2 + $0x38] sm:$0xff]
      %272 = vset.pattern.permute.xlu0 0
      %273 = vperm.xlu0 %272, %v263
      %v274 = vpop.permute.xlu0 %273
      %277 = vset.pattern.permute.xlu0 0
      %278 = vperm.xlu0 %277, %v264
      %v279 = vpop.permute.xlu0 %278
      %282 = vset.pattern.permute.xlu0 0
      %283 = vperm.xlu0 %282, %v265
      %v284 = vpop.permute.xlu0 %283
      %287 = vset.pattern.permute.xlu0 0
      %288 = vperm.xlu0 %287, %v266
      %v289 = vpop.permute.xlu0 %288
      %292 = vset.pattern.permute.xlu0 0
      %293 = vperm.xlu0 %292, %v267
      %v294 = vpop.permute.xlu0 %293
      %297 = vset.pattern.permute.xlu0 0
      %298 = vperm.xlu0 %297, %v268
      %v299 = vpop.permute.xlu0 %298
      %302 = vset.pattern.permute.xlu0 0
      %303 = vperm.xlu0 %302, %v269
      %v304 = vpop.permute.xlu0 %303
      %307 = vset.pattern.permute.xlu0 0
      %308 = vperm.xlu0 %307, %v270
      %v309 = vpop.permute.xlu0 %308
      %v327 = vunpack.c.l.b16 %v211
      %v328 = vunpack.c.h.b16 %v211
      %v329 = vunpack.c.l.b16 %v212
      %v330 = vunpack.c.l.b16 %v213
      %v331 = vunpack.c.h.b16 %v213
      %v332 = vunpack.c.l.b16 %v214
      %v333 = vunpack.c.l.b16 %v215
      %v334 = vunpack.c.h.b16 %v215
      %v335 = vunpack.c.l.b16 %v216
      %v336 = vunpack.c.l.b16 %v217
      %v337 = vunpack.c.h.b16 %v217
      %v338 = vunpack.c.l.b16 %v218
      %v339 = vunpack.c.l.b16 %v219
      %v340 = vunpack.c.h.b16 %v219
      %v341 = vunpack.c.l.b16 %v220
      %v342 = vunpack.c.l.b16 %v221
      %v343 = vunpack.c.h.b16 %v221
      %v344 = vunpack.c.l.b16 %v222
      %v345 = vunpack.c.l.b16 %v223
      %v346 = vunpack.c.h.b16 %v223
      %v347 = vunpack.c.l.b16 %v224
      %v348 = vunpack.c.l.b16 %v225
      %v349 = vunpack.c.h.b16 %v225
      %v350 = vunpack.c.l.b16 %v226
      %v351 = vpack.c.b16 %v330, %v327
      %v352 = vpack.c.b16 %v331, %v328
      %v353 = vpack.c.b16 %v332, %v329
      %v354 = vpack.c.b16 %v336, %v333
      %v355 = vpack.c.b16 %v337, %v334
      %v356 = vpack.c.b16 %v338, %v335
      %v357 = vpack.c.b16 %v342, %v339
      %v358 = vpack.c.b16 %v343, %v340
      %v359 = vpack.c.b16 %v344, %v341
      %v360 = vpack.c.b16 %v348, %v345
      %v361 = vpack.c.b16 %v349, %v346
      %v362 = vpack.c.b16 %v350, %v347
      %v407 = vunpack.c.l.b16 %v227
      %v408 = vunpack.c.h.b16 %v227
      %v409 = vunpack.c.l.b16 %v228
      %v410 = vunpack.c.h.b16 %v228
      %v411 = vunpack.c.l.b16 %v229
      %v412 = vunpack.c.h.b16 %v229
      %v413 = vunpack.c.l.b16 %v230
      %v414 = vunpack.c.h.b16 %v230
      %v415 = vunpack.c.l.b16 %v231
      %v416 = vunpack.c.h.b16 %v231
      %v417 = vunpack.c.l.b16 %v232
      %v418 = vunpack.c.h.b16 %v232
      %v419 = vunpack.c.l.b16 %v233
      %v420 = vunpack.c.h.b16 %v233
      %v421 = vunpack.c.l.b16 %v234
      %v422 = vunpack.c.h.b16 %v234
      %v423 = vunpack.c.l.b16 %v235
      %v424 = vunpack.c.h.b16 %v235
      %v425 = vunpack.c.l.b16 %v236
      %v426 = vunpack.c.h.b16 %v236
      %v427 = vunpack.c.l.b16 %v237
      %v428 = vunpack.c.h.b16 %v237
      %v429 = vunpack.c.l.b16 %v238
      %v430 = vunpack.c.h.b16 %v238
      %v431 = vunpack.c.l.b16 %v239
      %v432 = vunpack.c.h.b16 %v239
      %v433 = vunpack.c.l.b16 %v240
      %v434 = vunpack.c.h.b16 %v240
      %v435 = vunpack.c.l.b16 %v241
      %v436 = vunpack.c.h.b16 %v241
      %v437 = vunpack.c.l.b16 %v242
      %v438 = vunpack.c.h.b16 %v242
      %v439 = vunpack.c.l.b16 %v243
      %v440 = vunpack.c.h.b16 %v243
      %v441 = vunpack.c.l.b16 %v244
      %v442 = vunpack.c.h.b16 %v244
      %v443 = vunpack.c.l.b16 %v245
      %v444 = vunpack.c.h.b16 %v245
      %v445 = vunpack.c.l.b16 %v246
      %v446 = vunpack.c.h.b16 %v246
      %v447 = vunpack.c.l.b16 %v247
      %v448 = vunpack.c.h.b16 %v247
      %v449 = vunpack.c.l.b16 %v248
      %v450 = vunpack.c.h.b16 %v248
      %v451 = vunpack.c.l.b16 %v249
      %v452 = vunpack.c.h.b16 %v249
      %v453 = vunpack.c.l.b16 %v250
      %v454 = vunpack.c.h.b16 %v250
      %v455 = vunpack.c.l.b16 %v251
      %v456 = vunpack.c.h.b16 %v251
      %v457 = vunpack.c.l.b16 %v252
      %v458 = vunpack.c.h.b16 %v252
      %v459 = vunpack.c.l.b16 %v253
      %v460 = vunpack.c.h.b16 %v253
      %v461 = vunpack.c.l.b16 %v254
      %v462 = vunpack.c.h.b16 %v254
      %v463 = vunpack.c.l.b16 %v255
      %v464 = vunpack.c.h.b16 %v255
      %v465 = vunpack.c.l.b16 %v256
      %v466 = vunpack.c.h.b16 %v256
      %v467 = vunpack.c.l.b16 %v257
      %v468 = vunpack.c.h.b16 %v257
      %v469 = vunpack.c.l.b16 %v258
      %v470 = vunpack.c.h.b16 %v258
      %v471 = vunpack.c.l.b16 %v259
      %v472 = vunpack.c.h.b16 %v259
      %v473 = vunpack.c.l.b16 %v260
      %v474 = vunpack.c.h.b16 %v260
      %v475 = vunpack.c.l.b16 %v261
      %v476 = vunpack.c.h.b16 %v261
      %v477 = vunpack.c.l.b16 %v262
      %v478 = vunpack.c.h.b16 %v262
      %v479 = vpack.c.b16 %v409, %v407
      %v480 = vpack.c.b16 %v410, %v408
      %v481 = vpack.c.b16 %v413, %v411
      %v482 = vpack.c.b16 %v414, %v412
      %v483 = vpack.c.b16 %v417, %v415
      %v484 = vpack.c.b16 %v418, %v416
      %v485 = vpack.c.b16 %v421, %v419
      %v486 = vpack.c.b16 %v422, %v420
      %v487 = vpack.c.b16 %v425, %v423
      %v488 = vpack.c.b16 %v426, %v424
      %v489 = vpack.c.b16 %v429, %v427
      %v490 = vpack.c.b16 %v430, %v428
      %v491 = vpack.c.b16 %v433, %v431
      %v492 = vpack.c.b16 %v434, %v432
      %v493 = vpack.c.b16 %v437, %v435
      %v494 = vpack.c.b16 %v438, %v436
      %v495 = vpack.c.b16 %v441, %v439
      %v496 = vpack.c.b16 %v442, %v440
      %v497 = vpack.c.b16 %v445, %v443
      %v498 = vpack.c.b16 %v446, %v444
      %v499 = vpack.c.b16 %v449, %v447
      %v500 = vpack.c.b16 %v450, %v448
      %v501 = vpack.c.b16 %v453, %v451
      %v502 = vpack.c.b16 %v454, %v452
      %v503 = vpack.c.b16 %v457, %v455
      %v504 = vpack.c.b16 %v458, %v456
      %v505 = vpack.c.b16 %v461, %v459
      %v506 = vpack.c.b16 %v462, %v460
      %v507 = vpack.c.b16 %v465, %v463
      %v508 = vpack.c.b16 %v466, %v464
      %v509 = vpack.c.b16 %v469, %v467
      %v510 = vpack.c.b16 %v470, %v468
      %v511 = vpack.c.b16 %v473, %v471
      %v512 = vpack.c.b16 %v474, %v472
      %v513 = vpack.c.b16 %v477, %v475
      %v514 = vpack.c.b16 %v478, %v476
      %vm551 = vcmask 261120
      %v553 = vsel %vm551, %v353, 0
      %v556 = vsel %vm551, %v356, 0
      %v559 = vsel %vm551, %v359, 0
      %v562 = vsel %vm551, %v362, 0
      %564 = vmatprep.subr.bf16.mxu0 %v480
      %565 = vmatpush1.bf16.msra.mxu0 %v479
      %566 = vmatprep.subr.bf16.mxu0 %v482
      %567 = vmatpush1.bf16.msra.mxu0 %v481
      %568 = vmatprep.subr.bf16.mxu0 %v484
      %569 = vmatpush1.bf16.msra.mxu0 %v483
      %570 = vmatprep.subr.bf16.mxu0 %v486
      %571 = vmatpush1.bf16.msra.mxu0 %v485
      %572 = vmatprep.subr.bf16.mxu0 %v488
      %573 = vmatpush1.bf16.msra.mxu0 %v487
      %574 = vmatprep.subr.bf16.mxu0 %v490
      %575 = vmatpush1.bf16.msra.mxu0 %v489
      %576 = vmatprep.subr.bf16.mxu0 %v492
      %577 = vmatpush1.bf16.msra.mxu0 %v491
      %578 = vmatprep.subr.bf16.mxu0 %v494
      %579 = vmatpush1.bf16.msra.mxu0 %v493
      %580 = vmatprep.subr.bf16.mxu0 %v496
      %581 = vmatpush1.bf16.msra.mxu0 %v495
      %582 = vmatprep.subr.bf16.mxu0 %v498
      %583 = vmatpush1.bf16.msra.mxu0 %v497
      %584 = vmatprep.subr.bf16.mxu0 %v500
      %585 = vmatpush1.bf16.msra.mxu0 %v499
      %586 = vmatprep.subr.bf16.mxu0 %v502
      %587 = vmatpush1.bf16.msra.mxu0 %v501
      %588 = vmatprep.subr.bf16.mxu0 %v504
      %589 = vmatpush1.bf16.msra.mxu0 %v503
      %590 = vmatprep.subr.bf16.mxu0 %v506
      %591 = vmatpush1.bf16.msra.mxu0 %v505
      %592 = vmatprep.subr.bf16.mxu0 %v508
      %593 = vmatpush1.bf16.msra.mxu0 %v507
      %594 = vmatprep.subr.bf16.mxu0 %v510
      %595 = vmatpush1.bf16.msra.mxu0 %v509
      %596 = vmatprep.mubr.bf16.mxu0 %v352
      %597 = vmatmul.mubr.bf16.gmra.mrb[0].mxu0 %v351
      %v598 = vpop.f32.mrb[0].mxu0
      %v599 = vadd.f32 %v274, %v598
      %v600 = vpop.f32.mrb[0].mxu0
      %v601 = vadd.f32 %v274, %v600
      %v602 = vpop.f32.mrb[0].mxu0
      %v603 = vadd.f32 %v279, %v602
      %v604 = vpop.f32.mrb[0].mxu0
      %v605 = vadd.f32 %v279, %v604
      %606 = vmatprep.mubr.bf16.mxu0 %v355
      %607 = vmatmul.mubr.bf16.gmra.mrb[0].mxu0 %v354
      %v608 = vpop.f32.mrb[0].mxu0
      %v609 = vadd.f32 %v284, %v608
      %v610 = vpop.f32.mrb[0].mxu0
      %v611 = vadd.f32 %v284, %v610
      %v612 = vpop.f32.mrb[0].mxu0
      %v613 = vadd.f32 %v289, %v612
      %v614 = vpop.f32.mrb[0].mxu0
      %v615 = vadd.f32 %v289, %v614
      %616 = vmatprep.mubr.bf16.mxu0 %v358
      %617 = vmatmul.mubr.bf16.gmra.mrb[0].mxu0 %v357
      %v618 = vpop.f32.mrb[0].mxu0
      %v619 = vadd.f32 %v294, %v618
      %v620 = vpop.f32.mrb[0].mxu0
      %v621 = vadd.f32 %v294, %v620
      %v622 = vpop.f32.mrb[0].mxu0
      %v623 = vadd.f32 %v299, %v622
      %v624 = vpop.f32.mrb[0].mxu0
      %v625 = vadd.f32 %v299, %v624
      %626 = vmatprep.mubr.bf16.mxu0 %v361
      %627 = vmatmul.mubr.bf16.gmra.mrb[0].mxu0 %v360
      %v628 = vpop.f32.mrb[0].mxu0
      %v629 = vadd.f32 %v304, %v628
      %v630 = vpop.f32.mrb[0].mxu0
      %v631 = vadd.f32 %v304, %v630
      %v632 = vpop.f32.mrb[0].mxu0
      %v633 = vadd.f32 %v309, %v632
      %v634 = vpop.f32.mrb[0].mxu0
      %v635 = vadd.f32 %v309, %v634
      %636 = vdwg.mxu0
      %637 = vmatprep.subr.bf16.mxu0 %v512
      %638 = vmatpush1.bf16.msra.mxu0 %v511
      %639 = vmatprep.subr.bf16.mxu0 %v514
      %640 = vmatpush1.bf16.msra.mxu0 %v513
      %641 = vmatprep.subr.bf16.mxu0 0
      %642 = vmatpush1.bf16.msra.mxu0 0
      %643 = vmatprep.subr.bf16.mxu0 0
      %644 = vmatpush1.bf16.msra.mxu0 0
      %645 = vmatprep.subr.bf16.mxu0 0
      %646 = vmatpush1.bf16.msra.mxu0 0
      %647 = vmatprep.subr.bf16.mxu0 0
      %648 = vmatpush1.bf16.msra.mxu0 0
      %649 = vmatprep.subr.bf16.mxu0 0
      %650 = vmatpush1.bf16.msra.mxu0 0
      %651 = vmatprep.subr.bf16.mxu0 0
      %652 = vmatpush1.bf16.msra.mxu0 0
      %653 = vmatprep.subr.bf16.mxu0 0
      %654 = vmatpush1.bf16.msra.mxu0 0
      %655 = vmatprep.subr.bf16.mxu0 0
      %656 = vmatpush1.bf16.msra.mxu0 0
      %657 = vmatprep.subr.bf16.mxu0 0
      %658 = vmatpush1.bf16.msra.mxu0 0
      %659 = vmatprep.subr.bf16.mxu0 0
      %660 = vmatpush1.bf16.msra.mxu0 0
      %661 = vmatprep.subr.bf16.mxu0 0
      %662 = vmatpush1.bf16.msra.mxu0 0
      %663 = vmatprep.subr.bf16.mxu0 0
      %664 = vmatpush1.bf16.msra.mxu0 0
      %665 = vmatprep.subr.bf16.mxu0 0
      %666 = vmatpush1.bf16.msra.mxu0 0
      %667 = vmatprep.subr.bf16.mxu0 0
      %668 = vmatpush1.bf16.msra.mxu0 0
      %669 = vmatprep.mubr.bf16.mxu0 0
      %670 = vmatmul.mubr.bf16.gmra.mrb[0].mxu0 %v553
      %v671 = vpop.f32.mrb[0].mxu0
      %v672 = vadd.f32 %v599, %v671
      %v673 = vpop.f32.mrb[0].mxu0
      %v674 = vadd.f32 %v601, %v673
      %v675 = vpop.f32.mrb[0].mxu0
      %v676 = vadd.f32 %v603, %v675
      %v677 = vpop.f32.mrb[0].mxu0
      %v678 = vadd.f32 %v605, %v677
      %679 = vmatprep.mubr.bf16.mxu0 0
      %680 = vmatmul.mubr.bf16.gmra.mrb[0].mxu0 %v556
      %v681 = vpop.f32.mrb[0].mxu0
      %v682 = vadd.f32 %v609, %v681
      %v683 = vpop.f32.mrb[0].mxu0
      %v684 = vadd.f32 %v611, %v683
      %v685 = vpop.f32.mrb[0].mxu0
      %v686 = vadd.f32 %v613, %v685
      %v687 = vpop.f32.mrb[0].mxu0
      %v688 = vadd.f32 %v615, %v687
      %689 = vmatprep.mubr.bf16.mxu0 0
      %690 = vmatmul.mubr.bf16.gmra.mrb[0].mxu0 %v559
      %v691 = vpop.f32.mrb[0].mxu0
      %v692 = vadd.f32 %v619, %v691
      %v693 = vpop.f32.mrb[0].mxu0
      %v694 = vadd.f32 %v621, %v693
      %v695 = vpop.f32.mrb[0].mxu0
      %v696 = vadd.f32 %v623, %v695
      %v697 = vpop.f32.mrb[0].mxu0
      %v698 = vadd.f32 %v625, %v697
      %699 = vmatprep.mubr.bf16.mxu0 0
      %700 = vmatmul.mubr.bf16.gmra.mrb[0].mxu0 %v562
      %v701 = vpop.f32.mrb[0].mxu0
      %v702 = vadd.f32 %v629, %v701
      %v703 = vpop.f32.mrb[0].mxu0
      %v704 = vadd.f32 %v631, %v703
      %v705 = vpop.f32.mrb[0].mxu0
      %v706 = vadd.f32 %v633, %v705
      %v707 = vpop.f32.mrb[0].mxu0
      %v708 = vadd.f32 %v635, %v707
      %709 = vdwg.mxu0
      %710 = vst [vmem:[%s208] sm:$0xff] %v672
      %711 = vst [vmem:[%s208 + $0x8] sm:$0xff] %v674
      %712 = vst [vmem:[%s208 + $0x10] sm:$0xff] %v676
      %713 = vst [vmem:[%s208 + $0x18] sm:$0xff] %v678
      %714 = vst [vmem:[%s208 + $0x20] sm:$0xff] %v682
      %715 = vst [vmem:[%s208 + $0x28] sm:$0xff] %v684
      %716 = vst [vmem:[%s208 + $0x30] sm:$0xff] %v686
      %717 = vst [vmem:[%s208 + $0x38] sm:$0xff] %v688
      %718 = vst [vmem:[%s208 + $0x40] sm:$0xff] %v692
      %719 = vst [vmem:[%s208 + $0x48] sm:$0xff] %v694
      %720 = vst [vmem:[%s208 + $0x50] sm:$0xff] %v696
      %721 = vst [vmem:[%s208 + $0x58] sm:$0xff] %v698
      %722 = vst [vmem:[%s208 + $0x60] sm:$0xff] %v702
      %723 = vst [vmem:[%s208 + $0x68] sm:$0xff] %v704
      %724 = vst [vmem:[%s208 + $0x70] sm:$0xff] %v706
      %725 = vst [vmem:[%s208 + $0x78] sm:$0xff] %v708
      %s726 = smul.u32 2, %s19
      %p727 = scmp.lt.s32.totalorder %s18, 1
      %s728 = scalar_select %p727, %s18, 1
      %p729 = scmp.lt.s32.totalorder %s726, 1
      %s730 = scalar_select %p729, %s726, 1
      %s731 = smul.addr %s728, 16
      %s732 = sadd.s32 %s730, %s731
      %s733 = smul.addr %s732, 8
      %s734 = scalar_lea.vmem %s3, %s733
      // Predicated region
      $region33: #{decoder_forward.8} parent=31 // pred_check
        %p735 = pneg %p116
      $region34: #{decoder_forward.8} parent=31 // pred_check_branch
        %737 = sbr.rel (%p735) target = $region36
      $region35: #{decoder_forward.8} parent=31 // pred_region
        %s738 = smul.u32 2, %s19
      $region36: #{decoder_forward.8} parent=31 // pred_fallthru
        _
    $region32: #{decoder_forward.8} parent=5 // pred_fallthru
      _
    %p739 = scmp.le.s32.totalorder 2, %s9
    // Predicated region
    $region37: #{decoder_forward.8} parent=5 // pred_check
      %p740 = pneg %p739
    $region38: #{decoder_forward.8} parent=5 // pred_check_branch
      %742 = sbr.rel (%p740) target = $region40
    $region39: #{decoder_forward.8} parent=5 // pred_region
      %s743 = ssub.s32 %s9, 2
      // Predicated region
      $region41: #{decoder_forward.8} parent=39 // pred_check
        %p744 = pneg %p122
      $region42: #{decoder_forward.8} parent=39 // pred_check_branch
        %746 = sbr.rel (%p744) target = $region44
      $region43: #{decoder_forward.8} parent=39 // pred_region
        %s747 = smul.u32 2, %s21
        %p748 = scmp.lt.s32.totalorder %s20, 1
        %s749 = scalar_select %p748, %s20, 1
        %p750 = scmp.lt.s32.totalorder %s747, 1
        %s751 = scalar_select %p750, %s747, 1
        %s752 = smul.addr %s749, 16
        %s753 = sadd.s32 %s751, %s752
        %s754 = smul.addr %s753, 8
        %s755 = scalar_lea.vmem %s3, %s754
      $region44: #{decoder_forward.8} parent=39 // pred_fallthru
        _
    $region40: #{decoder_forward.8} parent=5 // pred_fallthru
      _
  $region6: #{decoder_forward.8} parent=0 // loop_footer
    %s13 = sadd.s32 1, %s9
  $region7: #{decoder_forward.8} parent=0 // loop_footer_branch
    %8 = sbr.rel target = $region3
  $region8: #{decoder_forward.8} parent=0 // loop_exit
    _

// kernel: decoder_forward.9
$region0: #{decoder_forward.9}
  #allocation0 [shape = 'u32[]', space=smem, size = 0x4, offset = 0x4, fixed_abs, tag = 'smem constant byte address 0x4 - core index']
  #allocation1 [shape = 'u32[144,128]{1,0:T(1,128)}', space=vmem, size = 0x12000, scoped, tag = 'internal scratch']
  %s0 = inlined_call_operand.vmem [shape: bf16[2,144,1024], index: 0, kind: input, shape index: {}]
  %s1 = inlined_call_operand.vmem [shape: bf16[12,144], index: 1, kind: input, shape index: {}]
  %s2 = inlined_call_operand.vmem [shape: f32[12,1], index: 2, kind: input, shape index: {}]
  %s3 = inlined_call_operand.vmem [shape: f32[2,12,1024], index: 3, kind: output, shape index: {}]
  %s4 = sld [smem:[#allocation0]]
  $region87: #{decoder_forward.9} parent=0
    _
  %s6 = ssub.s32 1, %s4
  %s7 = scalar_select 0, %s6, %s4
  $region1: #{decoder_forward.9} parent=0
    #allocation2 [shape = 'u8[294912]{0}', space=vmem, size = 0x48000, scoped, tag = 'input window, operand 0']
    #allocation3 [shape = 'u8[65536]{0}', space=vmem, size = 0x10000, scoped, tag = 'output window, operand 0']
    loop: start=0, step=1, limit=6
    $region2: #{decoder_forward.9} parent=1 // loop_pre_header
      _
    $region3: #{decoder_forward.9} parent=1 // loop_header
      %s9 = sphi 0, %s13
      %p10 = scmp.ge.s32.totalorder %s9, 6
      %s16 = sphi 0, %s28
      %s17 = sphi 0, %s24
      %s18 = sphi 0, %s16
      %s19 = sphi 0, %s17
      %s20 = sphi 0, %s18
      %s21 = sphi 0, %s19
      %s33 = sphi 0, %s35
      %s36 = sphi 0, %s33
      %s37 = sphi 0, %s36
      %s53 = sphi 0, %s37
      %s57 = sphi 0, %s57
      %s59 = sphi 0, %s57
      %s60 = sphi 0, %s59
      %s74 = sphi 0, %s60
      %s78 = sphi 0, %s78
      %s80 = sphi 0, %s78
      %s81 = sphi 0, %s80
      %s95 = sphi 0, %s81
      %s103 = sphi 0, %s105
      %s106 = sphi 0, %s103
      %s107 = sphi 0, %s106
      %s123 = sphi 0, %s107
    $region4: #{decoder_forward.9} parent=1 // loop_header_branch
      %12 = sbr.rel (%p10) target = $region8
    $region5: #{decoder_forward.9} parent=1 // loop_body
      %s14 = ssub.s32 %s9, 1
      %s15 = ssub.s32 %s9, 2
      %s22 = sadd.s32 1, %s17
      %p23 = scmp.ge.s32.totalorder %s22, 2
      %s24 = scalar_select %p23, 0, %s22
      %s25 = sadd.s32 1, %s16
      %s26 = scalar_select %p23, %s25, %s16
      %p27 = scmp.ge.s32.totalorder %s26, 2
      %s28 = scalar_select %p27, 0, %s26
      %s29 = ssub.s32 %s16, %s28
      %s30 = ssub.s32 %s17, %s24
      %s31 = sor.u32 %s29, %s30
      %p32 = scmp.eq.s32.totalorder %s31, 0
      %s34 = sadd.s32 %s33, 1
      %s35 = scalar_select %p32, %s33, %s34
      %p38 = pneg %p32
      %p39 = scmp.eq.s32.totalorder %s9, 3
      %p40 = por %p38, %p39
      %p41 = scmp.ne.s32.totalorder %s33, %s36
      %p42 = scmp.eq.s32.totalorder %s9, 0
      %p43 = por %p41, %p42
      %p44 = scmp.ne.s32.totalorder %s33, %s36
      %p45 = scmp.eq.s32.totalorder %s14, 3
      %p46 = por %p44, %p45
      %p47 = scmp.ne.s32.totalorder %s36, %s37
      %p48 = scmp.eq.s32.totalorder %s14, 0
      %p49 = por %p47, %p48
      %p50 = scmp.ne.s32.totalorder %s36, %s37
      %p51 = scmp.eq.s32.totalorder %s15, 3
      %p52 = por %p50, %p51
      %p54 = scmp.ne.s32.totalorder %s37, %s53
      %p55 = scmp.eq.s32.totalorder %s15, 0
      %p56 = por %p54, %p55
      %s58 = sadd.s32 %s57, 1
      %p61 = scmp.eq.s32.totalorder %s9, 3
      %p62 = scmp.ne.s32.totalorder %s57, %s59
      %p63 = scmp.eq.s32.totalorder %s9, 0
      %p64 = por %p62, %p63
      %p65 = scmp.ne.s32.totalorder %s57, %s59
      %p66 = scmp.eq.s32.totalorder %s14, 3
      %p67 = por %p65, %p66
      %p68 = scmp.ne.s32.totalorder %s59, %s60
      %p69 = scmp.eq.s32.totalorder %s14, 0
      %p70 = por %p68, %p69
      %p71 = scmp.ne.s32.totalorder %s59, %s60
      %p72 = scmp.eq.s32.totalorder %s15, 3
      %p73 = por %p71, %p72
      %p75 = scmp.ne.s32.totalorder %s60, %s74
      %p76 = scmp.eq.s32.totalorder %s15, 0
      %p77 = por %p75, %p76
      %s79 = sadd.s32 %s78, 1
      %p82 = scmp.eq.s32.totalorder %s9, 3
      %p83 = scmp.ne.s32.totalorder %s78, %s80
      %p84 = scmp.eq.s32.totalorder %s9, 0
      %p85 = por %p83, %p84
      %p86 = scmp.ne.s32.totalorder %s78, %s80
      %p87 = scmp.eq.s32.totalorder %s14, 3
      %p88 = por %p86, %p87
      %p89 = scmp.ne.s32.totalorder %s80, %s81
      %p90 = scmp.eq.s32.totalorder %s14, 0
      %p91 = por %p89, %p90
      %p92 = scmp.ne.s32.totalorder %s80, %s81
      %p93 = scmp.eq.s32.totalorder %s15, 3
      %p94 = por %p92, %p93
      %p96 = scmp.ne.s32.totalorder %s81, %s95
      %p97 = scmp.eq.s32.totalorder %s15, 0
      %p98 = por %p96, %p97
      %s99 = ssub.s32 %s16, %s28
      %s100 = ssub.s32 %s17, %s24
      %s101 = sor.u32 %s99, %s100
      %p102 = scmp.eq.s32.totalorder %s101, 0
      %s104 = sadd.s32 %s103, 1
      %s105 = scalar_select %p102, %s103, %s104
      %p108 = pneg %p102
      %p109 = scmp.eq.s32.totalorder %s9, 3
      %p110 = por %p108, %p109
      %p111 = scmp.ne.s32.totalorder %s103, %s106
      %p112 = scmp.eq.s32.totalorder %s9, 0
      %p113 = por %p111, %p112
      %p114 = scmp.ne.s32.totalorder %s103, %s106
      %p115 = scmp.eq.s32.totalorder %s14, 3
      %p116 = por %p114, %p115
      %p117 = scmp.ne.s32.totalorder %s106, %s107
      %p118 = scmp.eq.s32.totalorder %s14, 0
      %p119 = por %p117, %p118
      %p120 = scmp.ne.s32.totalorder %s106, %s107
      %p121 = scmp.eq.s32.totalorder %s15, 3
      %p122 = por %p120, %p121
      %p124 = scmp.ne.s32.totalorder %s107, %s123
      %p125 = scmp.eq.s32.totalorder %s15, 0
      %p126 = por %p124, %p125
      %p127 = scmp.le.s32.totalorder 1, %s9
      %p128 = scmp.lt.s32.totalorder %s9, 5
      %p129 = pnand %p127, %p128
      %p130 = pneg %p129
      // Predicated region
      $region9: #{decoder_forward.9} parent=5 // pred_check
        _
      $region10: #{decoder_forward.9} parent=5 // pred_check_branch
        %132 = sbr.rel (%p129) target = $region12
      $region11: #{decoder_forward.9} parent=5 // pred_region
        %s133 = ssub.s32 %s9, 1
        // Predicated region
        $region13: #{decoder_forward.9} parent=11 // pred_check
          %p134 = pneg %p70
        $region14: #{decoder_forward.9} parent=11 // pred_check_branch
          %136 = sbr.rel (%p134) target = $region16
        $region15: #{decoder_forward.9} parent=11 // pred_region
          _
        $region16: #{decoder_forward.9} parent=11 // pred_fallthru
          _
        // Predicated region
        $region17: #{decoder_forward.9} parent=11 // pred_check
          %p137 = pneg %p91
        $region18: #{decoder_forward.9} parent=11 // pred_check_branch
          %139 = sbr.rel (%p137) target = $region20
        $region19: #{decoder_forward.9} parent=11 // pred_region
          _
        $region20: #{decoder_forward.9} parent=11 // pred_fallthru
          _
      $region12: #{decoder_forward.9} parent=5 // pred_fallthru
        _
      %p140 = scmp.lt.s32.totalorder %s9, 4
      // Predicated region
      $region21: #{decoder_forward.9} parent=5 // pred_check
        %p141 = pneg %p140
      $region22: #{decoder_forward.9} parent=5 // pred_check_branch
        %143 = sbr.rel (%p141) target = $region24
      $region23: #{decoder_forward.9} parent=5 // pred_region
        // Predicated region
        $region25: #{decoder_forward.9} parent=23 // pred_check
          %p144 = pneg %p43
        $region26: #{decoder_forward.9} parent=23 // pred_check_branch
          %146 = sbr.rel (%p144) target = $region28
        $region27: #{decoder_forward.9} parent=23 // pred_region
          %s147 = sand.u32 %s33, 1
          %s148 = sand.u32 %s33, 1
          %s149 = smul.addr %s148, 288
          %s150 = scalar_lea.vmem [#allocation2], %s149
          %s151 = smul.u32 4, %s17
          %s152 = smul.addr %s16, 144
          %s153 = sadd.s32 %s151, %s152
          %s154 = smul.addr %s153, 4
          %s155 = scalar_lea.vmem %s0, %s154
          // Predicated region
          $region29: #{decoder_forward.9} parent=27 // pred_check
            _
          $region30: #{decoder_forward.9} parent=27 // pred_check_branch
            %157 = sbr.rel (0) target = $region32
          $region31: #{decoder_forward.9} parent=27 // pred_region
            // Predicated region
            $region33: #{decoder_forward.9} parent=31 // pred_check
              _
            $region34: #{decoder_forward.9} parent=31 // pred_check_branch
              %159 = sbr.rel (0) target = $region36
            $region35: #{decoder_forward.9} parent=31 // pred_region
              loop: start=0, step=1, limit=1
              $region37: #{decoder_forward.9} parent=35 // loop_pre_header
                _
              $region38: #{decoder_forward.9} parent=35 // loop_header
                %s161 = sphi 0, %s165
                %p162 = scmp.ge.s32.totalorder %s161, 1
                %s166 = sphi %s155, %s155
                %s167 = sphi %s150, %s150
              $region39: #{decoder_forward.9} parent=35 // loop_header_branch
                %164 = sbr.rel (%p162) target = $region43
              $region40: #{decoder_forward.9} parent=35 // loop_body
                %v168 = vld [vmem:[%s166] sm:$0xff]
                %169 = vst [vmem:[%s167] sm:$0xff] %v168
                %v170 = vld [vmem:[%s166 + $0x8] sm:$0xff]
                %171 = vst [vmem:[%s167 + $0x8] sm:$0xff] %v170
                %v172 = vld [vmem:[%s166 + $0x20] sm:$0xff]
                %173 = vst [vmem:[%s167 + $0x10] sm:$0xff] %v172
                %v174 = vld [vmem:[%s166 + $0x28] sm:$0xff]
                %175 = vst [vmem:[%s167 + $0x18] sm:$0xff] %v174
                %v176 = vld [vmem:[%s166 + $0x40] sm:$0xff]
                %177 = vst [vmem:[%s167 + $0x20] sm:$0xff] %v176
                %v178 = vld [vmem:[%s166 + $0x48] sm:$0xff]
                %179 = vst [vmem:[%s167 + $0x28] sm:$0xff] %v178
                %v180 = vld [vmem:[%s166 + $0x60] sm:$0xff]
                %181 = vst [vmem:[%s167 + $0x30] sm:$0xff] %v180
                %v182 = vld [vmem:[%s166 + $0x68] sm:$0xff]
                %183 = vst [vmem:[%s167 + $0x38] sm:$0xff] %v182
                %v184 = vld [vmem:[%s166 + $0x80] sm:$0xff]
                %185 = vst [vmem:[%s167 + $0x40] sm:$0xff] %v184
                %v186 = vld [vmem:[%s166 + $0x88] sm:$0xff]
                %187 = vst [vmem:[%s167 + $0x48] sm:$0xff] %v186
                %v188 = vld [vmem:[%s166 + $0xa0] sm:$0xff]
                %189 = vst [vmem:[%s167 + $0x50] sm:$0xff] %v188
                %v190 = vld [vmem:[%s166 + $0xa8] sm:$0xff]
                %191 = vst [vmem:[%s167 + $0x58] sm:$0xff] %v190
                %v192 = vld [vmem:[%s166 + $0xc0] sm:$0xff]
                %193 = vst [vmem:[%s167 + $0x60] sm:$0xff] %v192
                %v194 = vld [vmem:[%s166 + $0xc8] sm:$0xff]
                %195 = vst [vmem:[%s167 + $0x68] sm:$0xff] %v194
                %v196 = vld [vmem:[%s166 + $0xe0] sm:$0xff]
                %197 = vst [vmem:[%s167 + $0x70] sm:$0xff] %v196
                %v198 = vld [vmem:[%s166 + $0xe8] sm:$0xff]
                %199 = vst [vmem:[%s167 + $0x78] sm:$0xff] %v198
                %v200 = vld [vmem:[%s166 + $0x100] sm:$0xff]
                %201 = vst [vmem:[%s167 + $0x80] sm:$0xff] %v200
                %v202 = vld [vmem:[%s166 + $0x108] sm:$0xff]
                %203 = vst [vmem:[%s167 + $0x88] sm:$0xff] %v202
                %v204 = vld [vmem:[%s166 + $0x120] sm:$0xff]
                %205 = vst [vmem:[%s167 + $0x90] sm:$0xff] %v204
                %v206 = vld [vmem:[%s166 + $0x128] sm:$0xff]
                %207 = vst [vmem:[%s167 + $0x98] sm:$0xff] %v206
                %v208 = vld [vmem:[%s166 + $0x140] sm:$0xff]
                %209 = vst [vmem:[%s167 + $0xa0] sm:$0xff] %v208
                %v210 = vld [vmem:[%s166 + $0x148] sm:$0xff]
                %211 = vst [vmem:[%s167 + $0xa8] sm:$0xff] %v210
                %v212 = vld [vmem:[%s166 + $0x160] sm:$0xff]
                %213 = vst [vmem:[%s167 + $0xb0] sm:$0xff] %v212
                %v214 = vld [vmem:[%s166 + $0x168] sm:$0xff]
                %215 = vst [vmem:[%s167 + $0xb8] sm:$0xff] %v214
                %v216 = vld [vmem:[%s166 + $0x180] sm:$0xff]
                %217 = vst [vmem:[%s167 + $0xc0] sm:$0xff] %v216
                %v218 = vld [vmem:[%s166 + $0x188] sm:$0xff]
                %219 = vst [vmem:[%s167 + $0xc8] sm:$0xff] %v218
                %v220 = vld [vmem:[%s166 + $0x1a0] sm:$0xff]
                %221 = vst [vmem:[%s167 + $0xd0] sm:$0xff] %v220
                %v222 = vld [vmem:[%s166 + $0x1a8] sm:$0xff]
                %223 = vst [vmem:[%s167 + $0xd8] sm:$0xff] %v222
                %v224 = vld [vmem:[%s166 + $0x1c0] sm:$0xff]
                %225 = vst [vmem:[%s167 + $0xe0] sm:$0xff] %v224
                %v226 = vld [vmem:[%s166 + $0x1c8] sm:$0xff]
                %227 = vst [vmem:[%s167 + $0xe8] sm:$0xff] %v226
                %v228 = vld [vmem:[%s166 + $0x1e0] sm:$0xff]
                %229 = vst [vmem:[%s167 + $0xf0] sm:$0xff] %v228
                %v230 = vld [vmem:[%s166 + $0x1e8] sm:$0xff]
                %231 = vst [vmem:[%s167 + $0xf8] sm:$0xff] %v230
                %v232 = vld [vmem:[%s166 + $0x200] sm:$0xff]
                %233 = vst [vmem:[%s167 + $0x100] sm:$0xff] %v232
                %v234 = vld [vmem:[%s166 + $0x208] sm:$0xff]
                %235 = vst [vmem:[%s167 + $0x108] sm:$0xff] %v234
                %v236 = vld [vmem:[%s166 + $0x220] sm:$0xff]
                %237 = vst [vmem:[%s167 + $0x110] sm:$0xff] %v236
                %v238 = vld [vmem:[%s166 + $0x228] sm:$0xff]
                %239 = vst [vmem:[%s167 + $0x118] sm:$0xff] %v238
              $region41: #{decoder_forward.9} parent=35 // loop_footer
                %s165 = sadd.s32 1, %s161
              $region42: #{decoder_forward.9} parent=35 // loop_footer_branch
                %160 = sbr.rel target = $region38
              $region43: #{decoder_forward.9} parent=35 // loop_exit
                _
            $region36: #{decoder_forward.9} parent=31 // pred_fallthru
              _
            // Predicated region
            $region44: #{decoder_forward.9} parent=31 // pred_check
              _
            $region45: #{decoder_forward.9} parent=31 // pred_check_branch
              %241 = sbr.rel target = $region47
            $region46: #{decoder_forward.9} parent=31 // pred_region
              _
            $region47: #{decoder_forward.9} parent=31 // pred_fallthru
              _
          $region32: #{decoder_forward.9} parent=27 // pred_fallthru
            _
          %242 = vnop
        $region28: #{decoder_forward.9} parent=23 // pred_fallthru
          _
      $region24: #{decoder_forward.9} parent=5 // pred_fallthru
        _
      %p243 = scmp.le.s32.totalorder 1, %s9
      %p244 = scmp.lt.s32.totalorder %s9, 5
      %p245 = pnand %p243, %p244
      %p246 = pneg %p245
      // Predicated region
      $region48: #{decoder_forward.9} parent=5 // pred_check
        _
      $region49: #{decoder_forward.9} parent=5 // pred_check_branch
        %248 = sbr.rel (%p245) target = $region51
      $region50: #{decoder_forward.9} parent=5 // pred_region
        %s249 = ssub.s32 %s9, 1
        %s250 = sand.u32 %s36, 1
        %s251 = sand.u32 %s36, 1
        %s252 = smul.addr %s251, 288
        %s253 = scalar_lea.vmem [#allocation2], %s252
        // Predicated region
        $region52: #{decoder_forward.9} parent=50 // pred_check
          %p254 = pneg %p49
        $region53: #{decoder_forward.9} parent=50 // pred_check_branch
          %256 = sbr.rel (%p254) target = $region55
        $region54: #{decoder_forward.9} parent=50 // pred_region
          _
        $region55: #{decoder_forward.9} parent=50 // pred_fallthru
          _
        %s257 = sand.u32 %s36, 1
        %s258 = sand.u32 %s36, 1
        %s259 = smul.addr %s258, 288
        %s260 = scalar_lea.vmem [#allocation2], %s259
        %p261 = pneg %p49
        %p262 = pneg %p46
        %p263 = pneg %p70
        %p264 = pneg %p67
        %p265 = pneg %p91
        %p266 = pneg %p88
        %p267 = pneg %p119
        %p268 = pneg %p116
        %s269 = sand.u32 %s106, 1
        %s270 = sand.u32 %s106, 1
        %s271 = smul.addr %s270, 64
        %s272 = scalar_lea.vmem [#allocation3], %s271
        %s273 = smul.u32 4, %s19
        %s274 = smul.u32 4, %s19
        %v276 = vld [vmem:[%s1] sm:$0xff]
        %v277 = vld [vmem:[%s1 + $0x8] sm:$0x33]
        %v278 = vld [vmem:[%s253] sm:$0xff]
        %v279 = vld [vmem:[%s253 + $0x8] sm:$0xff]
        %v280 = vld [vmem:[%s253 + $0x10] sm:$0xff]
        %v281 = vld [vmem:[%s253 + $0x18] sm:$0xff]
        %v282 = vld [vmem:[%s253 + $0x20] sm:$0xff]
        %v283 = vld [vmem:[%s253 + $0x28] sm:$0xff]
        %v284 = vld [vmem:[%s253 + $0x30] sm:$0xff]
        %v285 = vld [vmem:[%s253 + $0x38] sm:$0xff]
        %v286 = vld [vmem:[%s253 + $0x40] sm:$0xff]
        %v287 = vld [vmem:[%s253 + $0x48] sm:$0xff]
        %v288 = vld [vmem:[%s253 + $0x50] sm:$0xff]
        %v289 = vld [vmem:[%s253 + $0x58] sm:$0xff]
        %v290 = vld [vmem:[%s253 + $0x60] sm:$0xff]
        %v291 = vld [vmem:[%s253 + $0x68] sm:$0xff]
        %v292 = vld [vmem:[%s253 + $0x70] sm:$0xff]
        %v293 = vld [vmem:[%s253 + $0x78] sm:$0xff]
        %v294 = vld [vmem:[%s253 + $0x80] sm:$0xff]
        %v295 = vld [vmem:[%s253 + $0x88] sm:$0xff]
        %v296 = vld [vmem:[%s253 + $0x90] sm:$0xff]
        %v297 = vld [vmem:[%s253 + $0x98] sm:$0xff]
        %v298 = vld [vmem:[%s253 + $0xa0] sm:$0xff]
        %v299 = vld [vmem:[%s253 + $0xa8] sm:$0xff]
        %v300 = vld [vmem:[%s253 + $0xb0] sm:$0xff]
        %v301 = vld [vmem:[%s253 + $0xb8] sm:$0xff]
        %v302 = vld [vmem:[%s253 + $0xc0] sm:$0xff]
        %v303 = vld [vmem:[%s253 + $0xc8] sm:$0xff]
        %v304 = vld [vmem:[%s253 + $0xd0] sm:$0xff]
        %v305 = vld [vmem:[%s253 + $0xd8] sm:$0xff]
        %v306 = vld [vmem:[%s253 + $0xe0] sm:$0xff]
        %v307 = vld [vmem:[%s253 + $0xe8] sm:$0xff]
        %v308 = vld [vmem:[%s253 + $0xf0] sm:$0xff]
        %v309 = vld [vmem:[%s253 + $0xf8] sm:$0xff]
        %v310 = vld [vmem:[%s253 + $0x100] sm:$0xff]
        %v311 = vld [vmem:[%s253 + $0x108] sm:$0xff]
        %v312 = vld [vmem:[%s253 + $0x110] sm:$0xff]
        %v313 = vld [vmem:[%s253 + $0x118] sm:$0xff]
        %v314 = vld [vmem:[%s2] sm:$0xff]
        %v315 = vld [vmem:[%s2 + $0x8] sm:$0xf]
        %317 = vset.pattern.permute.xlu0 0
        %318 = vperm.xlu0 %317, %v314
        %v319 = vpop.permute.xlu0 %318
        %322 = vset.pattern.permute.xlu0 0
        %323 = vperm.xlu0 %322, %v315
        %v324 = vpop.permute.xlu0 %323
        %v328 = vunpack.c.l.b16 %v276
        %v329 = vunpack.c.h.b16 %v276
        %v330 = vunpack.c.l.b16 %v277
        %v331 = vunpack.c.h.b16 %v277
        %v332 = vpack.c.b16 %v330, %v328
        %v333 = vpack.c.b16 %v331, %v329
        %v371 = vunpack.c.l.b16 %v278
        %v372 = vunpack.c.h.b16 %v278
        %v373 = vunpack.c.l.b16 %v279
        %v374 = vunpack.c.h.b16 %v279
        %v375 = vunpack.c.l.b16 %v280
        %v376 = vunpack.c.h.b16 %v280
        %v377 = vunpack.c.l.b16 %v281
        %v378 = vunpack.c.h.b16 %v281
        %v379 = vunpack.c.l.b16 %v282
        %v380 = vunpack.c.h.b16 %v282
        %v381 = vunpack.c.l.b16 %v283
        %v382 = vunpack.c.h.b16 %v283
        %v383 = vunpack.c.l.b16 %v284
        %v384 = vunpack.c.h.b16 %v284
        %v385 = vunpack.c.l.b16 %v285
        %v386 = vunpack.c.h.b16 %v285
        %v387 = vunpack.c.l.b16 %v286
        %v388 = vunpack.c.h.b16 %v286
        %v389 = vunpack.c.l.b16 %v287
        %v390 = vunpack.c.h.b16 %v287
        %v391 = vunpack.c.l.b16 %v288
        %v392 = vunpack.c.h.b16 %v288
        %v393 = vunpack.c.l.b16 %v289
        %v394 = vunpack.c.h.b16 %v289
        %v395 = vunpack.c.l.b16 %v290
        %v396 = vunpack.c.h.b16 %v290
        %v397 = vunpack.c.l.b16 %v291
        %v398 = vunpack.c.h.b16 %v291
        %v399 = vunpack.c.l.b16 %v292
        %v400 = vunpack.c.h.b16 %v292
        %v401 = vunpack.c.l.b16 %v293
        %v402 = vunpack.c.h.b16 %v293
        %v403 = vunpack.c.l.b16 %v294
        %v404 = vunpack.c.h.b16 %v294
        %v405 = vunpack.c.l.b16 %v295
        %v406 = vunpack.c.h.b16 %v295
        %v407 = vunpack.c.l.b16 %v296
        %v408 = vunpack.c.h.b16 %v296
        %v409 = vunpack.c.l.b16 %v297
        %v410 = vunpack.c.h.b16 %v297
        %v411 = vunpack.c.l.b16 %v298
        %v412 = vunpack.c.h.b16 %v298
        %v413 = vunpack.c.l.b16 %v299
        %v414 = vunpack.c.h.b16 %v299
        %v415 = vunpack.c.l.b16 %v300
        %v416 = vunpack.c.h.b16 %v300
        %v417 = vunpack.c.l.b16 %v301
        %v418 = vunpack.c.h.b16 %v301
        %v419 = vunpack.c.l.b16 %v302
        %v420 = vunpack.c.h.b16 %v302
        %v421 = vunpack.c.l.b16 %v303
        %v422 = vunpack.c.h.b16 %v303
        %v423 = vunpack.c.l.b16 %v304
        %v424 = vunpack.c.h.b16 %v304
        %v425 = vunpack.c.l.b16 %v305
        %v426 = vunpack.c.h.b16 %v305
        %v427 = vunpack.c.l.b16 %v306
        %v428 = vunpack.c.h.b16 %v306
        %v429 = vunpack.c.l.b16 %v307
        %v430 = vunpack.c.h.b16 %v307
        %v431 = vunpack.c.l.b16 %v308
        %v432 = vunpack.c.h.b16 %v308
        %v433 = vunpack.c.l.b16 %v309
        %v434 = vunpack.c.h.b16 %v309
        %v435 = vunpack.c.l.b16 %v310
        %v436 = vunpack.c.h.b16 %v310
        %v437 = vunpack.c.l.b16 %v311
        %v438 = vunpack.c.h.b16 %v311
        %v439 = vunpack.c.l.b16 %v312
        %v440 = vunpack.c.h.b16 %v312
        %v441 = vunpack.c.l.b16 %v313
        %v442 = vunpack.c.h.b16 %v313
        %v443 = vpack.c.b16 %v375, %v371
        %v444 = vpack.c.b16 %v376, %v372
        %v445 = vpack.c.b16 %v377, %v373
        %v446 = vpack.c.b16 %v378, %v374
        %v447 = vpack.c.b16 %v383, %v379
        %v448 = vpack.c.b16 %v384, %v380
        %v449 = vpack.c.b16 %v385, %v381
        %v450 = vpack.c.b16 %v386, %v382
        %v451 = vpack.c.b16 %v391, %v387
        %v452 = vpack.c.b16 %v392, %v388
        %v453 = vpack.c.b16 %v393, %v389
        %v454 = vpack.c.b16 %v394, %v390
        %v455 = vpack.c.b16 %v399, %v395
        %v456 = vpack.c.b16 %v400, %v396
        %v457 = vpack.c.b16 %v401, %v397
        %v458 = vpack.c.b16 %v402, %v398
        %v459 = vpack.c.b16 %v407, %v403
        %v460 = vpack.c.b16 %v408, %v404
        %v461 = vpack.c.b16 %v409, %v405
        %v462 = vpack.c.b16 %v410, %v406
        %v463 = vpack.c.b16 %v415, %v411
        %v464 = vpack.c.b16 %v416, %v412
        %v465 = vpack.c.b16 %v417, %v413
        %v466 = vpack.c.b16 %v418, %v414
        %v467 = vpack.c.b16 %v423, %v419
        %v468 = vpack.c.b16 %v424, %v420
        %v469 = vpack.c.b16 %v425, %v421
        %v470 = vpack.c.b16 %v426, %v422
        %v471 = vpack.c.b16 %v431, %v427
        %v472 = vpack.c.b16 %v432, %v428
        %v473 = vpack.c.b16 %v433, %v429
        %v474 = vpack.c.b16 %v434, %v430
        %v475 = vpack.c.b16 %v439, %v435
        %v476 = vpack.c.b16 %v440, %v436
        %v477 = vpack.c.b16 %v441, %v437
        %v478 = vpack.c.b16 %v442, %v438
        %vm515 = vcmask 130048
        %v517 = vsel %vm515, %v333, 0
        %519 = vmatprep.subr.bf16.mxu0 %v444
        %520 = vmatpush1.bf16.msra.mxu0 %v443
        %521 = vmatprep.subr.bf16.mxu0 %v448
        %522 = vmatpush1.bf16.msra.mxu0 %v447
        %523 = vmatprep.subr.bf16.mxu0 %v452
        %524 = vmatpush1.bf16.msra.mxu0 %v451
        %525 = vmatprep.subr.bf16.mxu0 %v456
        %526 = vmatpush1.bf16.msra.mxu0 %v455
        %527 = vmatprep.subr.bf16.mxu0 %v460
        %528 = vmatpush1.bf16.msra.mxu0 %v459
        %529 = vmatprep.subr.bf16.mxu0 %v464
        %530 = vmatpush1.bf16.msra.mxu0 %v463
        %531 = vmatprep.subr.bf16.mxu0 %v468
        %532 = vmatpush1.bf16.msra.mxu0 %v467
        %533 = vmatprep.subr.bf16.mxu0 %v472
        %534 = vmatpush1.bf16.msra.mxu0 %v471
        %535 = vmatprep.subr.bf16.mxu0 %v476
        %536 = vmatpush1.bf16.msra.mxu0 %v475
        %537 = vmatprep.subr.bf16.mxu0 0
        %538 = vmatpush1.bf16.msra.mxu0 0
        %539 = vmatprep.subr.bf16.mxu0 0
        %540 = vmatpush1.bf16.msra.mxu0 0
        %541 = vmatprep.subr.bf16.mxu0 0
        %542 = vmatpush1.bf16.msra.mxu0 0
        %543 = vmatprep.subr.bf16.mxu0 0
        %544 = vmatpush1.bf16.msra.mxu0 0
        %545 = vmatprep.subr.bf16.mxu0 0
        %546 = vmatpush1.bf16.msra.mxu0 0
        %547 = vmatprep.subr.bf16.mxu0 0
        %548 = vmatpush1.bf16.msra.mxu0 0
        %549 = vmatprep.subr.bf16.mxu0 0
        %550 = vmatpush1.bf16.msra.mxu0 0
        %551 = vmatprep.mubr.bf16.mxu0 %v517
        %552 = vmatmul.mubr.bf16.gmra.mrb[0].mxu0 %v332
        %v553 = vpop.f32.mrb[0].mxu0
        %v554 = vadd.f32 %v319, %v553
        %v555 = vpop.f32.mrb[0].mxu0
        %v556 = vadd.f32 %v319, %v555
        %v557 = vpop.f32.mrb[0].mxu0
        %v558 = vadd.f32 %v324, %v557
        %v559 = vpop.f32.mrb[0].mxu0
        %v560 = vadd.f32 %v324, %v559
        %561 = vdwg.mxu0
        %562 = vmatprep.subr.bf16.mxu0 %v446
        %563 = vmatpush1.bf16.msra.mxu0 %v445
        %564 = vmatprep.subr.bf16.mxu0 %v450
        %565 = vmatpush1.bf16.msra.mxu0 %v449
        %566 = vmatprep.subr.bf16.mxu0 %v454
        %567 = vmatpush1.bf16.msra.mxu0 %v453
        %568 = vmatprep.subr.bf16.mxu0 %v458
        %569 = vmatpush1.bf16.msra.mxu0 %v457
        %570 = vmatprep.subr.bf16.mxu0 %v462
        %571 = vmatpush1.bf16.msra.mxu0 %v461
        %572 = vmatprep.subr.bf16.mxu0 %v466
        %573 = vmatpush1.bf16.msra.mxu0 %v465
        %574 = vmatprep.subr.bf16.mxu0 %v470
        %575 = vmatpush1.bf16.msra.mxu0 %v469
        %576 = vmatprep.subr.bf16.mxu0 %v474
        %577 = vmatpush1.bf16.msra.mxu0 %v473
        %578 = vmatprep.subr.bf16.mxu0 %v478
        %579 = vmatpush1.bf16.msra.mxu0 %v477
        %580 = vmatprep.subr.bf16.mxu0 0
        %581 = vmatpush1.bf16.msra.mxu0 0
        %582 = vmatprep.subr.bf16.mxu0 0
        %583 = vmatpush1.bf16.msra.mxu0 0
        %584 = vmatprep.subr.bf16.mxu0 0
        %585 = vmatpush1.bf16.msra.mxu0 0
        %586 = vmatprep.subr.bf16.mxu0 0
        %587 = vmatpush1.bf16.msra.mxu0 0
        %588 = vmatprep.subr.bf16.mxu0 0
        %589 = vmatpush1.bf16.msra.mxu0 0
        %590 = vmatprep.subr.bf16.mxu0 0
        %591 = vmatpush1.bf16.msra.mxu0 0
        %592 = vmatprep.subr.bf16.mxu0 0
        %593 = vmatpush1.bf16.msra.mxu0 0
        %594 = vmatprep.mubr.bf16.mxu0 %v517
        %595 = vmatmul.mubr.bf16.gmra.mrb[0].mxu0 %v332
        %v596 = vpop.f32.mrb[0].mxu0
        %v597 = vadd.f32 %v319, %v596
        %v598 = vpop.f32.mrb[0].mxu0
        %v599 = vadd.f32 %v319, %v598
        %v600 = vpop.f32.mrb[0].mxu0
        %v601 = vadd.f32 %v324, %v600
        %v602 = vpop.f32.mrb[0].mxu0
        %v603 = vadd.f32 %v324, %v602
        %604 = vdwg.mxu0
        %605 = vst [vmem:[%s272] sm:$0xff] %v554
        %606 = vst [vmem:[%s272 + $0x8] sm:$0xff] %v556
        %607 = vst [vmem:[%s272 + $0x10] sm:$0xff] %v597
        %608 = vst [vmem:[%s272 + $0x18] sm:$0xff] %v599
        %609 = vst [vmem:[%s272 + $0x20] sm:$0xf] %v558
        %610 = vst [vmem:[%s272 + $0x28] sm:$0xf] %v560
        %611 = vst [vmem:[%s272 + $0x30] sm:$0xf] %v601
        %612 = vst [vmem:[%s272 + $0x38] sm:$0xf] %v603
        %s613 = sand.u32 %s106, 1
        %s614 = sand.u32 %s106, 1
        %s615 = smul.addr %s614, 64
        %s616 = scalar_lea.vmem [#allocation3], %s615
        // Predicated region
        $region56: #{decoder_forward.9} parent=50 // pred_check
          %p617 = pneg %p116
        $region57: #{decoder_forward.9} parent=50 // pred_check_branch
          %619 = sbr.rel (%p617) target = $region59
        $region58: #{decoder_forward.9} parent=50 // pred_region
          %s620 = smul.u32 4, %s19
          %s621 = smul.addr %s18, 16
          %s622 = sadd.s32 %s620, %s621
          %s623 = smul.addr %s622, 8
          %s624 = scalar_lea.vmem %s3, %s623
          // Predicated region
          $region60: #{decoder_forward.9} parent=58 // pred_check
            _
          $region61: #{decoder_forward.9} parent=58 // pred_check_branch
            %626 = sbr.rel (0) target = $region63
          $region62: #{decoder_forward.9} parent=58 // pred_region
            // Predicated region
            $region64: #{decoder_forward.9} parent=62 // pred_check
              _
            $region65: #{decoder_forward.9} parent=62 // pred_check_branch
              %628 = sbr.rel (0) target = $region67
            $region66: #{decoder_forward.9} parent=62 // pred_region
              loop: start=0, step=1, limit=1
              $region68: #{decoder_forward.9} parent=66 // loop_pre_header
                _
              $region69: #{decoder_forward.9} parent=66 // loop_header
                %s630 = sphi 0, %s634
                %p631 = scmp.ge.s32.totalorder %s630, 1
                %s635 = sphi %s616, %s616
                %s636 = sphi %s624, %s624
              $region70: #{decoder_forward.9} parent=66 // loop_header_branch
                %633 = sbr.rel (%p631) target = $region74
              $region71: #{decoder_forward.9} parent=66 // loop_body
                %v637 = vld [vmem:[%s635] sm:$0xff]
                %638 = vst [vmem:[%s636] sm:$0xff] %v637
                %v639 = vld [vmem:[%s635 + $0x8] sm:$0xff]
                %640 = vst [vmem:[%s636 + $0x8] sm:$0xff] %v639
                %v641 = vld [vmem:[%s635 + $0x10] sm:$0xff]
                %642 = vst [vmem:[%s636 + $0x10] sm:$0xff] %v641
                %v643 = vld [vmem:[%s635 + $0x18] sm:$0xff]
                %644 = vst [vmem:[%s636 + $0x18] sm:$0xff] %v643
                %v645 = vld [vmem:[%s635 + $0x20] sm:$0xff]
                %646 = vst [vmem:[%s636 + $0x40] sm:$0xff] %v645
                %v647 = vld [vmem:[%s635 + $0x28] sm:$0xff]
                %648 = vst [vmem:[%s636 + $0x48] sm:$0xff] %v647
                %v649 = vld [vmem:[%s635 + $0x30] sm:$0xff]
                %650 = vst [vmem:[%s636 + $0x50] sm:$0xff] %v649
                %v651 = vld [vmem:[%s635 + $0x38] sm:$0xff]
                %652 = vst [vmem:[%s636 + $0x58] sm:$0xff] %v651
              $region72: #{decoder_forward.9} parent=66 // loop_footer
                %s634 = sadd.s32 1, %s630
              $region73: #{decoder_forward.9} parent=66 // loop_footer_branch
                %629 = sbr.rel target = $region69
              $region74: #{decoder_forward.9} parent=66 // loop_exit
                _
            $region67: #{decoder_forward.9} parent=62 // pred_fallthru
              _
            // Predicated region
            $region75: #{decoder_forward.9} parent=62 // pred_check
              _
            $region76: #{decoder_forward.9} parent=62 // pred_check_branch
              %654 = sbr.rel target = $region78
            $region77: #{decoder_forward.9} parent=62 // pred_region
              _
            $region78: #{decoder_forward.9} parent=62 // pred_fallthru
              _
          $region63: #{decoder_forward.9} parent=58 // pred_fallthru
            _
          %655 = vnop
        $region59: #{decoder_forward.9} parent=50 // pred_fallthru
          _
      $region51: #{decoder_forward.9} parent=5 // pred_fallthru
        _
      %p656 = scmp.le.s32.totalorder 2, %s9
      // Predicated region
      $region79: #{decoder_forward.9} parent=5 // pred_check
        %p657 = pneg %p656
      $region80: #{decoder_forward.9} parent=5 // pred_check_branch
        %659 = sbr.rel (%p657) target = $region82
      $region81: #{decoder_forward.9} parent=5 // pred_region
        %s660 = ssub.s32 %s9, 2
        // Predicated region
        $region83: #{decoder_forward.9} parent=81 // pred_check
          %p661 = pneg %p122
        $region84: #{decoder_forward.9} parent=81 // pred_check_branch
          %663 = sbr.rel (%p661) target = $region86
        $region85: #{decoder_forward.9} parent=81 // pred_region
          %s664 = sand.u32 %s107, 1
          %s665 = sand.u32 %s107, 1
          %s666 = smul.addr %s665, 64
          %s667 = scalar_lea.vmem [#allocation3], %s666
        $region86: #{decoder_forward.9} parent=81 // pred_fallthru
          _
      $region82: #{decoder_forward.9} parent=5 // pred_fallthru
        _
    $region6: #{decoder_forward.9} parent=1 // loop_footer
      %s13 = sadd.s32 1, %s9
    $region7: #{decoder_forward.9} parent=1 // loop_footer_branch
      %8 = sbr.rel target = $region3
    $region8: #{decoder_forward.9} parent=1 // loop_exit
      _

</llo_original>
